<compile_context>
chip_gen: v5e
topology: v5e:2x2
jax: 0.10.0
libtpu: 0.0.40
codegen_flags: <defaults>
</compile_context>

<pallas_src>
import functools

import jax
import jax.numpy as jnp
from jax.experimental import pallas as pl
from jax.experimental.pallas import tpu as pltpu

_MXU_DTYPE = jnp.bfloat16          # MXU operand dtype; accumulation + gate math stay f32
_VMEM_LIMIT = 32 * 1024 * 1024     # valid on v5e/v6e/v7x; our blocks are far below this


def _round_up(x, m):
    return ((x + m - 1) // m) * m


def _sigmoid(x):
    # sigmoid(x) == 0.5*(tanh(0.5x)+1): single EUP push instead of exp + divide.
    return 0.5 * (jnp.tanh(0.5 * x) + 1.0)


# ---------------------------------------------------------------------------
# Kernel 1: hoisted layer-0 input projection  gi0 = X @ W_ih0^T + folded biases (bf16 out)
# ---------------------------------------------------------------------------
def _input_proj_kernel(x_ref, w_ref, b_ref, o_ref):
    acc = jnp.dot(x_ref[...], w_ref[...], preferred_element_type=jnp.float32) + b_ref[...]
    o_ref[...] = acc.astype(o_ref.dtype)


def input_projection(x_flat, w_ih0_t, b_i0):
    """x_flat: (T*B, Ep) bf16; w_ih0_t: (Ep, 3Hp) bf16; b_i0: (1, 3Hp) f32 -> (T*B, 3Hp) bf16."""
    M, Ep = x_flat.shape
    N = w_ih0_t.shape[1]
    bm = M
    for cand in (512, 256, 128, 64, 32, 16, 8):   # M is always a multiple of 16
        if M % cand == 0:
            bm = cand
            break
    return pl.pallas_call(
        _input_proj_kernel,
        out_shape=jax.ShapeDtypeStruct((M, N), _MXU_DTYPE),
        grid_spec=pltpu.PrefetchScalarGridSpec(
            num_scalar_prefetch=0,
            grid=(M // bm,),
            in_specs=[
                pl.BlockSpec((bm, Ep), lambda m: (m, 0)),
                pl.BlockSpec((Ep, N), lambda m: (0, 0)),
                pl.BlockSpec((1, N), lambda m: (0, 0)),
            ],
            out_specs=pl.BlockSpec((bm, N), lambda m: (m, 0)),
        ),
        compiler_params=pltpu.CompilerParams(
            dimension_semantics=("parallel",),
            vmem_limit_bytes=_VMEM_LIMIT),
    )(x_flat, w_ih0_t, b_i0)


# ---------------------------------------------------------------------------
# Kernel 2: layer-skewed 2-layer GRU recurrence over time chunks + fused MLP head.
# ---------------------------------------------------------------------------
def _gru_mlp_kernel(len_ref, gi0_ref,
                    w_fused_ref, b_hn0_ref, b_i1_ref, b_hn1_ref,
                    w1_ref, b1_ref, w2_ref, b2_ref,
                    logits_ref,
                    h1_ref, h2_ref):
    c = pl.program_id(1)               # time-chunk axis (trailing, "arbitrary")
    Bs, Hp = h1_ref.shape
    Tc = gi0_ref.shape[0]
    t0 = c * Tc

    @pl.when(c == 0)
    def _():
        h1_ref[...] = jnp.zeros_like(h1_ref)
        h2_ref[...] = jnp.zeros_like(h2_ref)

    lengths = len_ref[...]             # (Bs, 1) int32
    w_fused = w_fused_ref[...]         # (2Hp, 9Hp) bf16: [[W_hh0^T, W_ih1^T, 0], [0, 0, W_hh1^T]]

    # Hoisted bias broadcasts (JAX does not CSE broadcast_in_dim across the unrolled loop).
    b_i1 = jnp.broadcast_to(b_i1_ref[...], (Bs, 3 * Hp))
    b_hn0 = jnp.broadcast_to(b_hn0_ref[...], (Bs, Hp))
    b_hn1 = jnp.broadcast_to(b_hn1_ref[...], (Bs, Hp))

    h1 = h1_ref[...]                   # (Bs, Hp) f32 layer-1 hidden (scratch resident)
    h2 = h2_ref[...]                   # (Bs, Hp) f32 layer-2 hidden (scratch resident)

    def fused_matmul(h1v, h2v):
        lhs = jnp.concatenate([h1v.astype(_MXU_DTYPE), h2v.astype(_MXU_DTYPE)], axis=1)
        return jnp.dot(lhs, w_fused, preferred_element_type=jnp.float32)  # (Bs, 9Hp)

    def layer1_step(G, h2v, valid1):
        gi1 = G[:, 3 * Hp:6 * Hp] + b_i1
        gh1 = G[:, 6 * Hp:]
        r1 = _sigmoid(gi1[:, :Hp] + gh1[:, :Hp])
        z1 = _sigmoid(gi1[:, Hp:2 * Hp] + gh1[:, Hp:2 * Hp])
        n1 = jnp.tanh(gi1[:, 2 * Hp:] + r1 * (gh1[:, 2 * Hp:] + b_hn1))
        return jnp.where(valid1, (1.0 - z1) * n1 + z1 * h2v, h2v)

    # One-step layer skew: iteration i does layer-0 for step t0+i and layer-1 for step t0+i-1.
    # Both only need the states entering the iteration, so all recurrent matmuls are one push.
    # TODO(synk): switch to lax.fori_loop(..., unroll=k) if Tc is raised well beyond 32.
    for i in range(Tc):
        G = fused_matmul(h1, h2)

        # layer-1, global step t1 = t0 + i - 1 (masked off when t1 < 0, i.e. chunk 0, i == 0)
        t1 = t0 + i - 1
        valid1 = lengths > t1
        if i == 0:
            valid1 = jnp.logical_and(valid1, t1 >= 0)
        # TODO(synk): inter-layer GRU dropout (p=0.1) is identity in eval mode; not applied.
        h2_new = layer1_step(G, h2, valid1)

        # layer-0, global step t0 + i  (input projection + r/z input biases folded into gi0)
        valid0 = lengths > (t0 + i)
        gi0 = gi0_ref[i].astype(jnp.float32)         # (Bs, 3Hp), streamed bf16 -> f32
        gh0 = G[:, :3 * Hp]
        r0 = _sigmoid(gi0[:, :Hp] + gh0[:, :Hp])
        z0 = _sigmoid(gi0[:, Hp:2 * Hp] + gh0[:, Hp:2 * Hp])
        n0 = jnp.tanh(gi0[:, 2 * Hp:] + r0 * (gh0[:, 2 * Hp:] + b_hn0))
        h1_new = jnp.where(valid0, (1.0 - z0) * n0 + z0 * h1, h1)

        h1, h2 = h1_new, h2_new

    h1_ref[...] = h1
    h2_ref[...] = h2

    # Last chunk: drain layer-1 for the final timestep, then fused fc1 -> ReLU -> fc2 head.
    @pl.when(c == pl.num_programs(1) - 1)
    def _():
        G = fused_matmul(h1, h2)
        h2f = layer1_step(G, h2, lengths > (t0 + Tc - 1))
        a = jnp.dot(h2f.astype(_MXU_DTYPE), w1_ref[...],
                    preferred_element_type=jnp.float32) + b1_ref[...]
        a = jnp.maximum(a, 0.0)
        # dropout (p=0.1) is identity in eval mode
        logits_ref[...] = jnp.dot(a.astype(_MXU_DTYPE), w2_ref[...],
                                  preferred_element_type=jnp.float32) + b2_ref[...]


def gru_mlp_forward(len2d, gi0, params, time_chunk, batch_shards):
    Tp, Bp, H3p = gi0.shape
    Hp = H3p // 3
    Fp = params["w1_t"].shape[1]
    Cp = params["w2_t"].shape[1]
    Tc = time_chunk
    n_chunks = Tp // Tc
    Bs = Bp // batch_shards

    const = lambda bs, c: (0, 0)
    grid_spec = pltpu.PrefetchScalarGridSpec(
        num_scalar_prefetch=0,
        grid=(batch_shards, n_chunks),
        in_specs=[
            pl.BlockSpec((Bs, 1), lambda bs, c: (bs, 0)),            # lengths
            pl.BlockSpec((Tc, Bs, H3p), lambda bs, c: (c, bs, 0)),   # gi0 chunk (bf16, streamed)
            pl.BlockSpec((2 * Hp, 3 * H3p), const),                  # fused recurrent weights
            pl.BlockSpec((1, Hp), const),                            # b_hh0 n-gate
            pl.BlockSpec((1, H3p), const),                           # b_ih1 + b_hh1[r,z]
            pl.BlockSpec((1, Hp), const),                            # b_hh1 n-gate
            pl.BlockSpec((Hp, Fp), const),                           # fc1 weight
            pl.BlockSpec((1, Fp), const),                            # fc1 bias
            pl.BlockSpec((Fp, Cp), const),                           # fc2 weight
            pl.BlockSpec((1, Cp), const),                            # fc2 bias
        ],
        out_specs=pl.BlockSpec((Bs, Cp), lambda bs, c: (bs, 0)),     # logits only
        scratch_shapes=[pltpu.VMEM((Bs, Hp), jnp.float32),           # layer-1 hidden
                        pltpu.VMEM((Bs, Hp), jnp.float32)],          # layer-2 hidden
    )

    return pl.pallas_call(
        _gru_mlp_kernel,
        out_shape=jax.ShapeDtypeStruct((Bp, Cp), jnp.float32),
        grid_spec=grid_spec,
        # Batch shards are independent ("parallel", feeds v7x's 2nd TC when >1);
        # the time-chunk axis is a true recurrence ("arbitrary").
        compiler_params=pltpu.CompilerParams(
            dimension_semantics=("parallel", "arbitrary"),
            vmem_limit_bytes=_VMEM_LIMIT),
    )(len2d, gi0,
      params["w_rec_fused"], params["b_hn0"], params["b_i1"], params["b_hn1"],
      params["w1_t"], params["b1"], params["w2_t"], params["b2"])


# ---------------------------------------------------------------------------
# Full model forward (embedding gather + padding glue stays in plain JAX)
# ---------------------------------------------------------------------------
@functools.partial(jax.jit, static_argnames=("num_classes", "time_chunk", "batch_shards"))
def rnn_model_forward(token_ids, lengths, params, *, num_classes, time_chunk=32,
                      batch_shards=1):
    # token_ids: (B, T) int32, lengths: (B,) int32
    B, T = token_ids.shape
    Bs = _round_up(-(-B // batch_shards), 16)     # bf16 packs 16 sublanes per vreg
    Bp = Bs * batch_shards
    Tc = min(time_chunk, T)
    Tp = _round_up(T, Tc)

    Ep = params["embedding"].shape[1]
    H3p = params["w_ih0_t"].shape[1]

    # Pad batch/time. Padded rows get token 0 (zero embedding row) and length 0,
    # so their hidden state stays zero and they are sliced off at the end.
    # NOTE: a length-0 sequence yields a zero hidden row here (PyTorch's
    # pack_padded_sequence would raise instead).
    tok = jnp.zeros((Bp, Tp), jnp.int32).at[:B, :T].set(token_ids)
    lens = jnp.zeros((Bp,), jnp.int32).at[:B].set(lengths.astype(jnp.int32))

    # Time-major bf16 embedding gather (transpose the tiny int token grid only).
    # TODO(synk): fuse gather + projection in one kernel via scalar-prefetched token ids.
    emb_tbe = jnp.take(params["embedding"], tok.T, axis=0)            # (Tp, Bp, Ep) bf16

    # Hoisted layer-0 input projection: one tiled MXU matmul for all timesteps (bf16 out).
    gi0 = input_projection(
        emb_tbe.reshape(Tp * Bp, Ep), params["w_ih0_t"], params["b_i0"],
    ).reshape(Tp, Bp, H3p)

    logits_padded = gru_mlp_forward(lens.reshape(Bp, 1), gi0, params, Tc, batch_shards)
    return logits_padded[:B, :num_classes]


# ---------------------------------------------------------------------------
# Parameter construction: PyTorch-layout init, then pad / transpose / fold / fuse.
# ---------------------------------------------------------------------------
def init_raw_params(key, vocab_size, embedding_dim, hidden_dim, fc_hidden, num_classes):
    """Parameters in PyTorch nn.Embedding / nn.GRU / nn.Linear layout + init."""
    ks = jax.random.split(key, 13)

    def u(k, shape, scale):
        return jax.random.uniform(k, shape, jnp.float32, -scale, scale)

    emb = jax.random.normal(ks[0], (vocab_size, embedding_dim), jnp.float32)
    emb = emb.at[0].set(0.0)                                   # padding_idx=0

    kH = 1.0 / float(hidden_dim) ** 0.5
    kF1 = 1.0 / float(hidden_dim) ** 0.5
    kF2 = 1.0 / float(fc_hidden) ** 0.5
    return {
        "embedding": emb,
        # GRU layer 0: weight_ih (3H, E), weight_hh (3H, H), biases (3H,) in [r, z, n] order
        "w_ih0": u(ks[1], (3 * hidden_dim, embedding_dim), kH),
        "w_hh0": u(ks[2], (3 * hidden_dim, hidden_dim), kH),
        "b_ih0": u(ks[3], (3 * hidden_dim,), kH),
        "b_hh0": u(ks[4], (3 * hidden_dim,), kH),
        # GRU layer 1
        "w_ih1": u(ks[5], (3 * hidden_dim, hidden_dim), kH),
        "w_hh1": u(ks[6], (3 * hidden_dim, hidden_dim), kH),
        "b_ih1": u(ks[7], (3 * hidden_dim,), kH),
        "b_hh1": u(ks[8], (3 * hidden_dim,), kH),
        # fc1: Linear(H, fc_hidden), fc2: Linear(fc_hidden, num_classes)
        "w1": u(ks[9], (fc_hidden, hidden_dim), kF1),
        "b1": u(ks[10], (fc_hidden,), kF1),
        "w2": u(ks[11], (num_classes, fc_hidden), kF2),
        "b2": u(ks[12], (num_classes,), kF2),
    }


def _pad_to(a, shape):
    return jnp.pad(a, [(0, s - d) for d, s in zip(a.shape, shape)])


def _split_gates(a, H):
    return [a[g * H:(g + 1) * H] for g in range(3)]


def _pad_gate_mat_t(w, H, Hp, Kp):
    """(3H, K) gate-stacked PyTorch weight -> per-gate zero-padded, transposed (Kp, 3Hp)."""
    parts = [_pad_to(p, (Hp, Kp)) for p in _split_gates(w, H)]
    return jnp.concatenate(parts, axis=0).T


def _pad_gate_vec(b, H, Hp):
    return jnp.concatenate([_pad_to(p, (Hp,)) for p in _split_gates(b, H)])


def pack_params(raw):
    """Pad lane dims to 128 multiples, pre-transpose weights, pre-fold r/z biases,
    build the fused (2Hp, 9Hp) recurrent weight, cast MXU operands to bf16.
    Zero padding / zero blocks are inert for the GRU/MLP math."""
    H = raw["w_hh0"].shape[1]
    E = raw["w_ih0"].shape[1]
    F = raw["w1"].shape[0]
    C = raw["w2"].shape[0]
    Hp, Ep = _round_up(H, 128), _round_up(E, 128)
    Fp, Cp = _round_up(F, 128), _round_up(C, 128)

    bih0 = _pad_gate_vec(raw["b_ih0"], H, Hp)
    bhh0 = _pad_gate_vec(raw["b_hh0"], H, Hp)
    bih1 = _pad_gate_vec(raw["b_ih1"], H, Hp)
    bhh1 = _pad_gate_vec(raw["b_hh1"], H, Hp)
    zero_n = jnp.zeros((Hp,), jnp.float32)

    # Fused recurrent weight: rows [0:Hp] multiply h1, rows [Hp:2Hp] multiply h2.
    # Columns [0:3Hp] -> gh0, [3Hp:6Hp] -> gi1 (pre-bias), [6Hp:9Hp] -> gh1.
    w_hh0_t = _pad_gate_mat_t(raw["w_hh0"], H, Hp, Hp)     # (Hp, 3Hp)
    w_ih1_t = _pad_gate_mat_t(raw["w_ih1"], H, Hp, Hp)
    w_hh1_t = _pad_gate_mat_t(raw["w_hh1"], H, Hp, Hp)
    z3 = jnp.zeros((Hp, 3 * Hp), jnp.float32)
    w_rec_fused = jnp.concatenate(
        [jnp.concatenate([w_hh0_t, w_ih1_t, z3], axis=1),
         jnp.concatenate([z3, z3, w_hh1_t], axis=1)], axis=0).astype(_MXU_DTYPE)

    return {
        # bf16 table: gather emits MXU-ready activations directly
        "embedding": _pad_to(raw["embedding"],
                             (raw["embedding"].shape[0], Ep)).astype(_MXU_DTYPE),
        # hoisted layer-0 input projection; bias folds b_ih0 + [b_hh0_r, b_hh0_z, 0]
        "w_ih0_t": _pad_gate_mat_t(raw["w_ih0"], H, Hp, Ep).astype(_MXU_DTYPE),
        "b_i0": (bih0 + jnp.concatenate([bhh0[:2 * Hp], zero_n])).reshape(1, 3 * Hp),
        # fused recurrence
        "w_rec_fused": w_rec_fused,
        "b_hn0": bhh0[2 * Hp:].reshape(1, Hp),
        "b_i1": (bih1 + jnp.concatenate([bhh1[:2 * Hp], zero_n])).reshape(1, 3 * Hp),
        "b_hn1": bhh1[2 * Hp:].reshape(1, Hp),
        # MLP head
        "w1_t": _pad_to(raw["w1"], (Fp, Hp)).T.astype(_MXU_DTYPE),
        "b1": _pad_to(raw["b1"], (Fp,)).reshape(1, Fp),
        "w2_t": _pad_to(raw["w2"], (Cp, Fp)).T.astype(_MXU_DTYPE),
        "b2": _pad_to(raw["b2"], (Cp,)).reshape(1, Cp),
    }


# ---------------------------------------------------------------------------
# Pure-JAX f32 reference (PyTorch semantics) for a sanity check.
# ---------------------------------------------------------------------------
def reference_forward(token_ids, lengths, raw):
    emb = raw["embedding"][token_ids]                          # (B, T, E)
    B, T, _ = emb.shape
    H = raw["w_hh0"].shape[1]
    h1 = jnp.zeros((B, H), jnp.float32)
    h2 = jnp.zeros((B, H), jnp.float32)

    def cell(x, h, w_ih, w_hh, b_ih, b_hh):
        gi = x @ w_ih.T + b_ih
        gh = h @ w_hh.T + b_hh
        i_r, i_z, i_n = jnp.split(gi, 3, axis=1)
        h_r, h_z, h_n = jnp.split(gh, 3, axis=1)
        r = jax.nn.sigmoid(i_r + h_r)
        z = jax.nn.sigmoid(i_z + h_z)
        n = jnp.tanh(i_n + r * h_n)
        return (1.0 - z) * n + z * h

    for t in range(T):
        m = (lengths > t)[:, None]
        h1 = jnp.where(m, cell(emb[:, t], h1, raw["w_ih0"], raw["w_hh0"],
                               raw["b_ih0"], raw["b_hh0"]), h1)
        h2 = jnp.where(m, cell(h1, h2, raw["w_ih1"], raw["w_hh1"],
                               raw["b_ih1"], raw["b_hh1"]), h2)
    a = jnp.maximum(h2 @ raw["w1"].T + raw["b1"], 0.0)
    return a @ raw["w2"].T + raw["b2"]


if __name__ == "__main__":
    # Small shapes consistent with the module's forward:
    B, T = 4, 8
    VOCAB, E, H = 50, 32, 32
    FC_HIDDEN, NUM_CLASSES = 150, 1

    key = jax.random.PRNGKey(0)
    k_tok, k_param = jax.random.split(key)

    lengths = jnp.array([8, 5, 3, 1], dtype=jnp.int32)
    token_ids = jax.random.randint(k_tok, (B, T), 1, VOCAB, dtype=jnp.int32)
    # zero-pad beyond each sequence's length (padding token id = 0)
    pos = jnp.arange(T)[None, :]
    token_ids = jnp.where(pos < lengths[:, None], token_ids, 0)

    raw = init_raw_params(k_param, VOCAB, E, H, FC_HIDDEN, NUM_CLASSES)
    params = pack_params(raw)

    logits = rnn_model_forward(token_ids, lengths, params, num_classes=NUM_CLASSES)
    jax.block_until_ready(logits)

    assert logits.shape == (B, NUM_CLASSES)
    assert bool(jnp.all(jnp.isfinite(logits)))

    # Semantics check vs. pure-JAX f32 reference (loose tol: bf16 MXU operands + bf16 gi0).
    ref = reference_forward(token_ids, lengths, raw)
    max_diff = float(jnp.max(jnp.abs(logits - ref)))
    assert bool(jnp.allclose(logits, ref, rtol=1.5e-1, atol=1.5e-1)), (
        f"max abs diff {max_diff}")

    print("KERNEL_OK")
</pallas_src>

<mosaic_0001>
module attributes {stable_mosaic.version = 11 : i64} {
  func.func @_input_proj_kernel(%arg0: i32, %arg1: memref<128x128xbf16, #tpu.memory_space<vmem>>, %arg2: memref<128x384xbf16, #tpu.memory_space<vmem>>, %arg3: memref<1x384xf32, #tpu.memory_space<vmem>>, %arg4: memref<128x384xbf16, #tpu.memory_space<vmem>>) attributes {dimension_semantics = [#tpu.dimension_semantics<parallel>], iteration_bounds = array<i64: 1>, scalar_prefetch = 0 : i64, scratch_operands = 0 : i64, tpu.core_type = #tpu.core_type<tc>, window_params = [{transform_indices = @transform_0, window_bounds = array<i64: 128, 128>}, {pipeline_mode = #tpu.pipeline_mode<synchronous>, transform_indices = @transform_1, window_bounds = array<i64: 128, 384>}, {pipeline_mode = #tpu.pipeline_mode<synchronous>, transform_indices = @transform_2, window_bounds = array<i64: 1, 384>}, {transform_indices = @transform_3, window_bounds = array<i64: 128, 384>}]} {
    %c0 = arith.constant 0 : index
    %c0_0 = arith.constant 0 : index
    %0 = vector.load %arg1[%c0, %c0_0] : memref<128x128xbf16, #tpu.memory_space<vmem>>, vector<128x128xbf16>
    %c0_1 = arith.constant 0 : index
    %c0_2 = arith.constant 0 : index
    %1 = vector.load %arg2[%c0_1, %c0_2] : memref<128x384xbf16, #tpu.memory_space<vmem>>, vector<128x384xbf16>
    %cst = arith.constant dense<0.000000e+00> : vector<128x384xf32>
    %2 = tpu.matmul %0, %1, %cst {dimension_numbers = #tpu.dot_dimension_numbers<[1], [0], [0], [1], [0, 0, 1, 1], [], []>} : vector<128x128xbf16>, vector<128x384xbf16>, vector<128x384xf32> -> vector<128x384xf32>
    %c0_3 = arith.constant 0 : index
    %c0_4 = arith.constant 0 : index
    %3 = vector.load %arg3[%c0_3, %c0_4] : memref<1x384xf32, #tpu.memory_space<vmem>>, vector<1x384xf32>
    %4 = vector.broadcast %3 : vector<1x384xf32> to vector<128x384xf32>
    %5 = arith.addf %2, %4 : vector<128x384xf32>
    %6 = arith.truncf %5 : vector<128x384xf32> to vector<128x384xbf16>
    %c0_5 = arith.constant 0 : index
    %c0_6 = arith.constant 0 : index
    %7 = vector.load %arg4[%c0_5, %c0_6] : memref<128x384xbf16, #tpu.memory_space<vmem>>, vector<128x384xbf16>
    tpu.vector_store %arg4[%c0_5, %c0_6], %6 {strides = array<i32>} : memref<128x384xbf16, #tpu.memory_space<vmem>>, vector<128x384xbf16>,
    return
  }
  func.func @transform_0(%arg0: i32) -> (i32, i32) {
    %c0_i32 = arith.constant 0 : i32
    %c0_i32_0 = arith.constant 0 : i32
    return %arg0, %c0_i32 : i32, i32
  }
  func.func @transform_1(%arg0: i32) -> (i32, i32) {
    %c0_i32 = arith.constant 0 : i32
    %c0_i32_0 = arith.constant 0 : i32
    %c0_i32_1 = arith.constant 0 : i32
    return %c0_i32, %c0_i32_0 : i32, i32
  }
  func.func @transform_2(%arg0: i32) -> (i32, i32) {
    %c0_i32 = arith.constant 0 : i32
    %c0_i32_0 = arith.constant 0 : i32
    %c0_i32_1 = arith.constant 0 : i32
    return %c0_i32, %c0_i32_0 : i32, i32
  }
  func.func @transform_3(%arg0: i32) -> (i32, i32) {
    %c0_i32 = arith.constant 0 : i32
    %c0_i32_0 = arith.constant 0 : i32
    return %arg0, %c0_i32 : i32, i32
  }
}

module attributes {stable_mosaic.version = 11 : i64} {
  func.func @_gru_mlp_kernel(%arg0: i32, %arg1: i32, %arg2: memref<16x1xi32, #tpu.memory_space<vmem>>, %arg3: memref<8x16x384xbf16, #tpu.memory_space<vmem>>, %arg4: memref<256x1152xbf16, #tpu.memory_space<vmem>>, %arg5: memref<1x128xf32, #tpu.memory_space<vmem>>, %arg6: memref<1x384xf32, #tpu.memory_space<vmem>>, %arg7: memref<1x128xf32, #tpu.memory_space<vmem>>, %arg8: memref<128x256xbf16, #tpu.memory_space<vmem>>, %arg9: memref<1x256xf32, #tpu.memory_space<vmem>>, %arg10: memref<256x128xbf16, #tpu.memory_space<vmem>>, %arg11: memref<1x128xf32, #tpu.memory_space<vmem>>, %arg12: memref<16x128xf32, #tpu.memory_space<vmem>>, %arg13: memref<16x128xf32, #tpu.memory_space<vmem>>, %arg14: memref<16x128xf32, #tpu.memory_space<vmem>>) attributes {dimension_semantics = [#tpu.dimension_semantics<parallel>, #tpu.dimension_semantics<arbitrary>], iteration_bounds = array<i64: 1, 1>, scalar_prefetch = 0 : i64, scratch_operands = 2 : i64, tpu.core_type = #tpu.core_type<tc>, window_params = [{transform_indices = @transform_0, window_bounds = array<i64: 16, 1>}, {transform_indices = @transform_1, window_bounds = array<i64: 8, 16, 384>}, {pipeline_mode = #tpu.pipeline_mode<synchronous>, transform_indices = @transform_2, window_bounds = array<i64: 256, 1152>}, {pipeline_mode = #tpu.pipeline_mode<synchronous>, transform_indices = @transform_3, window_bounds = array<i64: 1, 128>}, {pipeline_mode = #tpu.pipeline_mode<synchronous>, transform_indices = @transform_4, window_bounds = array<i64: 1, 384>}, {pipeline_mode = #tpu.pipeline_mode<synchronous>, transform_indices = @transform_5, window_bounds = array<i64: 1, 128>}, {pipeline_mode = #tpu.pipeline_mode<synchronous>, transform_indices = @transform_6, window_bounds = array<i64: 128, 256>}, {pipeline_mode = #tpu.pipeline_mode<synchronous>, transform_indices = @transform_7, window_bounds = array<i64: 1, 256>}, {pipeline_mode = #tpu.pipeline_mode<synchronous>, transform_indices = @transform_8, window_bounds = array<i64: 256, 128>}, {pipeline_mode = #tpu.pipeline_mode<synchronous>, transform_indices = @transform_9, window_bounds = array<i64: 1, 128>}, {transform_indices = @transform_10, window_bounds = array<i64: 16, 128>}]} {
    %c8_i32 = arith.constant 8 : i32
    %0 = arith.muli %arg1, %c8_i32 : i32
    %c0_i32 = arith.constant 0 : i32
    %1 = arith.cmpi eq, %arg1, %c0_i32 : i32
    %2 = arith.extui %1 : i1 to i32
    %c0_i32_0 = arith.constant 0 : i32
    %3 = arith.cmpi ne, %2, %c0_i32_0 : i32
    scf.if %3 {
      %cst_174 = arith.constant 0.000000e+00 : f32
      %713 = vector.broadcast %cst_174 : f32 to vector<16x128xf32>
      %c0_175 = arith.constant 0 : index
      %c0_176 = arith.constant 0 : index
      %714 = vector.load %arg13[%c0_175, %c0_176] : memref<16x128xf32, #tpu.memory_space<vmem>>, vector<16x128xf32>
      tpu.vector_store %arg13[%c0_175, %c0_176], %713 {strides = array<i32>} : memref<16x128xf32, #tpu.memory_space<vmem>>, vector<16x128xf32>,
      %cst_177 = arith.constant 0.000000e+00 : f32
      %715 = vector.broadcast %cst_177 : f32 to vector<16x128xf32>
      %c0_178 = arith.constant 0 : index
      %c0_179 = arith.constant 0 : index
      %716 = vector.load %arg14[%c0_178, %c0_179] : memref<16x128xf32, #tpu.memory_space<vmem>>, vector<16x128xf32>
      tpu.vector_store %arg14[%c0_178, %c0_179], %715 {strides = array<i32>} : memref<16x128xf32, #tpu.memory_space<vmem>>, vector<16x128xf32>,
    } else {
    }
    %c0 = arith.constant 0 : index
    %c0_1 = arith.constant 0 : index
    %4 = vector.load %arg2[%c0, %c0_1] : memref<16x1xi32, #tpu.memory_space<vmem>>, vector<16x1xi32>
    %c0_2 = arith.constant 0 : index
    %c0_3 = arith.constant 0 : index
    %5 = vector.load %arg4[%c0_2, %c0_3] : memref<256x1152xbf16, #tpu.memory_space<vmem>>, vector<256x1152xbf16>
    %c0_4 = arith.constant 0 : index
    %c0_5 = arith.constant 0 : index
    %6 = vector.load %arg6[%c0_4, %c0_5] : memref<1x384xf32, #tpu.memory_space<vmem>>, vector<1x384xf32>
    %7 = vector.shape_cast %6 : vector<1x384xf32> to vector<1x384xf32>
    %8 = vector.broadcast %7 : vector<1x384xf32> to vector<16x384xf32>
    %c0_6 = arith.constant 0 : index
    %c0_7 = arith.constant 0 : index
    %9 = vector.load %arg5[%c0_6, %c0_7] : memref<1x128xf32, #tpu.memory_space<vmem>>, vector<1x128xf32>
    %10 = vector.shape_cast %9 : vector<1x128xf32> to vector<1x128xf32>
    %11 = vector.broadcast %10 : vector<1x128xf32> to vector<16x128xf32>
    %c0_8 = arith.constant 0 : index
    %c0_9 = arith.constant 0 : index
    %12 = vector.load %arg7[%c0_8, %c0_9] : memref<1x128xf32, #tpu.memory_space<vmem>>, vector<1x128xf32>
    %13 = vector.shape_cast %12 : vector<1x128xf32> to vector<1x128xf32>
    %14 = vector.broadcast %13 : vector<1x128xf32> to vector<16x128xf32>
    %c0_10 = arith.constant 0 : index
    %c0_11 = arith.constant 0 : index
    %15 = vector.load %arg13[%c0_10, %c0_11] : memref<16x128xf32, #tpu.memory_space<vmem>>, vector<16x128xf32>
    %c0_12 = arith.constant 0 : index
    %c0_13 = arith.constant 0 : index
    %16 = vector.load %arg14[%c0_12, %c0_13] : memref<16x128xf32, #tpu.memory_space<vmem>>, vector<16x128xf32>
    %17 = arith.truncf %15 : vector<16x128xf32> to vector<16x128xbf16>
    %18 = arith.truncf %16 : vector<16x128xf32> to vector<16x128xbf16>
    %19 = tpu.concatenate %17, %18 in 1 : vector<16x128xbf16>, vector<16x128xbf16> -> vector<16x256xbf16>
    %cst = arith.constant dense<0.000000e+00> : vector<16x1152xf32>
    %20 = tpu.matmul %19, %5, %cst {dimension_numbers = #tpu.dot_dimension_numbers<[1], [0], [0], [1], [0, 0, 1, 1], [], []>} : vector<16x256xbf16>, vector<256x1152xbf16>, vector<16x1152xf32> -> vector<16x1152xf32>
    %c0_i32_14 = arith.constant 0 : i32
    %21 = arith.addi %0, %c0_i32_14 : i32
    %c1_i32 = arith.constant 1 : i32
    %22 = arith.subi %21, %c1_i32 : i32
    %23 = vector.broadcast %22 : i32 to vector<16x1xi32>
    %24 = arith.cmpi sgt, %4, %23 : vector<16x1xi32>
    %c0_i32_15 = arith.constant 0 : i32
    %25 = arith.cmpi sge, %22, %c0_i32_15 : i32
    %26 = vector.broadcast %25 : i1 to vector<16x1xi1>
    %27 = arith.andi %24, %26 : vector<16x1xi1>
    %28 = vector.extract_strided_slice %20 {offsets = [0, 384], sizes = [16, 384], strides = [1, 1]} : vector<16x1152xf32> to vector<16x384xf32>
    %29 = arith.addf %28, %8 : vector<16x384xf32>
    %30 = vector.extract_strided_slice %20 {offsets = [0, 768], sizes = [16, 384], strides = [1, 1]} : vector<16x1152xf32> to vector<16x384xf32>
    %31 = vector.extract_strided_slice %29 {offsets = [0, 0], sizes = [16, 128], strides = [1, 1]} : vector<16x384xf32> to vector<16x128xf32>
    %32 = vector.extract_strided_slice %30 {offsets = [0, 0], sizes = [16, 128], strides = [1, 1]} : vector<16x384xf32> to vector<16x128xf32>
    %33 = arith.addf %31, %32 : vector<16x128xf32>
    %cst_16 = arith.constant 5.000000e-01 : f32
    %34 = vector.broadcast %cst_16 : f32 to vector<16x128xf32>
    %35 = arith.mulf %34, %33 : vector<16x128xf32>
    %36 = math.tanh %35 : vector<16x128xf32>
    %cst_17 = arith.constant 1.000000e+00 : f32
    %37 = vector.broadcast %cst_17 : f32 to vector<16x128xf32>
    %38 = arith.addf %36, %37 : vector<16x128xf32>
    %cst_18 = arith.constant 5.000000e-01 : f32
    %39 = vector.broadcast %cst_18 : f32 to vector<16x128xf32>
    %40 = arith.mulf %39, %38 : vector<16x128xf32>
    %41 = vector.extract_strided_slice %29 {offsets = [0, 128], sizes = [16, 128], strides = [1, 1]} : vector<16x384xf32> to vector<16x128xf32>
    %42 = vector.extract_strided_slice %30 {offsets = [0, 128], sizes = [16, 128], strides = [1, 1]} : vector<16x384xf32> to vector<16x128xf32>
    %43 = arith.addf %41, %42 : vector<16x128xf32>
    %cst_19 = arith.constant 5.000000e-01 : f32
    %44 = vector.broadcast %cst_19 : f32 to vector<16x128xf32>
    %45 = arith.mulf %44, %43 : vector<16x128xf32>
    %46 = math.tanh %45 : vector<16x128xf32>
    %cst_20 = arith.constant 1.000000e+00 : f32
    %47 = vector.broadcast %cst_20 : f32 to vector<16x128xf32>
    %48 = arith.addf %46, %47 : vector<16x128xf32>
    %cst_21 = arith.constant 5.000000e-01 : f32
    %49 = vector.broadcast %cst_21 : f32 to vector<16x128xf32>
    %50 = arith.mulf %49, %48 : vector<16x128xf32>
    %51 = vector.extract_strided_slice %29 {offsets = [0, 256], sizes = [16, 128], strides = [1, 1]} : vector<16x384xf32> to vector<16x128xf32>
    %52 = vector.extract_strided_slice %30 {offsets = [0, 256], sizes = [16, 128], strides = [1, 1]} : vector<16x384xf32> to vector<16x128xf32>
    %53 = arith.addf %52, %14 : vector<16x128xf32>
    %54 = arith.mulf %40, %53 : vector<16x128xf32>
    %55 = arith.addf %51, %54 : vector<16x128xf32>
    %56 = math.tanh %55 : vector<16x128xf32>
    %cst_22 = arith.constant 1.000000e+00 : f32
    %57 = vector.broadcast %cst_22 : f32 to vector<16x128xf32>
    %58 = arith.subf %57, %50 : vector<16x128xf32>
    %59 = arith.mulf %58, %56 : vector<16x128xf32>
    %60 = arith.mulf %50, %16 : vector<16x128xf32>
    %61 = arith.addf %59, %60 : vector<16x128xf32>
    %62 = vector.shape_cast %27 : vector<16x1xi1> to vector<16x1xi1>
    %63 = vector.broadcast %62 : vector<16x1xi1> to vector<16x128xi1>
    %64 = arith.select %63, %61, %16 : vector<16x128xi1>, vector<16x128xf32>
    %c0_i32_23 = arith.constant 0 : i32
    %65 = arith.addi %0, %c0_i32_23 : i32
    %66 = vector.broadcast %65 : i32 to vector<16x1xi32>
    %67 = arith.cmpi sgt, %4, %66 : vector<16x1xi32>
    %c0_24 = arith.constant 0 : index
    %c0_25 = arith.constant 0 : index
    %c0_26 = arith.constant 0 : index
    %68 = vector.load %arg3[%c0_24, %c0_25, %c0_26] : memref<8x16x384xbf16, #tpu.memory_space<vmem>>, vector<1x16x384xbf16>
    %69 = vector.shape_cast %68 : vector<1x16x384xbf16> to vector<16x384xbf16>
    %70 = arith.extf %69 : vector<16x384xbf16> to vector<16x384xf32>
    %71 = vector.extract_strided_slice %20 {offsets = [0, 0], sizes = [16, 384], strides = [1, 1]} : vector<16x1152xf32> to vector<16x384xf32>
    %72 = vector.extract_strided_slice %70 {offsets = [0, 0], sizes = [16, 128], strides = [1, 1]} : vector<16x384xf32> to vector<16x128xf32>
    %73 = vector.extract_strided_slice %71 {offsets = [0, 0], sizes = [16, 128], strides = [1, 1]} : vector<16x384xf32> to vector<16x128xf32>
    %74 = arith.addf %72, %73 : vector<16x128xf32>
    %cst_27 = arith.constant 5.000000e-01 : f32
    %75 = vector.broadcast %cst_27 : f32 to vector<16x128xf32>
    %76 = arith.mulf %75, %74 : vector<16x128xf32>
    %77 = math.tanh %76 : vector<16x128xf32>
    %cst_28 = arith.constant 1.000000e+00 : f32
    %78 = vector.broadcast %cst_28 : f32 to vector<16x128xf32>
    %79 = arith.addf %77, %78 : vector<16x128xf32>
    %cst_29 = arith.constant 5.000000e-01 : f32
    %80 = vector.broadcast %cst_29 : f32 to vector<16x128xf32>
    %81 = arith.mulf %80, %79 : vector<16x128xf32>
    %82 = vector.extract_strided_slice %70 {offsets = [0, 128], sizes = [16, 128], strides = [1, 1]} : vector<16x384xf32> to vector<16x128xf32>
    %83 = vector.extract_strided_slice %71 {offsets = [0, 128], sizes = [16, 128], strides = [1, 1]} : vector<16x384xf32> to vector<16x128xf32>
    %84 = arith.addf %82, %83 : vector<16x128xf32>
    %cst_30 = arith.constant 5.000000e-01 : f32
    %85 = vector.broadcast %cst_30 : f32 to vector<16x128xf32>
    %86 = arith.mulf %85, %84 : vector<16x128xf32>
    %87 = math.tanh %86 : vector<16x128xf32>
    %cst_31 = arith.constant 1.000000e+00 : f32
    %88 = vector.broadcast %cst_31 : f32 to vector<16x128xf32>
    %89 = arith.addf %87, %88 : vector<16x128xf32>
    %cst_32 = arith.constant 5.000000e-01 : f32
    %90 = vector.broadcast %cst_32 : f32 to vector<16x128xf32>
    %91 = arith.mulf %90, %89 : vector<16x128xf32>
    %92 = vector.extract_strided_slice %70 {offsets = [0, 256], sizes = [16, 128], strides = [1, 1]} : vector<16x384xf32> to vector<16x128xf32>
    %93 = vector.extract_strided_slice %71 {offsets = [0, 256], sizes = [16, 128], strides = [1, 1]} : vector<16x384xf32> to vector<16x128xf32>
    %94 = arith.addf %93, %11 : vector<16x128xf32>
    %95 = arith.mulf %81, %94 : vector<16x128xf32>
    %96 = arith.addf %92, %95 : vector<16x128xf32>
    %97 = math.tanh %96 : vector<16x128xf32>
    %cst_33 = arith.constant 1.000000e+00 : f32
    %98 = vector.broadcast %cst_33 : f32 to vector<16x128xf32>
    %99 = arith.subf %98, %91 : vector<16x128xf32>
    %100 = arith.mulf %99, %97 : vector<16x128xf32>
    %101 = arith.mulf %91, %15 : vector<16x128xf32>
    %102 = arith.addf %100, %101 : vector<16x128xf32>
    %103 = vector.shape_cast %67 : vector<16x1xi1> to vector<16x1xi1>
    %104 = vector.broadcast %103 : vector<16x1xi1> to vector<16x128xi1>
    %105 = arith.select %104, %102, %15 : vector<16x128xi1>, vector<16x128xf32>
    %106 = arith.truncf %105 : vector<16x128xf32> to vector<16x128xbf16>
    %107 = arith.truncf %64 : vector<16x128xf32> to vector<16x128xbf16>
    %108 = tpu.concatenate %106, %107 in 1 : vector<16x128xbf16>, vector<16x128xbf16> -> vector<16x256xbf16>
    %cst_34 = arith.constant dense<0.000000e+00> : vector<16x1152xf32>
    %109 = tpu.matmul %108, %5, %cst_34 {dimension_numbers = #tpu.dot_dimension_numbers<[1], [0], [0], [1], [0, 0, 1, 1], [], []>} : vector<16x256xbf16>, vector<256x1152xbf16>, vector<16x1152xf32> -> vector<16x1152xf32>
    %c1_i32_35 = arith.constant 1 : i32
    %110 = arith.addi %0, %c1_i32_35 : i32
    %c1_i32_36 = arith.constant 1 : i32
    %111 = arith.subi %110, %c1_i32_36 : i32
    %112 = vector.broadcast %111 : i32 to vector<16x1xi32>
    %113 = arith.cmpi sgt, %4, %112 : vector<16x1xi32>
    %114 = vector.extract_strided_slice %109 {offsets = [0, 384], sizes = [16, 384], strides = [1, 1]} : vector<16x1152xf32> to vector<16x384xf32>
    %115 = arith.addf %114, %8 : vector<16x384xf32>
    %116 = vector.extract_strided_slice %109 {offsets = [0, 768], sizes = [16, 384], strides = [1, 1]} : vector<16x1152xf32> to vector<16x384xf32>
    %117 = vector.extract_strided_slice %115 {offsets = [0, 0], sizes = [16, 128], strides = [1, 1]} : vector<16x384xf32> to vector<16x128xf32>
    %118 = vector.extract_strided_slice %116 {offsets = [0, 0], sizes = [16, 128], strides = [1, 1]} : vector<16x384xf32> to vector<16x128xf32>
    %119 = arith.addf %117, %118 : vector<16x128xf32>
    %cst_37 = arith.constant 5.000000e-01 : f32
    %120 = vector.broadcast %cst_37 : f32 to vector<16x128xf32>
    %121 = arith.mulf %120, %119 : vector<16x128xf32>
    %122 = math.tanh %121 : vector<16x128xf32>
    %cst_38 = arith.constant 1.000000e+00 : f32
    %123 = vector.broadcast %cst_38 : f32 to vector<16x128xf32>
    %124 = arith.addf %122, %123 : vector<16x128xf32>
    %cst_39 = arith.constant 5.000000e-01 : f32
    %125 = vector.broadcast %cst_39 : f32 to vector<16x128xf32>
    %126 = arith.mulf %125, %124 : vector<16x128xf32>
    %127 = vector.extract_strided_slice %115 {offsets = [0, 128], sizes = [16, 128], strides = [1, 1]} : vector<16x384xf32> to vector<16x128xf32>
    %128 = vector.extract_strided_slice %116 {offsets = [0, 128], sizes = [16, 128], strides = [1, 1]} : vector<16x384xf32> to vector<16x128xf32>
    %129 = arith.addf %127, %128 : vector<16x128xf32>
    %cst_40 = arith.constant 5.000000e-01 : f32
    %130 = vector.broadcast %cst_40 : f32 to vector<16x128xf32>
    %131 = arith.mulf %130, %129 : vector<16x128xf32>
    %132 = math.tanh %131 : vector<16x128xf32>
    %cst_41 = arith.constant 1.000000e+00 : f32
    %133 = vector.broadcast %cst_41 : f32 to vector<16x128xf32>
    %134 = arith.addf %132, %133 : vector<16x128xf32>
    %cst_42 = arith.constant 5.000000e-01 : f32
    %135 = vector.broadcast %cst_42 : f32 to vector<16x128xf32>
    %136 = arith.mulf %135, %134 : vector<16x128xf32>
    %137 = vector.extract_strided_slice %115 {offsets = [0, 256], sizes = [16, 128], strides = [1, 1]} : vector<16x384xf32> to vector<16x128xf32>
    %138 = vector.extract_strided_slice %116 {offsets = [0, 256], sizes = [16, 128], strides = [1, 1]} : vector<16x384xf32> to vector<16x128xf32>
    %139 = arith.addf %138, %14 : vector<16x128xf32>
    %140 = arith.mulf %126, %139 : vector<16x128xf32>
    %141 = arith.addf %137, %140 : vector<16x128xf32>
    %142 = math.tanh %141 : vector<16x128xf32>
    %cst_43 = arith.constant 1.000000e+00 : f32
    %143 = vector.broadcast %cst_43 : f32 to vector<16x128xf32>
    %144 = arith.subf %143, %136 : vector<16x128xf32>
    %145 = arith.mulf %144, %142 : vector<16x128xf32>
    %146 = arith.mulf %136, %64 : vector<16x128xf32>
    %147 = arith.addf %145, %146 : vector<16x128xf32>
    %148 = vector.shape_cast %113 : vector<16x1xi1> to vector<16x1xi1>
    %149 = vector.broadcast %148 : vector<16x1xi1> to vector<16x128xi1>
    %150 = arith.select %149, %147, %64 : vector<16x128xi1>, vector<16x128xf32>
    %c1_i32_44 = arith.constant 1 : i32
    %151 = arith.addi %0, %c1_i32_44 : i32
    %152 = vector.broadcast %151 : i32 to vector<16x1xi32>
    %153 = arith.cmpi sgt, %4, %152 : vector<16x1xi32>
    %c1 = arith.constant 1 : index
    %c0_45 = arith.constant 0 : index
    %c0_46 = arith.constant 0 : index
    %154 = vector.load %arg3[%c1, %c0_45, %c0_46] : memref<8x16x384xbf16, #tpu.memory_space<vmem>>, vector<1x16x384xbf16>
    %155 = vector.shape_cast %154 : vector<1x16x384xbf16> to vector<16x384xbf16>
    %156 = arith.extf %155 : vector<16x384xbf16> to vector<16x384xf32>
    %157 = vector.extract_strided_slice %109 {offsets = [0, 0], sizes = [16, 384], strides = [1, 1]} : vector<16x1152xf32> to vector<16x384xf32>
    %158 = vector.extract_strided_slice %156 {offsets = [0, 0], sizes = [16, 128], strides = [1, 1]} : vector<16x384xf32> to vector<16x128xf32>
    %159 = vector.extract_strided_slice %157 {offsets = [0, 0], sizes = [16, 128], strides = [1, 1]} : vector<16x384xf32> to vector<16x128xf32>
    %160 = arith.addf %158, %159 : vector<16x128xf32>
    %cst_47 = arith.constant 5.000000e-01 : f32
    %161 = vector.broadcast %cst_47 : f32 to vector<16x128xf32>
    %162 = arith.mulf %161, %160 : vector<16x128xf32>
    %163 = math.tanh %162 : vector<16x128xf32>
    %cst_48 = arith.constant 1.000000e+00 : f32
    %164 = vector.broadcast %cst_48 : f32 to vector<16x128xf32>
    %165 = arith.addf %163, %164 : vector<16x128xf32>
    %cst_49 = arith.constant 5.000000e-01 : f32
    %166 = vector.broadcast %cst_49 : f32 to vector<16x128xf32>
    %167 = arith.mulf %166, %165 : vector<16x128xf32>
    %168 = vector.extract_strided_slice %156 {offsets = [0, 128], sizes = [16, 128], strides = [1, 1]} : vector<16x384xf32> to vector<16x128xf32>
    %169 = vector.extract_strided_slice %157 {offsets = [0, 128], sizes = [16, 128], strides = [1, 1]} : vector<16x384xf32> to vector<16x128xf32>
    %170 = arith.addf %168, %169 : vector<16x128xf32>
    %cst_50 = arith.constant 5.000000e-01 : f32
    %171 = vector.broadcast %cst_50 : f32 to vector<16x128xf32>
    %172 = arith.mulf %171, %170 : vector<16x128xf32>
    %173 = math.tanh %172 : vector<16x128xf32>
    %cst_51 = arith.constant 1.000000e+00 : f32
    %174 = vector.broadcast %cst_51 : f32 to vector<16x128xf32>
    %175 = arith.addf %173, %174 : vector<16x128xf32>
    %cst_52 = arith.constant 5.000000e-01 : f32
    %176 = vector.broadcast %cst_52 : f32 to vector<16x128xf32>
    %177 = arith.mulf %176, %175 : vector<16x128xf32>
    %178 = vector.extract_strided_slice %156 {offsets = [0, 256], sizes = [16, 128], strides = [1, 1]} : vector<16x384xf32> to vector<16x128xf32>
    %179 = vector.extract_strided_slice %157 {offsets = [0, 256], sizes = [16, 128], strides = [1, 1]} : vector<16x384xf32> to vector<16x128xf32>
    %180 = arith.addf %179, %11 : vector<16x128xf32>
    %181 = arith.mulf %167, %180 : vector<16x128xf32>
    %182 = arith.addf %178, %181 : vector<16x128xf32>
    %183 = math.tanh %182 : vector<16x128xf32>
    %cst_53 = arith.constant 1.000000e+00 : f32
    %184 = vector.broadcast %cst_53 : f32 to vector<16x128xf32>
    %185 = arith.subf %184, %177 : vector<16x128xf32>
    %186 = arith.mulf %185, %183 : vector<16x128xf32>
    %187 = arith.mulf %177, %105 : vector<16x128xf32>
    %188 = arith.addf %186, %187 : vector<16x128xf32>
    %189 = vector.shape_cast %153 : vector<16x1xi1> to vector<16x1xi1>
    %190 = vector.broadcast %189 : vector<16x1xi1> to vector<16x128xi1>
    %191 = arith.select %190, %188, %105 : vector<16x128xi1>, vector<16x128xf32>
    %192 = arith.truncf %191 : vector<16x128xf32> to vector<16x128xbf16>
    %193 = arith.truncf %150 : vector<16x128xf32> to vector<16x128xbf16>
    %194 = tpu.concatenate %192, %193 in 1 : vector<16x128xbf16>, vector<16x128xbf16> -> vector<16x256xbf16>
    %cst_54 = arith.constant dense<0.000000e+00> : vector<16x1152xf32>
    %195 = tpu.matmul %194, %5, %cst_54 {dimension_numbers = #tpu.dot_dimension_numbers<[1], [0], [0], [1], [0, 0, 1, 1], [], []>} : vector<16x256xbf16>, vector<256x1152xbf16>, vector<16x1152xf32> -> vector<16x1152xf32>
    %c2_i32 = arith.constant 2 : i32
    %196 = arith.addi %0, %c2_i32 : i32
    %c1_i32_55 = arith.constant 1 : i32
    %197 = arith.subi %196, %c1_i32_55 : i32
    %198 = vector.broadcast %197 : i32 to vector<16x1xi32>
    %199 = arith.cmpi sgt, %4, %198 : vector<16x1xi32>
    %200 = vector.extract_strided_slice %195 {offsets = [0, 384], sizes = [16, 384], strides = [1, 1]} : vector<16x1152xf32> to vector<16x384xf32>
    %201 = arith.addf %200, %8 : vector<16x384xf32>
    %202 = vector.extract_strided_slice %195 {offsets = [0, 768], sizes = [16, 384], strides = [1, 1]} : vector<16x1152xf32> to vector<16x384xf32>
    %203 = vector.extract_strided_slice %201 {offsets = [0, 0], sizes = [16, 128], strides = [1, 1]} : vector<16x384xf32> to vector<16x128xf32>
    %204 = vector.extract_strided_slice %202 {offsets = [0, 0], sizes = [16, 128], strides = [1, 1]} : vector<16x384xf32> to vector<16x128xf32>
    %205 = arith.addf %203, %204 : vector<16x128xf32>
    %cst_56 = arith.constant 5.000000e-01 : f32
    %206 = vector.broadcast %cst_56 : f32 to vector<16x128xf32>
    %207 = arith.mulf %206, %205 : vector<16x128xf32>
    %208 = math.tanh %207 : vector<16x128xf32>
    %cst_57 = arith.constant 1.000000e+00 : f32
    %209 = vector.broadcast %cst_57 : f32 to vector<16x128xf32>
    %210 = arith.addf %208, %209 : vector<16x128xf32>
    %cst_58 = arith.constant 5.000000e-01 : f32
    %211 = vector.broadcast %cst_58 : f32 to vector<16x128xf32>
    %212 = arith.mulf %211, %210 : vector<16x128xf32>
    %213 = vector.extract_strided_slice %201 {offsets = [0, 128], sizes = [16, 128], strides = [1, 1]} : vector<16x384xf32> to vector<16x128xf32>
    %214 = vector.extract_strided_slice %202 {offsets = [0, 128], sizes = [16, 128], strides = [1, 1]} : vector<16x384xf32> to vector<16x128xf32>
    %215 = arith.addf %213, %214 : vector<16x128xf32>
    %cst_59 = arith.constant 5.000000e-01 : f32
    %216 = vector.broadcast %cst_59 : f32 to vector<16x128xf32>
    %217 = arith.mulf %216, %215 : vector<16x128xf32>
    %218 = math.tanh %217 : vector<16x128xf32>
    %cst_60 = arith.constant 1.000000e+00 : f32
    %219 = vector.broadcast %cst_60 : f32 to vector<16x128xf32>
    %220 = arith.addf %218, %219 : vector<16x128xf32>
    %cst_61 = arith.constant 5.000000e-01 : f32
    %221 = vector.broadcast %cst_61 : f32 to vector<16x128xf32>
    %222 = arith.mulf %221, %220 : vector<16x128xf32>
    %223 = vector.extract_strided_slice %201 {offsets = [0, 256], sizes = [16, 128], strides = [1, 1]} : vector<16x384xf32> to vector<16x128xf32>
    %224 = vector.extract_strided_slice %202 {offsets = [0, 256], sizes = [16, 128], strides = [1, 1]} : vector<16x384xf32> to vector<16x128xf32>
    %225 = arith.addf %224, %14 : vector<16x128xf32>
    %226 = arith.mulf %212, %225 : vector<16x128xf32>
    %227 = arith.addf %223, %226 : vector<16x128xf32>
    %228 = math.tanh %227 : vector<16x128xf32>
    %cst_62 = arith.constant 1.000000e+00 : f32
    %229 = vector.broadcast %cst_62 : f32 to vector<16x128xf32>
    %230 = arith.subf %229, %222 : vector<16x128xf32>
    %231 = arith.mulf %230, %228 : vector<16x128xf32>
    %232 = arith.mulf %222, %150 : vector<16x128xf32>
    %233 = arith.addf %231, %232 : vector<16x128xf32>
    %234 = vector.shape_cast %199 : vector<16x1xi1> to vector<16x1xi1>
    %235 = vector.broadcast %234 : vector<16x1xi1> to vector<16x128xi1>
    %236 = arith.select %235, %233, %150 : vector<16x128xi1>, vector<16x128xf32>
    %c2_i32_63 = arith.constant 2 : i32
    %237 = arith.addi %0, %c2_i32_63 : i32
    %238 = vector.broadcast %237 : i32 to vector<16x1xi32>
    %239 = arith.cmpi sgt, %4, %238 : vector<16x1xi32>
    %c2 = arith.constant 2 : index
    %c0_64 = arith.constant 0 : index
    %c0_65 = arith.constant 0 : index
    %240 = vector.load %arg3[%c2, %c0_64, %c0_65] : memref<8x16x384xbf16, #tpu.memory_space<vmem>>, vector<1x16x384xbf16>
    %241 = vector.shape_cast %240 : vector<1x16x384xbf16> to vector<16x384xbf16>
    %242 = arith.extf %241 : vector<16x384xbf16> to vector<16x384xf32>
    %243 = vector.extract_strided_slice %195 {offsets = [0, 0], sizes = [16, 384], strides = [1, 1]} : vector<16x1152xf32> to vector<16x384xf32>
    %244 = vector.extract_strided_slice %242 {offsets = [0, 0], sizes = [16, 128], strides = [1, 1]} : vector<16x384xf32> to vector<16x128xf32>
    %245 = vector.extract_strided_slice %243 {offsets = [0, 0], sizes = [16, 128], strides = [1, 1]} : vector<16x384xf32> to vector<16x128xf32>
    %246 = arith.addf %244, %245 : vector<16x128xf32>
    %cst_66 = arith.constant 5.000000e-01 : f32
    %247 = vector.broadcast %cst_66 : f32 to vector<16x128xf32>
    %248 = arith.mulf %247, %246 : vector<16x128xf32>
    %249 = math.tanh %248 : vector<16x128xf32>
    %cst_67 = arith.constant 1.000000e+00 : f32
    %250 = vector.broadcast %cst_67 : f32 to vector<16x128xf32>
    %251 = arith.addf %249, %250 : vector<16x128xf32>
    %cst_68 = arith.constant 5.000000e-01 : f32
    %252 = vector.broadcast %cst_68 : f32 to vector<16x128xf32>
    %253 = arith.mulf %252, %251 : vector<16x128xf32>
    %254 = vector.extract_strided_slice %242 {offsets = [0, 128], sizes = [16, 128], strides = [1, 1]} : vector<16x384xf32> to vector<16x128xf32>
    %255 = vector.extract_strided_slice %243 {offsets = [0, 128], sizes = [16, 128], strides = [1, 1]} : vector<16x384xf32> to vector<16x128xf32>
    %256 = arith.addf %254, %255 : vector<16x128xf32>
    %cst_69 = arith.constant 5.000000e-01 : f32
    %257 = vector.broadcast %cst_69 : f32 to vector<16x128xf32>
    %258 = arith.mulf %257, %256 : vector<16x128xf32>
    %259 = math.tanh %258 : vector<16x128xf32>
    %cst_70 = arith.constant 1.000000e+00 : f32
    %260 = vector.broadcast %cst_70 : f32 to vector<16x128xf32>
    %261 = arith.addf %259, %260 : vector<16x128xf32>
    %cst_71 = arith.constant 5.000000e-01 : f32
    %262 = vector.broadcast %cst_71 : f32 to vector<16x128xf32>
    %263 = arith.mulf %262, %261 : vector<16x128xf32>
    %264 = vector.extract_strided_slice %242 {offsets = [0, 256], sizes = [16, 128], strides = [1, 1]} : vector<16x384xf32> to vector<16x128xf32>
    %265 = vector.extract_strided_slice %243 {offsets = [0, 256], sizes = [16, 128], strides = [1, 1]} : vector<16x384xf32> to vector<16x128xf32>
    %266 = arith.addf %265, %11 : vector<16x128xf32>
    %267 = arith.mulf %253, %266 : vector<16x128xf32>
    %268 = arith.addf %264, %267 : vector<16x128xf32>
    %269 = math.tanh %268 : vector<16x128xf32>
    %cst_72 = arith.constant 1.000000e+00 : f32
    %270 = vector.broadcast %cst_72 : f32 to vector<16x128xf32>
    %271 = arith.subf %270, %263 : vector<16x128xf32>
    %272 = arith.mulf %271, %269 : vector<16x128xf32>
    %273 = arith.mulf %263, %191 : vector<16x128xf32>
    %274 = arith.addf %272, %273 : vector<16x128xf32>
    %275 = vector.shape_cast %239 : vector<16x1xi1> to vector<16x1xi1>
    %276 = vector.broadcast %275 : vector<16x1xi1> to vector<16x128xi1>
    %277 = arith.select %276, %274, %191 : vector<16x128xi1>, vector<16x128xf32>
    %278 = arith.truncf %277 : vector<16x128xf32> to vector<16x128xbf16>
    %279 = arith.truncf %236 : vector<16x128xf32> to vector<16x128xbf16>
    %280 = tpu.concatenate %278, %279 in 1 : vector<16x128xbf16>, vector<16x128xbf16> -> vector<16x256xbf16>
    %cst_73 = arith.constant dense<0.000000e+00> : vector<16x1152xf32>
    %281 = tpu.matmul %280, %5, %cst_73 {dimension_numbers = #tpu.dot_dimension_numbers<[1], [0], [0], [1], [0, 0, 1, 1], [], []>} : vector<16x256xbf16>, vector<256x1152xbf16>, vector<16x1152xf32> -> vector<16x1152xf32>
    %c3_i32 = arith.constant 3 : i32
    %282 = arith.addi %0, %c3_i32 : i32
    %c1_i32_74 = arith.constant 1 : i32
    %283 = arith.subi %282, %c1_i32_74 : i32
    %284 = vector.broadcast %283 : i32 to vector<16x1xi32>
    %285 = arith.cmpi sgt, %4, %284 : vector<16x1xi32>
    %286 = vector.extract_strided_slice %281 {offsets = [0, 384], sizes = [16, 384], strides = [1, 1]} : vector<16x1152xf32> to vector<16x384xf32>
    %287 = arith.addf %286, %8 : vector<16x384xf32>
    %288 = vector.extract_strided_slice %281 {offsets = [0, 768], sizes = [16, 384], strides = [1, 1]} : vector<16x1152xf32> to vector<16x384xf32>
    %289 = vector.extract_strided_slice %287 {offsets = [0, 0], sizes = [16, 128], strides = [1, 1]} : vector<16x384xf32> to vector<16x128xf32>
    %290 = vector.extract_strided_slice %288 {offsets = [0, 0], sizes = [16, 128], strides = [1, 1]} : vector<16x384xf32> to vector<16x128xf32>
    %291 = arith.addf %289, %290 : vector<16x128xf32>
    %cst_75 = arith.constant 5.000000e-01 : f32
    %292 = vector.broadcast %cst_75 : f32 to vector<16x128xf32>
    %293 = arith.mulf %292, %291 : vector<16x128xf32>
    %294 = math.tanh %293 : vector<16x128xf32>
    %cst_76 = arith.constant 1.000000e+00 : f32
    %295 = vector.broadcast %cst_76 : f32 to vector<16x128xf32>
    %296 = arith.addf %294, %295 : vector<16x128xf32>
    %cst_77 = arith.constant 5.000000e-01 : f32
    %297 = vector.broadcast %cst_77 : f32 to vector<16x128xf32>
    %298 = arith.mulf %297, %296 : vector<16x128xf32>
    %299 = vector.extract_strided_slice %287 {offsets = [0, 128], sizes = [16, 128], strides = [1, 1]} : vector<16x384xf32> to vector<16x128xf32>
    %300 = vector.extract_strided_slice %288 {offsets = [0, 128], sizes = [16, 128], strides = [1, 1]} : vector<16x384xf32> to vector<16x128xf32>
    %301 = arith.addf %299, %300 : vector<16x128xf32>
    %cst_78 = arith.constant 5.000000e-01 : f32
    %302 = vector.broadcast %cst_78 : f32 to vector<16x128xf32>
    %303 = arith.mulf %302, %301 : vector<16x128xf32>
    %304 = math.tanh %303 : vector<16x128xf32>
    %cst_79 = arith.constant 1.000000e+00 : f32
    %305 = vector.broadcast %cst_79 : f32 to vector<16x128xf32>
    %306 = arith.addf %304, %305 : vector<16x128xf32>
    %cst_80 = arith.constant 5.000000e-01 : f32
    %307 = vector.broadcast %cst_80 : f32 to vector<16x128xf32>
    %308 = arith.mulf %307, %306 : vector<16x128xf32>
    %309 = vector.extract_strided_slice %287 {offsets = [0, 256], sizes = [16, 128], strides = [1, 1]} : vector<16x384xf32> to vector<16x128xf32>
    %310 = vector.extract_strided_slice %288 {offsets = [0, 256], sizes = [16, 128], strides = [1, 1]} : vector<16x384xf32> to vector<16x128xf32>
    %311 = arith.addf %310, %14 : vector<16x128xf32>
    %312 = arith.mulf %298, %311 : vector<16x128xf32>
    %313 = arith.addf %309, %312 : vector<16x128xf32>
    %314 = math.tanh %313 : vector<16x128xf32>
    %cst_81 = arith.constant 1.000000e+00 : f32
    %315 = vector.broadcast %cst_81 : f32 to vector<16x128xf32>
    %316 = arith.subf %315, %308 : vector<16x128xf32>
    %317 = arith.mulf %316, %314 : vector<16x128xf32>
    %318 = arith.mulf %308, %236 : vector<16x128xf32>
    %319 = arith.addf %317, %318 : vector<16x128xf32>
    %320 = vector.shape_cast %285 : vector<16x1xi1> to vector<16x1xi1>
    %321 = vector.broadcast %320 : vector<16x1xi1> to vector<16x128xi1>
    %322 = arith.select %321, %319, %236 : vector<16x128xi1>, vector<16x128xf32>
    %c3_i32_82 = arith.constant 3 : i32
    %323 = arith.addi %0, %c3_i32_82 : i32
    %324 = vector.broadcast %323 : i32 to vector<16x1xi32>
    %325 = arith.cmpi sgt, %4, %324 : vector<16x1xi32>
    %c3 = arith.constant 3 : index
    %c0_83 = arith.constant 0 : index
    %c0_84 = arith.constant 0 : index
    %326 = vector.load %arg3[%c3, %c0_83, %c0_84] : memref<8x16x384xbf16, #tpu.memory_space<vmem>>, vector<1x16x384xbf16>
    %327 = vector.shape_cast %326 : vector<1x16x384xbf16> to vector<16x384xbf16>
    %328 = arith.extf %327 : vector<16x384xbf16> to vector<16x384xf32>
    %329 = vector.extract_strided_slice %281 {offsets = [0, 0], sizes = [16, 384], strides = [1, 1]} : vector<16x1152xf32> to vector<16x384xf32>
    %330 = vector.extract_strided_slice %328 {offsets = [0, 0], sizes = [16, 128], strides = [1, 1]} : vector<16x384xf32> to vector<16x128xf32>
    %331 = vector.extract_strided_slice %329 {offsets = [0, 0], sizes = [16, 128], strides = [1, 1]} : vector<16x384xf32> to vector<16x128xf32>
    %332 = arith.addf %330, %331 : vector<16x128xf32>
    %cst_85 = arith.constant 5.000000e-01 : f32
    %333 = vector.broadcast %cst_85 : f32 to vector<16x128xf32>
    %334 = arith.mulf %333, %332 : vector<16x128xf32>
    %335 = math.tanh %334 : vector<16x128xf32>
    %cst_86 = arith.constant 1.000000e+00 : f32
    %336 = vector.broadcast %cst_86 : f32 to vector<16x128xf32>
    %337 = arith.addf %335, %336 : vector<16x128xf32>
    %cst_87 = arith.constant 5.000000e-01 : f32
    %338 = vector.broadcast %cst_87 : f32 to vector<16x128xf32>
    %339 = arith.mulf %338, %337 : vector<16x128xf32>
    %340 = vector.extract_strided_slice %328 {offsets = [0, 128], sizes = [16, 128], strides = [1, 1]} : vector<16x384xf32> to vector<16x128xf32>
    %341 = vector.extract_strided_slice %329 {offsets = [0, 128], sizes = [16, 128], strides = [1, 1]} : vector<16x384xf32> to vector<16x128xf32>
    %342 = arith.addf %340, %341 : vector<16x128xf32>
    %cst_88 = arith.constant 5.000000e-01 : f32
    %343 = vector.broadcast %cst_88 : f32 to vector<16x128xf32>
    %344 = arith.mulf %343, %342 : vector<16x128xf32>
    %345 = math.tanh %344 : vector<16x128xf32>
    %cst_89 = arith.constant 1.000000e+00 : f32
    %346 = vector.broadcast %cst_89 : f32 to vector<16x128xf32>
    %347 = arith.addf %345, %346 : vector<16x128xf32>
    %cst_90 = arith.constant 5.000000e-01 : f32
    %348 = vector.broadcast %cst_90 : f32 to vector<16x128xf32>
    %349 = arith.mulf %348, %347 : vector<16x128xf32>
    %350 = vector.extract_strided_slice %328 {offsets = [0, 256], sizes = [16, 128], strides = [1, 1]} : vector<16x384xf32> to vector<16x128xf32>
    %351 = vector.extract_strided_slice %329 {offsets = [0, 256], sizes = [16, 128], strides = [1, 1]} : vector<16x384xf32> to vector<16x128xf32>
    %352 = arith.addf %351, %11 : vector<16x128xf32>
    %353 = arith.mulf %339, %352 : vector<16x128xf32>
    %354 = arith.addf %350, %353 : vector<16x128xf32>
    %355 = math.tanh %354 : vector<16x128xf32>
    %cst_91 = arith.constant 1.000000e+00 : f32
    %356 = vector.broadcast %cst_91 : f32 to vector<16x128xf32>
    %357 = arith.subf %356, %349 : vector<16x128xf32>
    %358 = arith.mulf %357, %355 : vector<16x128xf32>
    %359 = arith.mulf %349, %277 : vector<16x128xf32>
    %360 = arith.addf %358, %359 : vector<16x128xf32>
    %361 = vector.shape_cast %325 : vector<16x1xi1> to vector<16x1xi1>
    %362 = vector.broadcast %361 : vector<16x1xi1> to vector<16x128xi1>
    %363 = arith.select %362, %360, %277 : vector<16x128xi1>, vector<16x128xf32>
    %364 = arith.truncf %363 : vector<16x128xf32> to vector<16x128xbf16>
    %365 = arith.truncf %322 : vector<16x128xf32> to vector<16x128xbf16>
    %366 = tpu.concatenate %364, %365 in 1 : vector<16x128xbf16>, vector<16x128xbf16> -> vector<16x256xbf16>
    %cst_92 = arith.constant dense<0.000000e+00> : vector<16x1152xf32>
    %367 = tpu.matmul %366, %5, %cst_92 {dimension_numbers = #tpu.dot_dimension_numbers<[1], [0], [0], [1], [0, 0, 1, 1], [], []>} : vector<16x256xbf16>, vector<256x1152xbf16>, vector<16x1152xf32> -> vector<16x1152xf32>
    %c4_i32 = arith.constant 4 : i32
    %368 = arith.addi %0, %c4_i32 : i32
    %c1_i32_93 = arith.constant 1 : i32
    %369 = arith.subi %368, %c1_i32_93 : i32
    %370 = vector.broadcast %369 : i32 to vector<16x1xi32>
    %371 = arith.cmpi sgt, %4, %370 : vector<16x1xi32>
    %372 = vector.extract_strided_slice %367 {offsets = [0, 384], sizes = [16, 384], strides = [1, 1]} : vector<16x1152xf32> to vector<16x384xf32>
    %373 = arith.addf %372, %8 : vector<16x384xf32>
    %374 = vector.extract_strided_slice %367 {offsets = [0, 768], sizes = [16, 384], strides = [1, 1]} : vector<16x1152xf32> to vector<16x384xf32>
    %375 = vector.extract_strided_slice %373 {offsets = [0, 0], sizes = [16, 128], strides = [1, 1]} : vector<16x384xf32> to vector<16x128xf32>
    %376 = vector.extract_strided_slice %374 {offsets = [0, 0], sizes = [16, 128], strides = [1, 1]} : vector<16x384xf32> to vector<16x128xf32>
    %377 = arith.addf %375, %376 : vector<16x128xf32>
    %cst_94 = arith.constant 5.000000e-01 : f32
    %378 = vector.broadcast %cst_94 : f32 to vector<16x128xf32>
    %379 = arith.mulf %378, %377 : vector<16x128xf32>
    %380 = math.tanh %379 : vector<16x128xf32>
    %cst_95 = arith.constant 1.000000e+00 : f32
    %381 = vector.broadcast %cst_95 : f32 to vector<16x128xf32>
    %382 = arith.addf %380, %381 : vector<16x128xf32>
    %cst_96 = arith.constant 5.000000e-01 : f32
    %383 = vector.broadcast %cst_96 : f32 to vector<16x128xf32>
    %384 = arith.mulf %383, %382 : vector<16x128xf32>
    %385 = vector.extract_strided_slice %373 {offsets = [0, 128], sizes = [16, 128], strides = [1, 1]} : vector<16x384xf32> to vector<16x128xf32>
    %386 = vector.extract_strided_slice %374 {offsets = [0, 128], sizes = [16, 128], strides = [1, 1]} : vector<16x384xf32> to vector<16x128xf32>
    %387 = arith.addf %385, %386 : vector<16x128xf32>
    %cst_97 = arith.constant 5.000000e-01 : f32
    %388 = vector.broadcast %cst_97 : f32 to vector<16x128xf32>
    %389 = arith.mulf %388, %387 : vector<16x128xf32>
    %390 = math.tanh %389 : vector<16x128xf32>
    %cst_98 = arith.constant 1.000000e+00 : f32
    %391 = vector.broadcast %cst_98 : f32 to vector<16x128xf32>
    %392 = arith.addf %390, %391 : vector<16x128xf32>
    %cst_99 = arith.constant 5.000000e-01 : f32
    %393 = vector.broadcast %cst_99 : f32 to vector<16x128xf32>
    %394 = arith.mulf %393, %392 : vector<16x128xf32>
    %395 = vector.extract_strided_slice %373 {offsets = [0, 256], sizes = [16, 128], strides = [1, 1]} : vector<16x384xf32> to vector<16x128xf32>
    %396 = vector.extract_strided_slice %374 {offsets = [0, 256], sizes = [16, 128], strides = [1, 1]} : vector<16x384xf32> to vector<16x128xf32>
    %397 = arith.addf %396, %14 : vector<16x128xf32>
    %398 = arith.mulf %384, %397 : vector<16x128xf32>
    %399 = arith.addf %395, %398 : vector<16x128xf32>
    %400 = math.tanh %399 : vector<16x128xf32>
    %cst_100 = arith.constant 1.000000e+00 : f32
    %401 = vector.broadcast %cst_100 : f32 to vector<16x128xf32>
    %402 = arith.subf %401, %394 : vector<16x128xf32>
    %403 = arith.mulf %402, %400 : vector<16x128xf32>
    %404 = arith.mulf %394, %322 : vector<16x128xf32>
    %405 = arith.addf %403, %404 : vector<16x128xf32>
    %406 = vector.shape_cast %371 : vector<16x1xi1> to vector<16x1xi1>
    %407 = vector.broadcast %406 : vector<16x1xi1> to vector<16x128xi1>
    %408 = arith.select %407, %405, %322 : vector<16x128xi1>, vector<16x128xf32>
    %c4_i32_101 = arith.constant 4 : i32
    %409 = arith.addi %0, %c4_i32_101 : i32
    %410 = vector.broadcast %409 : i32 to vector<16x1xi32>
    %411 = arith.cmpi sgt, %4, %410 : vector<16x1xi32>
    %c4 = arith.constant 4 : index
    %c0_102 = arith.constant 0 : index
    %c0_103 = arith.constant 0 : index
    %412 = vector.load %arg3[%c4, %c0_102, %c0_103] : memref<8x16x384xbf16, #tpu.memory_space<vmem>>, vector<1x16x384xbf16>
    %413 = vector.shape_cast %412 : vector<1x16x384xbf16> to vector<16x384xbf16>
    %414 = arith.extf %413 : vector<16x384xbf16> to vector<16x384xf32>
    %415 = vector.extract_strided_slice %367 {offsets = [0, 0], sizes = [16, 384], strides = [1, 1]} : vector<16x1152xf32> to vector<16x384xf32>
    %416 = vector.extract_strided_slice %414 {offsets = [0, 0], sizes = [16, 128], strides = [1, 1]} : vector<16x384xf32> to vector<16x128xf32>
    %417 = vector.extract_strided_slice %415 {offsets = [0, 0], sizes = [16, 128], strides = [1, 1]} : vector<16x384xf32> to vector<16x128xf32>
    %418 = arith.addf %416, %417 : vector<16x128xf32>
    %cst_104 = arith.constant 5.000000e-01 : f32
    %419 = vector.broadcast %cst_104 : f32 to vector<16x128xf32>
    %420 = arith.mulf %419, %418 : vector<16x128xf32>
    %421 = math.tanh %420 : vector<16x128xf32>
    %cst_105 = arith.constant 1.000000e+00 : f32
    %422 = vector.broadcast %cst_105 : f32 to vector<16x128xf32>
    %423 = arith.addf %421, %422 : vector<16x128xf32>
    %cst_106 = arith.constant 5.000000e-01 : f32
    %424 = vector.broadcast %cst_106 : f32 to vector<16x128xf32>
    %425 = arith.mulf %424, %423 : vector<16x128xf32>
    %426 = vector.extract_strided_slice %414 {offsets = [0, 128], sizes = [16, 128], strides = [1, 1]} : vector<16x384xf32> to vector<16x128xf32>
    %427 = vector.extract_strided_slice %415 {offsets = [0, 128], sizes = [16, 128], strides = [1, 1]} : vector<16x384xf32> to vector<16x128xf32>
    %428 = arith.addf %426, %427 : vector<16x128xf32>
    %cst_107 = arith.constant 5.000000e-01 : f32
    %429 = vector.broadcast %cst_107 : f32 to vector<16x128xf32>
    %430 = arith.mulf %429, %428 : vector<16x128xf32>
    %431 = math.tanh %430 : vector<16x128xf32>
    %cst_108 = arith.constant 1.000000e+00 : f32
    %432 = vector.broadcast %cst_108 : f32 to vector<16x128xf32>
    %433 = arith.addf %431, %432 : vector<16x128xf32>
    %cst_109 = arith.constant 5.000000e-01 : f32
    %434 = vector.broadcast %cst_109 : f32 to vector<16x128xf32>
    %435 = arith.mulf %434, %433 : vector<16x128xf32>
    %436 = vector.extract_strided_slice %414 {offsets = [0, 256], sizes = [16, 128], strides = [1, 1]} : vector<16x384xf32> to vector<16x128xf32>
    %437 = vector.extract_strided_slice %415 {offsets = [0, 256], sizes = [16, 128], strides = [1, 1]} : vector<16x384xf32> to vector<16x128xf32>
    %438 = arith.addf %437, %11 : vector<16x128xf32>
    %439 = arith.mulf %425, %438 : vector<16x128xf32>
    %440 = arith.addf %436, %439 : vector<16x128xf32>
    %441 = math.tanh %440 : vector<16x128xf32>
    %cst_110 = arith.constant 1.000000e+00 : f32
    %442 = vector.broadcast %cst_110 : f32 to vector<16x128xf32>
    %443 = arith.subf %442, %435 : vector<16x128xf32>
    %444 = arith.mulf %443, %441 : vector<16x128xf32>
    %445 = arith.mulf %435, %363 : vector<16x128xf32>
    %446 = arith.addf %444, %445 : vector<16x128xf32>
    %447 = vector.shape_cast %411 : vector<16x1xi1> to vector<16x1xi1>
    %448 = vector.broadcast %447 : vector<16x1xi1> to vector<16x128xi1>
    %449 = arith.select %448, %446, %363 : vector<16x128xi1>, vector<16x128xf32>
    %450 = arith.truncf %449 : vector<16x128xf32> to vector<16x128xbf16>
    %451 = arith.truncf %408 : vector<16x128xf32> to vector<16x128xbf16>
    %452 = tpu.concatenate %450, %451 in 1 : vector<16x128xbf16>, vector<16x128xbf16> -> vector<16x256xbf16>
    %cst_111 = arith.constant dense<0.000000e+00> : vector<16x1152xf32>
    %453 = tpu.matmul %452, %5, %cst_111 {dimension_numbers = #tpu.dot_dimension_numbers<[1], [0], [0], [1], [0, 0, 1, 1], [], []>} : vector<16x256xbf16>, vector<256x1152xbf16>, vector<16x1152xf32> -> vector<16x1152xf32>
    %c5_i32 = arith.constant 5 : i32
    %454 = arith.addi %0, %c5_i32 : i32
    %c1_i32_112 = arith.constant 1 : i32
    %455 = arith.subi %454, %c1_i32_112 : i32
    %456 = vector.broadcast %455 : i32 to vector<16x1xi32>
    %457 = arith.cmpi sgt, %4, %456 : vector<16x1xi32>
    %458 = vector.extract_strided_slice %453 {offsets = [0, 384], sizes = [16, 384], strides = [1, 1]} : vector<16x1152xf32> to vector<16x384xf32>
    %459 = arith.addf %458, %8 : vector<16x384xf32>
    %460 = vector.extract_strided_slice %453 {offsets = [0, 768], sizes = [16, 384], strides = [1, 1]} : vector<16x1152xf32> to vector<16x384xf32>
    %461 = vector.extract_strided_slice %459 {offsets = [0, 0], sizes = [16, 128], strides = [1, 1]} : vector<16x384xf32> to vector<16x128xf32>
    %462 = vector.extract_strided_slice %460 {offsets = [0, 0], sizes = [16, 128], strides = [1, 1]} : vector<16x384xf32> to vector<16x128xf32>
    %463 = arith.addf %461, %462 : vector<16x128xf32>
    %cst_113 = arith.constant 5.000000e-01 : f32
    %464 = vector.broadcast %cst_113 : f32 to vector<16x128xf32>
    %465 = arith.mulf %464, %463 : vector<16x128xf32>
    %466 = math.tanh %465 : vector<16x128xf32>
    %cst_114 = arith.constant 1.000000e+00 : f32
    %467 = vector.broadcast %cst_114 : f32 to vector<16x128xf32>
    %468 = arith.addf %466, %467 : vector<16x128xf32>
    %cst_115 = arith.constant 5.000000e-01 : f32
    %469 = vector.broadcast %cst_115 : f32 to vector<16x128xf32>
    %470 = arith.mulf %469, %468 : vector<16x128xf32>
    %471 = vector.extract_strided_slice %459 {offsets = [0, 128], sizes = [16, 128], strides = [1, 1]} : vector<16x384xf32> to vector<16x128xf32>
    %472 = vector.extract_strided_slice %460 {offsets = [0, 128], sizes = [16, 128], strides = [1, 1]} : vector<16x384xf32> to vector<16x128xf32>
    %473 = arith.addf %471, %472 : vector<16x128xf32>
    %cst_116 = arith.constant 5.000000e-01 : f32
    %474 = vector.broadcast %cst_116 : f32 to vector<16x128xf32>
    %475 = arith.mulf %474, %473 : vector<16x128xf32>
    %476 = math.tanh %475 : vector<16x128xf32>
    %cst_117 = arith.constant 1.000000e+00 : f32
    %477 = vector.broadcast %cst_117 : f32 to vector<16x128xf32>
    %478 = arith.addf %476, %477 : vector<16x128xf32>
    %cst_118 = arith.constant 5.000000e-01 : f32
    %479 = vector.broadcast %cst_118 : f32 to vector<16x128xf32>
    %480 = arith.mulf %479, %478 : vector<16x128xf32>
    %481 = vector.extract_strided_slice %459 {offsets = [0, 256], sizes = [16, 128], strides = [1, 1]} : vector<16x384xf32> to vector<16x128xf32>
    %482 = vector.extract_strided_slice %460 {offsets = [0, 256], sizes = [16, 128], strides = [1, 1]} : vector<16x384xf32> to vector<16x128xf32>
    %483 = arith.addf %482, %14 : vector<16x128xf32>
    %484 = arith.mulf %470, %483 : vector<16x128xf32>
    %485 = arith.addf %481, %484 : vector<16x128xf32>
    %486 = math.tanh %485 : vector<16x128xf32>
    %cst_119 = arith.constant 1.000000e+00 : f32
    %487 = vector.broadcast %cst_119 : f32 to vector<16x128xf32>
    %488 = arith.subf %487, %480 : vector<16x128xf32>
    %489 = arith.mulf %488, %486 : vector<16x128xf32>
    %490 = arith.mulf %480, %408 : vector<16x128xf32>
    %491 = arith.addf %489, %490 : vector<16x128xf32>
    %492 = vector.shape_cast %457 : vector<16x1xi1> to vector<16x1xi1>
    %493 = vector.broadcast %492 : vector<16x1xi1> to vector<16x128xi1>
    %494 = arith.select %493, %491, %408 : vector<16x128xi1>, vector<16x128xf32>
    %c5_i32_120 = arith.constant 5 : i32
    %495 = arith.addi %0, %c5_i32_120 : i32
    %496 = vector.broadcast %495 : i32 to vector<16x1xi32>
    %497 = arith.cmpi sgt, %4, %496 : vector<16x1xi32>
    %c5 = arith.constant 5 : index
    %c0_121 = arith.constant 0 : index
    %c0_122 = arith.constant 0 : index
    %498 = vector.load %arg3[%c5, %c0_121, %c0_122] : memref<8x16x384xbf16, #tpu.memory_space<vmem>>, vector<1x16x384xbf16>
    %499 = vector.shape_cast %498 : vector<1x16x384xbf16> to vector<16x384xbf16>
    %500 = arith.extf %499 : vector<16x384xbf16> to vector<16x384xf32>
    %501 = vector.extract_strided_slice %453 {offsets = [0, 0], sizes = [16, 384], strides = [1, 1]} : vector<16x1152xf32> to vector<16x384xf32>
    %502 = vector.extract_strided_slice %500 {offsets = [0, 0], sizes = [16, 128], strides = [1, 1]} : vector<16x384xf32> to vector<16x128xf32>
    %503 = vector.extract_strided_slice %501 {offsets = [0, 0], sizes = [16, 128], strides = [1, 1]} : vector<16x384xf32> to vector<16x128xf32>
    %504 = arith.addf %502, %503 : vector<16x128xf32>
    %cst_123 = arith.constant 5.000000e-01 : f32
    %505 = vector.broadcast %cst_123 : f32 to vector<16x128xf32>
    %506 = arith.mulf %505, %504 : vector<16x128xf32>
    %507 = math.tanh %506 : vector<16x128xf32>
    %cst_124 = arith.constant 1.000000e+00 : f32
    %508 = vector.broadcast %cst_124 : f32 to vector<16x128xf32>
    %509 = arith.addf %507, %508 : vector<16x128xf32>
    %cst_125 = arith.constant 5.000000e-01 : f32
    %510 = vector.broadcast %cst_125 : f32 to vector<16x128xf32>
    %511 = arith.mulf %510, %509 : vector<16x128xf32>
    %512 = vector.extract_strided_slice %500 {offsets = [0, 128], sizes = [16, 128], strides = [1, 1]} : vector<16x384xf32> to vector<16x128xf32>
    %513 = vector.extract_strided_slice %501 {offsets = [0, 128], sizes = [16, 128], strides = [1, 1]} : vector<16x384xf32> to vector<16x128xf32>
    %514 = arith.addf %512, %513 : vector<16x128xf32>
    %cst_126 = arith.constant 5.000000e-01 : f32
    %515 = vector.broadcast %cst_126 : f32 to vector<16x128xf32>
    %516 = arith.mulf %515, %514 : vector<16x128xf32>
    %517 = math.tanh %516 : vector<16x128xf32>
    %cst_127 = arith.constant 1.000000e+00 : f32
    %518 = vector.broadcast %cst_127 : f32 to vector<16x128xf32>
    %519 = arith.addf %517, %518 : vector<16x128xf32>
    %cst_128 = arith.constant 5.000000e-01 : f32
    %520 = vector.broadcast %cst_128 : f32 to vector<16x128xf32>
    %521 = arith.mulf %520, %519 : vector<16x128xf32>
    %522 = vector.extract_strided_slice %500 {offsets = [0, 256], sizes = [16, 128], strides = [1, 1]} : vector<16x384xf32> to vector<16x128xf32>
    %523 = vector.extract_strided_slice %501 {offsets = [0, 256], sizes = [16, 128], strides = [1, 1]} : vector<16x384xf32> to vector<16x128xf32>
    %524 = arith.addf %523, %11 : vector<16x128xf32>
    %525 = arith.mulf %511, %524 : vector<16x128xf32>
    %526 = arith.addf %522, %525 : vector<16x128xf32>
    %527 = math.tanh %526 : vector<16x128xf32>
    %cst_129 = arith.constant 1.000000e+00 : f32
    %528 = vector.broadcast %cst_129 : f32 to vector<16x128xf32>
    %529 = arith.subf %528, %521 : vector<16x128xf32>
    %530 = arith.mulf %529, %527 : vector<16x128xf32>
    %531 = arith.mulf %521, %449 : vector<16x128xf32>
    %532 = arith.addf %530, %531 : vector<16x128xf32>
    %533 = vector.shape_cast %497 : vector<16x1xi1> to vector<16x1xi1>
    %534 = vector.broadcast %533 : vector<16x1xi1> to vector<16x128xi1>
    %535 = arith.select %534, %532, %449 : vector<16x128xi1>, vector<16x128xf32>
    %536 = arith.truncf %535 : vector<16x128xf32> to vector<16x128xbf16>
    %537 = arith.truncf %494 : vector<16x128xf32> to vector<16x128xbf16>
    %538 = tpu.concatenate %536, %537 in 1 : vector<16x128xbf16>, vector<16x128xbf16> -> vector<16x256xbf16>
    %cst_130 = arith.constant dense<0.000000e+00> : vector<16x1152xf32>
    %539 = tpu.matmul %538, %5, %cst_130 {dimension_numbers = #tpu.dot_dimension_numbers<[1], [0], [0], [1], [0, 0, 1, 1], [], []>} : vector<16x256xbf16>, vector<256x1152xbf16>, vector<16x1152xf32> -> vector<16x1152xf32>
    %c6_i32 = arith.constant 6 : i32
    %540 = arith.addi %0, %c6_i32 : i32
    %c1_i32_131 = arith.constant 1 : i32
    %541 = arith.subi %540, %c1_i32_131 : i32
    %542 = vector.broadcast %541 : i32 to vector<16x1xi32>
    %543 = arith.cmpi sgt, %4, %542 : vector<16x1xi32>
    %544 = vector.extract_strided_slice %539 {offsets = [0, 384], sizes = [16, 384], strides = [1, 1]} : vector<16x1152xf32> to vector<16x384xf32>
    %545 = arith.addf %544, %8 : vector<16x384xf32>
    %546 = vector.extract_strided_slice %539 {offsets = [0, 768], sizes = [16, 384], strides = [1, 1]} : vector<16x1152xf32> to vector<16x384xf32>
    %547 = vector.extract_strided_slice %545 {offsets = [0, 0], sizes = [16, 128], strides = [1, 1]} : vector<16x384xf32> to vector<16x128xf32>
    %548 = vector.extract_strided_slice %546 {offsets = [0, 0], sizes = [16, 128], strides = [1, 1]} : vector<16x384xf32> to vector<16x128xf32>
    %549 = arith.addf %547, %548 : vector<16x128xf32>
    %cst_132 = arith.constant 5.000000e-01 : f32
    %550 = vector.broadcast %cst_132 : f32 to vector<16x128xf32>
    %551 = arith.mulf %550, %549 : vector<16x128xf32>
    %552 = math.tanh %551 : vector<16x128xf32>
    %cst_133 = arith.constant 1.000000e+00 : f32
    %553 = vector.broadcast %cst_133 : f32 to vector<16x128xf32>
    %554 = arith.addf %552, %553 : vector<16x128xf32>
    %cst_134 = arith.constant 5.000000e-01 : f32
    %555 = vector.broadcast %cst_134 : f32 to vector<16x128xf32>
    %556 = arith.mulf %555, %554 : vector<16x128xf32>
    %557 = vector.extract_strided_slice %545 {offsets = [0, 128], sizes = [16, 128], strides = [1, 1]} : vector<16x384xf32> to vector<16x128xf32>
    %558 = vector.extract_strided_slice %546 {offsets = [0, 128], sizes = [16, 128], strides = [1, 1]} : vector<16x384xf32> to vector<16x128xf32>
    %559 = arith.addf %557, %558 : vector<16x128xf32>
    %cst_135 = arith.constant 5.000000e-01 : f32
    %560 = vector.broadcast %cst_135 : f32 to vector<16x128xf32>
    %561 = arith.mulf %560, %559 : vector<16x128xf32>
    %562 = math.tanh %561 : vector<16x128xf32>
    %cst_136 = arith.constant 1.000000e+00 : f32
    %563 = vector.broadcast %cst_136 : f32 to vector<16x128xf32>
    %564 = arith.addf %562, %563 : vector<16x128xf32>
    %cst_137 = arith.constant 5.000000e-01 : f32
    %565 = vector.broadcast %cst_137 : f32 to vector<16x128xf32>
    %566 = arith.mulf %565, %564 : vector<16x128xf32>
    %567 = vector.extract_strided_slice %545 {offsets = [0, 256], sizes = [16, 128], strides = [1, 1]} : vector<16x384xf32> to vector<16x128xf32>
    %568 = vector.extract_strided_slice %546 {offsets = [0, 256], sizes = [16, 128], strides = [1, 1]} : vector<16x384xf32> to vector<16x128xf32>
    %569 = arith.addf %568, %14 : vector<16x128xf32>
    %570 = arith.mulf %556, %569 : vector<16x128xf32>
    %571 = arith.addf %567, %570 : vector<16x128xf32>
    %572 = math.tanh %571 : vector<16x128xf32>
    %cst_138 = arith.constant 1.000000e+00 : f32
    %573 = vector.broadcast %cst_138 : f32 to vector<16x128xf32>
    %574 = arith.subf %573, %566 : vector<16x128xf32>
    %575 = arith.mulf %574, %572 : vector<16x128xf32>
    %576 = arith.mulf %566, %494 : vector<16x128xf32>
    %577 = arith.addf %575, %576 : vector<16x128xf32>
    %578 = vector.shape_cast %543 : vector<16x1xi1> to vector<16x1xi1>
    %579 = vector.broadcast %578 : vector<16x1xi1> to vector<16x128xi1>
    %580 = arith.select %579, %577, %494 : vector<16x128xi1>, vector<16x128xf32>
    %c6_i32_139 = arith.constant 6 : i32
    %581 = arith.addi %0, %c6_i32_139 : i32
    %582 = vector.broadcast %581 : i32 to vector<16x1xi32>
    %583 = arith.cmpi sgt, %4, %582 : vector<16x1xi32>
    %c6 = arith.constant 6 : index
    %c0_140 = arith.constant 0 : index
    %c0_141 = arith.constant 0 : index
    %584 = vector.load %arg3[%c6, %c0_140, %c0_141] : memref<8x16x384xbf16, #tpu.memory_space<vmem>>, vector<1x16x384xbf16>
    %585 = vector.shape_cast %584 : vector<1x16x384xbf16> to vector<16x384xbf16>
    %586 = arith.extf %585 : vector<16x384xbf16> to vector<16x384xf32>
    %587 = vector.extract_strided_slice %539 {offsets = [0, 0], sizes = [16, 384], strides = [1, 1]} : vector<16x1152xf32> to vector<16x384xf32>
    %588 = vector.extract_strided_slice %586 {offsets = [0, 0], sizes = [16, 128], strides = [1, 1]} : vector<16x384xf32> to vector<16x128xf32>
    %589 = vector.extract_strided_slice %587 {offsets = [0, 0], sizes = [16, 128], strides = [1, 1]} : vector<16x384xf32> to vector<16x128xf32>
    %590 = arith.addf %588, %589 : vector<16x128xf32>
    %cst_142 = arith.constant 5.000000e-01 : f32
    %591 = vector.broadcast %cst_142 : f32 to vector<16x128xf32>
    %592 = arith.mulf %591, %590 : vector<16x128xf32>
    %593 = math.tanh %592 : vector<16x128xf32>
    %cst_143 = arith.constant 1.000000e+00 : f32
    %594 = vector.broadcast %cst_143 : f32 to vector<16x128xf32>
    %595 = arith.addf %593, %594 : vector<16x128xf32>
    %cst_144 = arith.constant 5.000000e-01 : f32
    %596 = vector.broadcast %cst_144 : f32 to vector<16x128xf32>
    %597 = arith.mulf %596, %595 : vector<16x128xf32>
    %598 = vector.extract_strided_slice %586 {offsets = [0, 128], sizes = [16, 128], strides = [1, 1]} : vector<16x384xf32> to vector<16x128xf32>
    %599 = vector.extract_strided_slice %587 {offsets = [0, 128], sizes = [16, 128], strides = [1, 1]} : vector<16x384xf32> to vector<16x128xf32>
    %600 = arith.addf %598, %599 : vector<16x128xf32>
    %cst_145 = arith.constant 5.000000e-01 : f32
    %601 = vector.broadcast %cst_145 : f32 to vector<16x128xf32>
    %602 = arith.mulf %601, %600 : vector<16x128xf32>
    %603 = math.tanh %602 : vector<16x128xf32>
    %cst_146 = arith.constant 1.000000e+00 : f32
    %604 = vector.broadcast %cst_146 : f32 to vector<16x128xf32>
    %605 = arith.addf %603, %604 : vector<16x128xf32>
    %cst_147 = arith.constant 5.000000e-01 : f32
    %606 = vector.broadcast %cst_147 : f32 to vector<16x128xf32>
    %607 = arith.mulf %606, %605 : vector<16x128xf32>
    %608 = vector.extract_strided_slice %586 {offsets = [0, 256], sizes = [16, 128], strides = [1, 1]} : vector<16x384xf32> to vector<16x128xf32>
    %609 = vector.extract_strided_slice %587 {offsets = [0, 256], sizes = [16, 128], strides = [1, 1]} : vector<16x384xf32> to vector<16x128xf32>
    %610 = arith.addf %609, %11 : vector<16x128xf32>
    %611 = arith.mulf %597, %610 : vector<16x128xf32>
    %612 = arith.addf %608, %611 : vector<16x128xf32>
    %613 = math.tanh %612 : vector<16x128xf32>
    %cst_148 = arith.constant 1.000000e+00 : f32
    %614 = vector.broadcast %cst_148 : f32 to vector<16x128xf32>
    %615 = arith.subf %614, %607 : vector<16x128xf32>
    %616 = arith.mulf %615, %613 : vector<16x128xf32>
    %617 = arith.mulf %607, %535 : vector<16x128xf32>
    %618 = arith.addf %616, %617 : vector<16x128xf32>
    %619 = vector.shape_cast %583 : vector<16x1xi1> to vector<16x1xi1>
    %620 = vector.broadcast %619 : vector<16x1xi1> to vector<16x128xi1>
    %621 = arith.select %620, %618, %535 : vector<16x128xi1>, vector<16x128xf32>
    %622 = arith.truncf %621 : vector<16x128xf32> to vector<16x128xbf16>
    %623 = arith.truncf %580 : vector<16x128xf32> to vector<16x128xbf16>
    %624 = tpu.concatenate %622, %623 in 1 : vector<16x128xbf16>, vector<16x128xbf16> -> vector<16x256xbf16>
    %cst_149 = arith.constant dense<0.000000e+00> : vector<16x1152xf32>
    %625 = tpu.matmul %624, %5, %cst_149 {dimension_numbers = #tpu.dot_dimension_numbers<[1], [0], [0], [1], [0, 0, 1, 1], [], []>} : vector<16x256xbf16>, vector<256x1152xbf16>, vector<16x1152xf32> -> vector<16x1152xf32>
    %c7_i32 = arith.constant 7 : i32
    %626 = arith.addi %0, %c7_i32 : i32
    %c1_i32_150 = arith.constant 1 : i32
    %627 = arith.subi %626, %c1_i32_150 : i32
    %628 = vector.broadcast %627 : i32 to vector<16x1xi32>
    %629 = arith.cmpi sgt, %4, %628 : vector<16x1xi32>
    %630 = vector.extract_strided_slice %625 {offsets = [0, 384], sizes = [16, 384], strides = [1, 1]} : vector<16x1152xf32> to vector<16x384xf32>
    %631 = arith.addf %630, %8 : vector<16x384xf32>
    %632 = vector.extract_strided_slice %625 {offsets = [0, 768], sizes = [16, 384], strides = [1, 1]} : vector<16x1152xf32> to vector<16x384xf32>
    %633 = vector.extract_strided_slice %631 {offsets = [0, 0], sizes = [16, 128], strides = [1, 1]} : vector<16x384xf32> to vector<16x128xf32>
    %634 = vector.extract_strided_slice %632 {offsets = [0, 0], sizes = [16, 128], strides = [1, 1]} : vector<16x384xf32> to vector<16x128xf32>
    %635 = arith.addf %633, %634 : vector<16x128xf32>
    %cst_151 = arith.constant 5.000000e-01 : f32
    %636 = vector.broadcast %cst_151 : f32 to vector<16x128xf32>
    %637 = arith.mulf %636, %635 : vector<16x128xf32>
    %638 = math.tanh %637 : vector<16x128xf32>
    %cst_152 = arith.constant 1.000000e+00 : f32
    %639 = vector.broadcast %cst_152 : f32 to vector<16x128xf32>
    %640 = arith.addf %638, %639 : vector<16x128xf32>
    %cst_153 = arith.constant 5.000000e-01 : f32
    %641 = vector.broadcast %cst_153 : f32 to vector<16x128xf32>
    %642 = arith.mulf %641, %640 : vector<16x128xf32>
    %643 = vector.extract_strided_slice %631 {offsets = [0, 128], sizes = [16, 128], strides = [1, 1]} : vector<16x384xf32> to vector<16x128xf32>
    %644 = vector.extract_strided_slice %632 {offsets = [0, 128], sizes = [16, 128], strides = [1, 1]} : vector<16x384xf32> to vector<16x128xf32>
    %645 = arith.addf %643, %644 : vector<16x128xf32>
    %cst_154 = arith.constant 5.000000e-01 : f32
    %646 = vector.broadcast %cst_154 : f32 to vector<16x128xf32>
    %647 = arith.mulf %646, %645 : vector<16x128xf32>
    %648 = math.tanh %647 : vector<16x128xf32>
    %cst_155 = arith.constant 1.000000e+00 : f32
    %649 = vector.broadcast %cst_155 : f32 to vector<16x128xf32>
    %650 = arith.addf %648, %649 : vector<16x128xf32>
    %cst_156 = arith.constant 5.000000e-01 : f32
    %651 = vector.broadcast %cst_156 : f32 to vector<16x128xf32>
    %652 = arith.mulf %651, %650 : vector<16x128xf32>
    %653 = vector.extract_strided_slice %631 {offsets = [0, 256], sizes = [16, 128], strides = [1, 1]} : vector<16x384xf32> to vector<16x128xf32>
    %654 = vector.extract_strided_slice %632 {offsets = [0, 256], sizes = [16, 128], strides = [1, 1]} : vector<16x384xf32> to vector<16x128xf32>
    %655 = arith.addf %654, %14 : vector<16x128xf32>
    %656 = arith.mulf %642, %655 : vector<16x128xf32>
    %657 = arith.addf %653, %656 : vector<16x128xf32>
    %658 = math.tanh %657 : vector<16x128xf32>
    %cst_157 = arith.constant 1.000000e+00 : f32
    %659 = vector.broadcast %cst_157 : f32 to vector<16x128xf32>
    %660 = arith.subf %659, %652 : vector<16x128xf32>
    %661 = arith.mulf %660, %658 : vector<16x128xf32>
    %662 = arith.mulf %652, %580 : vector<16x128xf32>
    %663 = arith.addf %661, %662 : vector<16x128xf32>
    %664 = vector.shape_cast %629 : vector<16x1xi1> to vector<16x1xi1>
    %665 = vector.broadcast %664 : vector<16x1xi1> to vector<16x128xi1>
    %666 = arith.select %665, %663, %580 : vector<16x128xi1>, vector<16x128xf32>
    %c7_i32_158 = arith.constant 7 : i32
    %667 = arith.addi %0, %c7_i32_158 : i32
    %668 = vector.broadcast %667 : i32 to vector<16x1xi32>
    %669 = arith.cmpi sgt, %4, %668 : vector<16x1xi32>
    %c7 = arith.constant 7 : index
    %c0_159 = arith.constant 0 : index
    %c0_160 = arith.constant 0 : index
    %670 = vector.load %arg3[%c7, %c0_159, %c0_160] : memref<8x16x384xbf16, #tpu.memory_space<vmem>>, vector<1x16x384xbf16>
    %671 = vector.shape_cast %670 : vector<1x16x384xbf16> to vector<16x384xbf16>
    %672 = arith.extf %671 : vector<16x384xbf16> to vector<16x384xf32>
    %673 = vector.extract_strided_slice %625 {offsets = [0, 0], sizes = [16, 384], strides = [1, 1]} : vector<16x1152xf32> to vector<16x384xf32>
    %674 = vector.extract_strided_slice %672 {offsets = [0, 0], sizes = [16, 128], strides = [1, 1]} : vector<16x384xf32> to vector<16x128xf32>
    %675 = vector.extract_strided_slice %673 {offsets = [0, 0], sizes = [16, 128], strides = [1, 1]} : vector<16x384xf32> to vector<16x128xf32>
    %676 = arith.addf %674, %675 : vector<16x128xf32>
    %cst_161 = arith.constant 5.000000e-01 : f32
    %677 = vector.broadcast %cst_161 : f32 to vector<16x128xf32>
    %678 = arith.mulf %677, %676 : vector<16x128xf32>
    %679 = math.tanh %678 : vector<16x128xf32>
    %cst_162 = arith.constant 1.000000e+00 : f32
    %680 = vector.broadcast %cst_162 : f32 to vector<16x128xf32>
    %681 = arith.addf %679, %680 : vector<16x128xf32>
    %cst_163 = arith.constant 5.000000e-01 : f32
    %682 = vector.broadcast %cst_163 : f32 to vector<16x128xf32>
    %683 = arith.mulf %682, %681 : vector<16x128xf32>
    %684 = vector.extract_strided_slice %672 {offsets = [0, 128], sizes = [16, 128], strides = [1, 1]} : vector<16x384xf32> to vector<16x128xf32>
    %685 = vector.extract_strided_slice %673 {offsets = [0, 128], sizes = [16, 128], strides = [1, 1]} : vector<16x384xf32> to vector<16x128xf32>
    %686 = arith.addf %684, %685 : vector<16x128xf32>
    %cst_164 = arith.constant 5.000000e-01 : f32
    %687 = vector.broadcast %cst_164 : f32 to vector<16x128xf32>
    %688 = arith.mulf %687, %686 : vector<16x128xf32>
    %689 = math.tanh %688 : vector<16x128xf32>
    %cst_165 = arith.constant 1.000000e+00 : f32
    %690 = vector.broadcast %cst_165 : f32 to vector<16x128xf32>
    %691 = arith.addf %689, %690 : vector<16x128xf32>
    %cst_166 = arith.constant 5.000000e-01 : f32
    %692 = vector.broadcast %cst_166 : f32 to vector<16x128xf32>
    %693 = arith.mulf %692, %691 : vector<16x128xf32>
    %694 = vector.extract_strided_slice %672 {offsets = [0, 256], sizes = [16, 128], strides = [1, 1]} : vector<16x384xf32> to vector<16x128xf32>
    %695 = vector.extract_strided_slice %673 {offsets = [0, 256], sizes = [16, 128], strides = [1, 1]} : vector<16x384xf32> to vector<16x128xf32>
    %696 = arith.addf %695, %11 : vector<16x128xf32>
    %697 = arith.mulf %683, %696 : vector<16x128xf32>
    %698 = arith.addf %694, %697 : vector<16x128xf32>
    %699 = math.tanh %698 : vector<16x128xf32>
    %cst_167 = arith.constant 1.000000e+00 : f32
    %700 = vector.broadcast %cst_167 : f32 to vector<16x128xf32>
    %701 = arith.subf %700, %693 : vector<16x128xf32>
    %702 = arith.mulf %701, %699 : vector<16x128xf32>
    %703 = arith.mulf %693, %621 : vector<16x128xf32>
    %704 = arith.addf %702, %703 : vector<16x128xf32>
    %705 = vector.shape_cast %669 : vector<16x1xi1> to vector<16x1xi1>
    %706 = vector.broadcast %705 : vector<16x1xi1> to vector<16x128xi1>
    %707 = arith.select %706, %704, %621 : vector<16x128xi1>, vector<16x128xf32>
    %c0_168 = arith.constant 0 : index
    %c0_169 = arith.constant 0 : index
    %708 = vector.load %arg13[%c0_168, %c0_169] : memref<16x128xf32, #tpu.memory_space<vmem>>, vector<16x128xf32>
    tpu.vector_store %arg13[%c0_168, %c0_169], %707 {strides = array<i32>} : memref<16x128xf32, #tpu.memory_space<vmem>>, vector<16x128xf32>,
    %c0_170 = arith.constant 0 : index
    %c0_171 = arith.constant 0 : index
    %709 = vector.load %arg14[%c0_170, %c0_171] : memref<16x128xf32, #tpu.memory_space<vmem>>, vector<16x128xf32>
    tpu.vector_store %arg14[%c0_170, %c0_171], %666 {strides = array<i32>} : memref<16x128xf32, #tpu.memory_space<vmem>>, vector<16x128xf32>,
    %c0_i32_172 = arith.constant 0 : i32
    %710 = arith.cmpi eq, %arg1, %c0_i32_172 : i32
    %711 = arith.extui %710 : i1 to i32
    %c0_i32_173 = arith.constant 0 : i32
    %712 = arith.cmpi ne, %711, %c0_i32_173 : i32
    scf.if %712 {
      %713 = arith.truncf %707 : vector<16x128xf32> to vector<16x128xbf16>
      %714 = arith.truncf %666 : vector<16x128xf32> to vector<16x128xbf16>
      %715 = tpu.concatenate %713, %714 in 1 : vector<16x128xbf16>, vector<16x128xbf16> -> vector<16x256xbf16>
      %cst_174 = arith.constant dense<0.000000e+00> : vector<16x1152xf32>
      %716 = tpu.matmul %715, %5, %cst_174 {dimension_numbers = #tpu.dot_dimension_numbers<[1], [0], [0], [1], [0, 0, 1, 1], [], []>} : vector<16x256xbf16>, vector<256x1152xbf16>, vector<16x1152xf32> -> vector<16x1152xf32>
      %c8_i32_175 = arith.constant 8 : i32
      %717 = arith.addi %0, %c8_i32_175 : i32
      %c1_i32_176 = arith.constant 1 : i32
      %718 = arith.subi %717, %c1_i32_176 : i32
      %719 = vector.broadcast %718 : i32 to vector<16x1xi32>
      %720 = arith.cmpi sgt, %4, %719 : vector<16x1xi32>
      %721 = vector.extract_strided_slice %716 {offsets = [0, 384], sizes = [16, 384], strides = [1, 1]} : vector<16x1152xf32> to vector<16x384xf32>
      %722 = arith.addf %721, %8 : vector<16x384xf32>
      %723 = vector.extract_strided_slice %716 {offsets = [0, 768], sizes = [16, 384], strides = [1, 1]} : vector<16x1152xf32> to vector<16x384xf32>
      %724 = vector.extract_strided_slice %722 {offsets = [0, 0], sizes = [16, 128], strides = [1, 1]} : vector<16x384xf32> to vector<16x128xf32>
      %725 = vector.extract_strided_slice %723 {offsets = [0, 0], sizes = [16, 128], strides = [1, 1]} : vector<16x384xf32> to vector<16x128xf32>
      %726 = arith.addf %724, %725 : vector<16x128xf32>
      %cst_177 = arith.constant 5.000000e-01 : f32
      %727 = vector.broadcast %cst_177 : f32 to vector<16x128xf32>
      %728 = arith.mulf %727, %726 : vector<16x128xf32>
      %729 = math.tanh %728 : vector<16x128xf32>
      %cst_178 = arith.constant 1.000000e+00 : f32
      %730 = vector.broadcast %cst_178 : f32 to vector<16x128xf32>
      %731 = arith.addf %729, %730 : vector<16x128xf32>
      %cst_179 = arith.constant 5.000000e-01 : f32
      %732 = vector.broadcast %cst_179 : f32 to vector<16x128xf32>
      %733 = arith.mulf %732, %731 : vector<16x128xf32>
      %734 = vector.extract_strided_slice %722 {offsets = [0, 128], sizes = [16, 128], strides = [1, 1]} : vector<16x384xf32> to vector<16x128xf32>
      %735 = vector.extract_strided_slice %723 {offsets = [0, 128], sizes = [16, 128], strides = [1, 1]} : vector<16x384xf32> to vector<16x128xf32>
      %736 = arith.addf %734, %735 : vector<16x128xf32>
      %cst_180 = arith.constant 5.000000e-01 : f32
      %737 = vector.broadcast %cst_180 : f32 to vector<16x128xf32>
      %738 = arith.mulf %737, %736 : vector<16x128xf32>
      %739 = math.tanh %738 : vector<16x128xf32>
      %cst_181 = arith.constant 1.000000e+00 : f32
      %740 = vector.broadcast %cst_181 : f32 to vector<16x128xf32>
      %741 = arith.addf %739, %740 : vector<16x128xf32>
      %cst_182 = arith.constant 5.000000e-01 : f32
      %742 = vector.broadcast %cst_182 : f32 to vector<16x128xf32>
      %743 = arith.mulf %742, %741 : vector<16x128xf32>
      %744 = vector.extract_strided_slice %722 {offsets = [0, 256], sizes = [16, 128], strides = [1, 1]} : vector<16x384xf32> to vector<16x128xf32>
      %745 = vector.extract_strided_slice %723 {offsets = [0, 256], sizes = [16, 128], strides = [1, 1]} : vector<16x384xf32> to vector<16x128xf32>
      %746 = arith.addf %745, %14 : vector<16x128xf32>
      %747 = arith.mulf %733, %746 : vector<16x128xf32>
      %748 = arith.addf %744, %747 : vector<16x128xf32>
      %749 = math.tanh %748 : vector<16x128xf32>
      %cst_183 = arith.constant 1.000000e+00 : f32
      %750 = vector.broadcast %cst_183 : f32 to vector<16x128xf32>
      %751 = arith.subf %750, %743 : vector<16x128xf32>
      %752 = arith.mulf %751, %749 : vector<16x128xf32>
      %753 = arith.mulf %743, %666 : vector<16x128xf32>
      %754 = arith.addf %752, %753 : vector<16x128xf32>
      %755 = vector.shape_cast %720 : vector<16x1xi1> to vector<16x1xi1>
      %756 = vector.broadcast %755 : vector<16x1xi1> to vector<16x128xi1>
      %757 = arith.select %756, %754, %666 : vector<16x128xi1>, vector<16x128xf32>
      %758 = arith.truncf %757 : vector<16x128xf32> to vector<16x128xbf16>
      %c0_184 = arith.constant 0 : index
      %c0_185 = arith.constant 0 : index
      %759 = vector.load %arg8[%c0_184, %c0_185] : memref<128x256xbf16, #tpu.memory_space<vmem>>, vector<128x256xbf16>
      %cst_186 = arith.constant dense<0.000000e+00> : vector<16x256xf32>
      %760 = tpu.matmul %758, %759, %cst_186 {dimension_numbers = #tpu.dot_dimension_numbers<[1], [0], [0], [1], [0, 0, 1, 1], [], []>} : vector<16x128xbf16>, vector<128x256xbf16>, vector<16x256xf32> -> vector<16x256xf32>
      %c0_187 = arith.constant 0 : index
      %c0_188 = arith.constant 0 : index
      %761 = vector.load %arg9[%c0_187, %c0_188] : memref<1x256xf32, #tpu.memory_space<vmem>>, vector<1x256xf32>
      %762 = vector.broadcast %761 : vector<1x256xf32> to vector<16x256xf32>
      %763 = arith.addf %760, %762 : vector<16x256xf32>
      %cst_189 = arith.constant 0.000000e+00 : f32
      %764 = vector.broadcast %cst_189 : f32 to vector<16x256xf32>
      %765 = arith.maximumf %763, %764 : vector<16x256xf32>
      %766 = arith.truncf %765 : vector<16x256xf32> to vector<16x256xbf16>
      %c0_190 = arith.constant 0 : index
      %c0_191 = arith.constant 0 : index
      %767 = vector.load %arg10[%c0_190, %c0_191] : memref<256x128xbf16, #tpu.memory_space<vmem>>, vector<256x128xbf16>
      %cst_192 = arith.constant dense<0.000000e+00> : vector<16x128xf32>
      %768 = tpu.matmul %766, %767, %cst_192 {dimension_numbers = #tpu.dot_dimension_numbers<[1], [0], [0], [1], [0, 0, 1, 1], [], []>} : vector<16x256xbf16>, vector<256x128xbf16>, vector<16x128xf32> -> vector<16x128xf32>
      %c0_193 = arith.constant 0 : index
      %c0_194 = arith.constant 0 : index
      %769 = vector.load %arg11[%c0_193, %c0_194] : memref<1x128xf32, #tpu.memory_space<vmem>>, vector<1x128xf32>
      %770 = vector.broadcast %769 : vector<1x128xf32> to vector<16x128xf32>
      %771 = arith.addf %768, %770 : vector<16x128xf32>
      %c0_195 = arith.constant 0 : index
      %c0_196 = arith.constant 0 : index
      %772 = vector.load %arg12[%c0_195, %c0_196] : memref<16x128xf32, #tpu.memory_space<vmem>>, vector<16x128xf32>
      tpu.vector_store %arg12[%c0_195, %c0_196], %771 {strides = array<i32>} : memref<16x128xf32, #tpu.memory_space<vmem>>, vector<16x128xf32>,
    } else {
    }
    return
  }
  func.func @transform_0(%arg0: i32, %arg1: i32) -> (i32, i32) {
    %c0_i32 = arith.constant 0 : i32
    %c0_i32_0 = arith.constant 0 : i32
    return %arg0, %c0_i32 : i32, i32
  }
  func.func @transform_1(%arg0: i32, %arg1: i32) -> (i32, i32, i32) {
    %c0_i32 = arith.constant 0 : i32
    %c0_i32_0 = arith.constant 0 : i32
    return %arg1, %arg0, %c0_i32 : i32, i32, i32
  }
  func.func @transform_2(%arg0: i32, %arg1: i32) -> (i32, i32) {
    %c0_i32 = arith.constant 0 : i32
    %c0_i32_0 = arith.constant 0 : i32
    %c0_i32_1 = arith.constant 0 : i32
    return %c0_i32, %c0_i32_0 : i32, i32
  }
  func.func @transform_3(%arg0: i32, %arg1: i32) -> (i32, i32) {
    %c0_i32 = arith.constant 0 : i32
    %c0_i32_0 = arith.constant 0 : i32
    %c0_i32_1 = arith.constant 0 : i32
    return %c0_i32, %c0_i32_0 : i32, i32
  }
  func.func @transform_4(%arg0: i32, %arg1: i32) -> (i32, i32) {
    %c0_i32 = arith.constant 0 : i32
    %c0_i32_0 = arith.constant 0 : i32
    %c0_i32_1 = arith.constant 0 : i32
    return %c0_i32, %c0_i32_0 : i32, i32
  }
  func.func @transform_5(%arg0: i32, %arg1: i32) -> (i32, i32) {
    %c0_i32 = arith.constant 0 : i32
    %c0_i32_0 = arith.constant 0 : i32
    %c0_i32_1 = arith.constant 0 : i32
    return %c0_i32, %c0_i32_0 : i32, i32
  }
  func.func @transform_6(%arg0: i32, %arg1: i32) -> (i32, i32) {
    %c0_i32 = arith.constant 0 : i32
    %c0_i32_0 = arith.constant 0 : i32
    %c0_i32_1 = arith.constant 0 : i32
    return %c0_i32, %c0_i32_0 : i32, i32
  }
  func.func @transform_7(%arg0: i32, %arg1: i32) -> (i32, i32) {
    %c0_i32 = arith.constant 0 : i32
    %c0_i32_0 = arith.constant 0 : i32
    %c0_i32_1 = arith.constant 0 : i32
    return %c0_i32, %c0_i32_0 : i32, i32
  }
  func.func @transform_8(%arg0: i32, %arg1: i32) -> (i32, i32) {
    %c0_i32 = arith.constant 0 : i32
    %c0_i32_0 = arith.constant 0 : i32
    %c0_i32_1 = arith.constant 0 : i32
    return %c0_i32, %c0_i32_0 : i32, i32
  }
  func.func @transform_9(%arg0: i32, %arg1: i32) -> (i32, i32) {
    %c0_i32 = arith.constant 0 : i32
    %c0_i32_0 = arith.constant 0 : i32
    %c0_i32_1 = arith.constant 0 : i32
    return %c0_i32, %c0_i32_0 : i32, i32
  }
  func.func @transform_10(%arg0: i32, %arg1: i32) -> (i32, i32) {
    %c0_i32 = arith.constant 0 : i32
    %c0_i32_0 = arith.constant 0 : i32
    return %arg0, %c0_i32 : i32, i32
  }
}

</mosaic_0001>

<llo_original>
// kernel: rnn_model_forward.2
$region0: #{rnn_model_forward.2}
  #allocation0 [shape = 'u32[]', space=smem, size = 0x4, offset = 0x4, fixed_abs, tag = 'smem constant byte address 0x4 - core index']
  #allocation1 [shape = 'u32[72,128]{1,0:T(1,128)}', space=vmem, size = 0x9000, scoped, tag = 'internal scratch']
  %s0 = inlined_call_operand.vmem [shape: bf16[128,128], index: 0, kind: input, shape index: {}]
  %s1 = inlined_call_operand.vmem [shape: bf16[128,384], index: 1, kind: input, shape index: {}]
  %s2 = inlined_call_operand.vmem [shape: f32[1,384], index: 2, kind: input, shape index: {}]
  %s3 = inlined_call_operand.vmem [shape: bf16[128,384], index: 3, kind: output, shape index: {}]
  %s4 = sld [smem:[#allocation0]]
  $region22: #{rnn_model_forward.2} parent=0
    _
  %s6 = ssub.s32 1, %s4
  %s7 = scalar_select 0, %s6, %s4
  // Predicated region
  $region2: #{rnn_model_forward.2} parent=0 // pred_check
    _
  $region3: #{rnn_model_forward.2} parent=0 // pred_check_branch
    %9 = sbr.rel (0) target = $region5
  $region4: #{rnn_model_forward.2} parent=0 // pred_region
    _
  $region5: #{rnn_model_forward.2} parent=0 // pred_fallthru
    _
  // Predicated region
  $region6: #{rnn_model_forward.2} parent=0 // pred_check
    _
  $region7: #{rnn_model_forward.2} parent=0 // pred_check_branch
    %11 = sbr.rel (0) target = $region9
  $region8: #{rnn_model_forward.2} parent=0 // pred_region
    _
  $region9: #{rnn_model_forward.2} parent=0 // pred_fallthru
    _
  // Predicated region
  $region10: #{rnn_model_forward.2} parent=0 // pred_check
    _
  $region11: #{rnn_model_forward.2} parent=0 // pred_check_branch
    %13 = sbr.rel (0) target = $region13
  $region12: #{rnn_model_forward.2} parent=0 // pred_region
    _
  $region13: #{rnn_model_forward.2} parent=0 // pred_fallthru
    _
  %v14 = vld [vmem:[%s0] sm:$0xf]
  %v15 = vld [vmem:[%s0 + $0x4] sm:$0xf]
  %v16 = vld [vmem:[%s0 + $0x8] sm:$0xf]
  %v17 = vld [vmem:[%s0 + $0xc] sm:$0xf]
  %v18 = vld [vmem:[%s0 + $0x10] sm:$0xf]
  %v19 = vld [vmem:[%s0 + $0x14] sm:$0xf]
  %v20 = vld [vmem:[%s0 + $0x18] sm:$0xf]
  %v21 = vld [vmem:[%s0 + $0x1c] sm:$0xf]
  %v22 = vld [vmem:[%s0 + $0x20] sm:$0xf]
  %v23 = vld [vmem:[%s0 + $0x24] sm:$0xf]
  %v24 = vld [vmem:[%s0 + $0x28] sm:$0xf]
  %v25 = vld [vmem:[%s0 + $0x2c] sm:$0xf]
  %v26 = vld [vmem:[%s0 + $0x30] sm:$0xf]
  %v27 = vld [vmem:[%s0 + $0x34] sm:$0xf]
  %v28 = vld [vmem:[%s0 + $0x38] sm:$0xf]
  %v29 = vld [vmem:[%s0 + $0x3c] sm:$0xf]
  %v30 = vld [vmem:[%s1] sm:$0xff]
  %v31 = vld [vmem:[%s1 + $0x8] sm:$0xf]
  %v32 = vld [vmem:[%s1 + $0xc] sm:$0xff]
  %v33 = vld [vmem:[%s1 + $0x14] sm:$0xf]
  %v34 = vld [vmem:[%s1 + $0x18] sm:$0xff]
  %v35 = vld [vmem:[%s1 + $0x20] sm:$0xf]
  %v36 = vld [vmem:[%s1 + $0x24] sm:$0xff]
  %v37 = vld [vmem:[%s1 + $0x2c] sm:$0xf]
  %v38 = vld [vmem:[%s1 + $0x30] sm:$0xff]
  %v39 = vld [vmem:[%s1 + $0x38] sm:$0xf]
  %v40 = vld [vmem:[%s1 + $0x3c] sm:$0xff]
  %v41 = vld [vmem:[%s1 + $0x44] sm:$0xf]
  %v42 = vld [vmem:[%s1 + $0x48] sm:$0xff]
  %v43 = vld [vmem:[%s1 + $0x50] sm:$0xf]
  %v44 = vld [vmem:[%s1 + $0x54] sm:$0xff]
  %v45 = vld [vmem:[%s1 + $0x5c] sm:$0xf]
  %v46 = vld [vmem:[%s1 + $0x60] sm:$0xff]
  %v47 = vld [vmem:[%s1 + $0x68] sm:$0xf]
  %v48 = vld [vmem:[%s1 + $0x6c] sm:$0xff]
  %v49 = vld [vmem:[%s1 + $0x74] sm:$0xf]
  %v50 = vld [vmem:[%s1 + $0x78] sm:$0xff]
  %v51 = vld [vmem:[%s1 + $0x80] sm:$0xf]
  %v52 = vld [vmem:[%s1 + $0x84] sm:$0xff]
  %v53 = vld [vmem:[%s1 + $0x8c] sm:$0xf]
  %v54 = vld [vmem:[%s1 + $0x90] sm:$0xff]
  %v55 = vld [vmem:[%s1 + $0x98] sm:$0xf]
  %v56 = vld [vmem:[%s1 + $0x9c] sm:$0xff]
  %v57 = vld [vmem:[%s1 + $0xa4] sm:$0xf]
  %v58 = vld [vmem:[%s1 + $0xa8] sm:$0xff]
  %v59 = vld [vmem:[%s1 + $0xb0] sm:$0xf]
  %v60 = vld [vmem:[%s1 + $0xb4] sm:$0xff]
  %v61 = vld [vmem:[%s1 + $0xbc] sm:$0xf]
  %v62 = vld [vmem:[%s2] sm:$0x7]
  %v64 = vperm.slane %v62, 0
  %v65 = vperm.slane %v62, 1
  %v66 = vperm.slane %v62, 2
  %v86 = vunpack.c.l.b16 %v14
  %v87 = vunpack.c.l.b16 %v15
  %v88 = vunpack.c.l.b16 %v16
  %v89 = vunpack.c.l.b16 %v17
  %v90 = vunpack.c.l.b16 %v18
  %v91 = vunpack.c.l.b16 %v19
  %v92 = vunpack.c.l.b16 %v20
  %v93 = vunpack.c.l.b16 %v21
  %v94 = vunpack.c.l.b16 %v22
  %v95 = vunpack.c.l.b16 %v23
  %v96 = vunpack.c.l.b16 %v24
  %v97 = vunpack.c.l.b16 %v25
  %v98 = vunpack.c.l.b16 %v26
  %v99 = vunpack.c.l.b16 %v27
  %v100 = vunpack.c.l.b16 %v28
  %v101 = vunpack.c.l.b16 %v29
  %v102 = vpack.c.b16 %v87, %v86
  %v103 = vpack.c.b16 %v89, %v88
  %v104 = vpack.c.b16 %v91, %v90
  %v105 = vpack.c.b16 %v93, %v92
  %v106 = vpack.c.b16 %v95, %v94
  %v107 = vpack.c.b16 %v97, %v96
  %v108 = vpack.c.b16 %v99, %v98
  %v109 = vpack.c.b16 %v101, %v100
  %v150 = vunpack.c.l.b16 %v30
  %v151 = vunpack.c.h.b16 %v30
  %v152 = vunpack.c.l.b16 %v31
  %v153 = vunpack.c.l.b16 %v32
  %v154 = vunpack.c.h.b16 %v32
  %v155 = vunpack.c.l.b16 %v33
  %v156 = vunpack.c.l.b16 %v34
  %v157 = vunpack.c.h.b16 %v34
  %v158 = vunpack.c.l.b16 %v35
  %v159 = vunpack.c.l.b16 %v36
  %v160 = vunpack.c.h.b16 %v36
  %v161 = vunpack.c.l.b16 %v37
  %v162 = vunpack.c.l.b16 %v38
  %v163 = vunpack.c.h.b16 %v38
  %v164 = vunpack.c.l.b16 %v39
  %v165 = vunpack.c.l.b16 %v40
  %v166 = vunpack.c.h.b16 %v40
  %v167 = vunpack.c.l.b16 %v41
  %v168 = vunpack.c.l.b16 %v42
  %v169 = vunpack.c.h.b16 %v42
  %v170 = vunpack.c.l.b16 %v43
  %v171 = vunpack.c.l.b16 %v44
  %v172 = vunpack.c.h.b16 %v44
  %v173 = vunpack.c.l.b16 %v45
  %v174 = vunpack.c.l.b16 %v46
  %v175 = vunpack.c.h.b16 %v46
  %v176 = vunpack.c.l.b16 %v47
  %v177 = vunpack.c.l.b16 %v48
  %v178 = vunpack.c.h.b16 %v48
  %v179 = vunpack.c.l.b16 %v49
  %v180 = vunpack.c.l.b16 %v50
  %v181 = vunpack.c.h.b16 %v50
  %v182 = vunpack.c.l.b16 %v51
  %v183 = vunpack.c.l.b16 %v52
  %v184 = vunpack.c.h.b16 %v52
  %v185 = vunpack.c.l.b16 %v53
  %v186 = vunpack.c.l.b16 %v54
  %v187 = vunpack.c.h.b16 %v54
  %v188 = vunpack.c.l.b16 %v55
  %v189 = vunpack.c.l.b16 %v56
  %v190 = vunpack.c.h.b16 %v56
  %v191 = vunpack.c.l.b16 %v57
  %v192 = vunpack.c.l.b16 %v58
  %v193 = vunpack.c.h.b16 %v58
  %v194 = vunpack.c.l.b16 %v59
  %v195 = vunpack.c.l.b16 %v60
  %v196 = vunpack.c.h.b16 %v60
  %v197 = vunpack.c.l.b16 %v61
  %v198 = vpack.c.b16 %v153, %v150
  %v199 = vpack.c.b16 %v154, %v151
  %v200 = vpack.c.b16 %v155, %v152
  %v201 = vpack.c.b16 %v159, %v156
  %v202 = vpack.c.b16 %v160, %v157
  %v203 = vpack.c.b16 %v161, %v158
  %v204 = vpack.c.b16 %v165, %v162
  %v205 = vpack.c.b16 %v166, %v163
  %v206 = vpack.c.b16 %v167, %v164
  %v207 = vpack.c.b16 %v171, %v168
  %v208 = vpack.c.b16 %v172, %v169
  %v209 = vpack.c.b16 %v173, %v170
  %v210 = vpack.c.b16 %v177, %v174
  %v211 = vpack.c.b16 %v178, %v175
  %v212 = vpack.c.b16 %v179, %v176
  %v213 = vpack.c.b16 %v183, %v180
  %v214 = vpack.c.b16 %v184, %v181
  %v215 = vpack.c.b16 %v185, %v182
  %v216 = vpack.c.b16 %v189, %v186
  %v217 = vpack.c.b16 %v190, %v187
  %v218 = vpack.c.b16 %v191, %v188
  %v219 = vpack.c.b16 %v195, %v192
  %v220 = vpack.c.b16 %v196, %v193
  %v221 = vpack.c.b16 %v197, %v194
  %246 = vmatpush.bf16.msra.mxu0 %v219
  %247 = vmatpush.bf16.msra.mxu0 %v216
  %248 = vmatpush.bf16.msra.mxu0 %v213
  %249 = vmatpush.bf16.msra.mxu0 %v210
  %250 = vmatpush.bf16.msra.mxu0 %v207
  %251 = vmatpush.bf16.msra.mxu0 %v204
  %252 = vmatpush.bf16.msra.mxu0 %v201
  %253 = vmatpush.bf16.msra.mxu0 %v198
  %254 = vmatmul.bf16.gmra.mxu0 %v102
  %v255 = vpop.f32.mrf.mxu0
  %v256 = vadd.f32 %v64, %v255
  %v257 = vpop.f32.mrf.mxu0
  %v258 = vadd.f32 %v64, %v257
  %259 = vmatmul.bf16.gmra.mxu0 %v103
  %v260 = vpop.f32.mrf.mxu0
  %v261 = vadd.f32 %v64, %v260
  %v262 = vpop.f32.mrf.mxu0
  %v263 = vadd.f32 %v64, %v262
  %264 = vmatmul.bf16.gmra.mxu0 %v104
  %v265 = vpop.f32.mrf.mxu0
  %v266 = vadd.f32 %v64, %v265
  %v267 = vpop.f32.mrf.mxu0
  %v268 = vadd.f32 %v64, %v267
  %269 = vmatmul.bf16.gmra.mxu0 %v105
  %v270 = vpop.f32.mrf.mxu0
  %v271 = vadd.f32 %v64, %v270
  %v272 = vpop.f32.mrf.mxu0
  %v273 = vadd.f32 %v64, %v272
  %274 = vmatmul.bf16.gmra.mxu0 %v106
  %v275 = vpop.f32.mrf.mxu0
  %v276 = vadd.f32 %v64, %v275
  %v277 = vpop.f32.mrf.mxu0
  %v278 = vadd.f32 %v64, %v277
  %279 = vmatmul.bf16.gmra.mxu0 %v107
  %v280 = vpop.f32.mrf.mxu0
  %v281 = vadd.f32 %v64, %v280
  %v282 = vpop.f32.mrf.mxu0
  %v283 = vadd.f32 %v64, %v282
  %284 = vmatmul.bf16.gmra.mxu0 %v108
  %v285 = vpop.f32.mrf.mxu0
  %v286 = vadd.f32 %v64, %v285
  %v287 = vpop.f32.mrf.mxu0
  %v288 = vadd.f32 %v64, %v287
  %289 = vmatmul.bf16.gmra.mxu0 %v109
  %v290 = vpop.f32.mrf.mxu0
  %v291 = vadd.f32 %v64, %v290
  %v292 = vpop.f32.mrf.mxu0
  %v293 = vadd.f32 %v64, %v292
  %294 = vdwg.mxu0
  %295 = vmatpush.bf16.msra.mxu0 %v220
  %296 = vmatpush.bf16.msra.mxu0 %v217
  %297 = vmatpush.bf16.msra.mxu0 %v214
  %298 = vmatpush.bf16.msra.mxu0 %v211
  %299 = vmatpush.bf16.msra.mxu0 %v208
  %300 = vmatpush.bf16.msra.mxu0 %v205
  %301 = vmatpush.bf16.msra.mxu0 %v202
  %302 = vmatpush.bf16.msra.mxu0 %v199
  %303 = vmatmul.bf16.gmra.mxu0 %v102
  %v304 = vpop.f32.mrf.mxu0
  %v305 = vadd.f32 %v65, %v304
  %v306 = vpop.f32.mrf.mxu0
  %v307 = vadd.f32 %v65, %v306
  %308 = vmatmul.bf16.gmra.mxu0 %v103
  %v309 = vpop.f32.mrf.mxu0
  %v310 = vadd.f32 %v65, %v309
  %v311 = vpop.f32.mrf.mxu0
  %v312 = vadd.f32 %v65, %v311
  %313 = vmatmul.bf16.gmra.mxu0 %v104
  %v314 = vpop.f32.mrf.mxu0
  %v315 = vadd.f32 %v65, %v314
  %v316 = vpop.f32.mrf.mxu0
  %v317 = vadd.f32 %v65, %v316
  %318 = vmatmul.bf16.gmra.mxu0 %v105
  %v319 = vpop.f32.mrf.mxu0
  %v320 = vadd.f32 %v65, %v319
  %v321 = vpop.f32.mrf.mxu0
  %v322 = vadd.f32 %v65, %v321
  %323 = vmatmul.bf16.gmra.mxu0 %v106
  %v324 = vpop.f32.mrf.mxu0
  %v325 = vadd.f32 %v65, %v324
  %v326 = vpop.f32.mrf.mxu0
  %v327 = vadd.f32 %v65, %v326
  %328 = vmatmul.bf16.gmra.mxu0 %v107
  %v329 = vpop.f32.mrf.mxu0
  %v330 = vadd.f32 %v65, %v329
  %v331 = vpop.f32.mrf.mxu0
  %v332 = vadd.f32 %v65, %v331
  %333 = vmatmul.bf16.gmra.mxu0 %v108
  %v334 = vpop.f32.mrf.mxu0
  %v335 = vadd.f32 %v65, %v334
  %v336 = vpop.f32.mrf.mxu0
  %v337 = vadd.f32 %v65, %v336
  %338 = vmatmul.bf16.gmra.mxu0 %v109
  %v339 = vpop.f32.mrf.mxu0
  %v340 = vadd.f32 %v65, %v339
  %v341 = vpop.f32.mrf.mxu0
  %v342 = vadd.f32 %v65, %v341
  %343 = vdwg.mxu0
  %344 = vmatpush.bf16.msra.mxu0 %v221
  %345 = vmatpush.bf16.msra.mxu0 %v218
  %346 = vmatpush.bf16.msra.mxu0 %v215
  %347 = vmatpush.bf16.msra.mxu0 %v212
  %348 = vmatpush.bf16.msra.mxu0 %v209
  %349 = vmatpush.bf16.msra.mxu0 %v206
  %350 = vmatpush.bf16.msra.mxu0 %v203
  %351 = vmatpush.bf16.msra.mxu0 %v200
  %352 = vmatmul.bf16.gmra.mxu0 %v102
  %v353 = vpop.f32.mrf.mxu0
  %v354 = vadd.f32 %v66, %v353
  %v355 = vpop.f32.mrf.mxu0
  %v356 = vadd.f32 %v66, %v355
  %357 = vmatmul.bf16.gmra.mxu0 %v103
  %v358 = vpop.f32.mrf.mxu0
  %v359 = vadd.f32 %v66, %v358
  %v360 = vpop.f32.mrf.mxu0
  %v361 = vadd.f32 %v66, %v360
  %362 = vmatmul.bf16.gmra.mxu0 %v104
  %v363 = vpop.f32.mrf.mxu0
  %v364 = vadd.f32 %v66, %v363
  %v365 = vpop.f32.mrf.mxu0
  %v366 = vadd.f32 %v66, %v365
  %367 = vmatmul.bf16.gmra.mxu0 %v105
  %v368 = vpop.f32.mrf.mxu0
  %v369 = vadd.f32 %v66, %v368
  %v370 = vpop.f32.mrf.mxu0
  %v371 = vadd.f32 %v66, %v370
  %372 = vmatmul.bf16.gmra.mxu0 %v106
  %v373 = vpop.f32.mrf.mxu0
  %v374 = vadd.f32 %v66, %v373
  %v375 = vpop.f32.mrf.mxu0
  %v376 = vadd.f32 %v66, %v375
  %377 = vmatmul.bf16.gmra.mxu0 %v107
  %v378 = vpop.f32.mrf.mxu0
  %v379 = vadd.f32 %v66, %v378
  %v380 = vpop.f32.mrf.mxu0
  %v381 = vadd.f32 %v66, %v380
  %382 = vmatmul.bf16.gmra.mxu0 %v108
  %v383 = vpop.f32.mrf.mxu0
  %v384 = vadd.f32 %v66, %v383
  %v385 = vpop.f32.mrf.mxu0
  %v386 = vadd.f32 %v66, %v385
  %387 = vmatmul.bf16.gmra.mxu0 %v109
  %v388 = vpop.f32.mrf.mxu0
  %v389 = vadd.f32 %v66, %v388
  %v390 = vpop.f32.mrf.mxu0
  %v391 = vadd.f32 %v66, %v390
  %392 = vdwg.mxu0
  %v393 = vpack.c.bf16 %v305, %v256
  %v394 = vpack.c.bf16 %v354, %v354
  %v395 = vpack.c.bf16 %v307, %v258
  %v396 = vpack.c.bf16 %v356, %v356
  %v397 = vpack.c.bf16 %v310, %v261
  %v398 = vpack.c.bf16 %v359, %v359
  %v399 = vpack.c.bf16 %v312, %v263
  %v400 = vpack.c.bf16 %v361, %v361
  %v401 = vpack.c.bf16 %v315, %v266
  %v402 = vpack.c.bf16 %v364, %v364
  %v403 = vpack.c.bf16 %v317, %v268
  %v404 = vpack.c.bf16 %v366, %v366
  %v405 = vpack.c.bf16 %v320, %v271
  %v406 = vpack.c.bf16 %v369, %v369
  %v407 = vpack.c.bf16 %v322, %v273
  %v408 = vpack.c.bf16 %v371, %v371
  %v409 = vpack.c.bf16 %v325, %v276
  %v410 = vpack.c.bf16 %v374, %v374
  %v411 = vpack.c.bf16 %v327, %v278
  %v412 = vpack.c.bf16 %v376, %v376
  %v413 = vpack.c.bf16 %v330, %v281
  %v414 = vpack.c.bf16 %v379, %v379
  %v415 = vpack.c.bf16 %v332, %v283
  %v416 = vpack.c.bf16 %v381, %v381
  %v417 = vpack.c.bf16 %v335, %v286
  %v418 = vpack.c.bf16 %v384, %v384
  %v419 = vpack.c.bf16 %v337, %v288
  %v420 = vpack.c.bf16 %v386, %v386
  %v421 = vpack.c.bf16 %v340, %v291
  %v422 = vpack.c.bf16 %v389, %v389
  %v423 = vpack.c.bf16 %v342, %v293
  %v424 = vpack.c.bf16 %v391, %v391
  %425 = vst [vmem:[%s3] sm:$0xff] %v393
  %426 = vst [vmem:[%s3 + $0x8] sm:$0xf] %v394
  %427 = vst [vmem:[%s3 + $0xc] sm:$0xff] %v395
  %428 = vst [vmem:[%s3 + $0x14] sm:$0xf] %v396
  %429 = vst [vmem:[%s3 + $0x18] sm:$0xff] %v397
  %430 = vst [vmem:[%s3 + $0x20] sm:$0xf] %v398
  %431 = vst [vmem:[%s3 + $0x24] sm:$0xff] %v399
  %432 = vst [vmem:[%s3 + $0x2c] sm:$0xf] %v400
  %433 = vst [vmem:[%s3 + $0x30] sm:$0xff] %v401
  %434 = vst [vmem:[%s3 + $0x38] sm:$0xf] %v402
  %435 = vst [vmem:[%s3 + $0x3c] sm:$0xff] %v403
  %436 = vst [vmem:[%s3 + $0x44] sm:$0xf] %v404
  %437 = vst [vmem:[%s3 + $0x48] sm:$0xff] %v405
  %438 = vst [vmem:[%s3 + $0x50] sm:$0xf] %v406
  %439 = vst [vmem:[%s3 + $0x54] sm:$0xff] %v407
  %440 = vst [vmem:[%s3 + $0x5c] sm:$0xf] %v408
  %441 = vst [vmem:[%s3 + $0x60] sm:$0xff] %v409
  %442 = vst [vmem:[%s3 + $0x68] sm:$0xf] %v410
  %443 = vst [vmem:[%s3 + $0x6c] sm:$0xff] %v411
  %444 = vst [vmem:[%s3 + $0x74] sm:$0xf] %v412
  %445 = vst [vmem:[%s3 + $0x78] sm:$0xff] %v413
  %446 = vst [vmem:[%s3 + $0x80] sm:$0xf] %v414
  %447 = vst [vmem:[%s3 + $0x84] sm:$0xff] %v415
  %448 = vst [vmem:[%s3 + $0x8c] sm:$0xf] %v416
  %449 = vst [vmem:[%s3 + $0x90] sm:$0xff] %v417
  %450 = vst [vmem:[%s3 + $0x98] sm:$0xf] %v418
  %451 = vst [vmem:[%s3 + $0x9c] sm:$0xff] %v419
  %452 = vst [vmem:[%s3 + $0xa4] sm:$0xf] %v420
  %453 = vst [vmem:[%s3 + $0xa8] sm:$0xff] %v421
  %454 = vst [vmem:[%s3 + $0xb0] sm:$0xf] %v422
  %455 = vst [vmem:[%s3 + $0xb4] sm:$0xff] %v423
  %456 = vst [vmem:[%s3 + $0xbc] sm:$0xf] %v424
  // Predicated region
  $region14: #{rnn_model_forward.2} parent=0 // pred_check
    _
  $region15: #{rnn_model_forward.2} parent=0 // pred_check_branch
    %458 = sbr.rel (0) target = $region17
  $region16: #{rnn_model_forward.2} parent=0 // pred_region
    _
  $region17: #{rnn_model_forward.2} parent=0 // pred_fallthru
    _
  // Predicated region
  $region18: #{rnn_model_forward.2} parent=0 // pred_check
    _
  $region19: #{rnn_model_forward.2} parent=0 // pred_check_branch
    %460 = sbr.rel (0) target = $region21
  $region20: #{rnn_model_forward.2} parent=0 // pred_region
    _
  $region21: #{rnn_model_forward.2} parent=0 // pred_fallthru
    _

// kernel: rnn_model_forward.3
$region0: #{rnn_model_forward.3}
  #allocation0 [shape = 'u32[]', space=smem, size = 0x4, offset = 0x4, fixed_abs, tag = 'smem constant byte address 0x4 - core index']
  #allocation1 [shape = 'u32[72,128]{1,0:T(1,128)}', space=vmem, size = 0x9000, scoped, tag = 'internal scratch']
  #allocation2 [shape = 'f32[16,128]{1,0:T(8,128)}', space=vmem, size = 0x2000, scoped, tag = 'scratch operand']
  #allocation3 [shape = 'f32[16,128]{1,0:T(8,128)}', space=vmem, size = 0x2000, scoped, tag = 'scratch operand']
  %s0 = inlined_call_operand.vmem [shape: s32[16,1], index: 0, kind: input, shape index: {}]
  %s1 = inlined_call_operand.vmem [shape: bf16[8,16,384], index: 1, kind: input, shape index: {}]
  %s2 = inlined_call_operand.hbm [shape: bf16[256,1152], index: 2, kind: input, shape index: {}]
  %s3 = inlined_call_operand.vmem [shape: f32[1,128], index: 3, kind: input, shape index: {}]
  %s4 = inlined_call_operand.vmem [shape: f32[1,384], index: 4, kind: input, shape index: {}]
  %s5 = inlined_call_operand.vmem [shape: f32[1,128], index: 5, kind: input, shape index: {}]
  %s6 = inlined_call_operand.vmem [shape: bf16[128,256], index: 6, kind: input, shape index: {}]
  %s7 = inlined_call_operand.vmem [shape: f32[1,256], index: 7, kind: input, shape index: {}]
  %s8 = inlined_call_operand.vmem [shape: bf16[256,128], index: 8, kind: input, shape index: {}]
  %s9 = inlined_call_operand.vmem [shape: f32[1,128], index: 9, kind: input, shape index: {}]
  %s10 = inlined_call_operand.vmem [shape: f32[16,128], index: 10, kind: output, shape index: {}]
  %s11 = sld [smem:[#allocation0]]
  $region62: #{rnn_model_forward.3} parent=0
    _
  %s13 = ssub.s32 1, %s11
  %s14 = scalar_select 0, %s13, %s11
  $region1: #{rnn_model_forward.3} parent=0
    #allocation4 [shape = 'u8[589824]{0}', space=vmem, size = 0x90000, scoped, tag = 'input window, operand 2, single buffered']
    #allocation5 [shape = 's32[1]{0}', space=sflag, size = 0x4, scoped, tag = 'scoped memory for rnn_model_forward.3']
    %15 = vsyncpa [#allocation5], 0
    // Predicated region
    $region2: #{rnn_model_forward.3} parent=1 // pred_check
      _
    $region3: #{rnn_model_forward.3} parent=1 // pred_check_branch
      %17 = sbr.rel (0) target = $region5
    $region4: #{rnn_model_forward.3} parent=1 // pred_region
      _
    $region5: #{rnn_model_forward.3} parent=1 // pred_fallthru
      _
    // Predicated region
    $region6: #{rnn_model_forward.3} parent=1 // pred_check
      _
    $region7: #{rnn_model_forward.3} parent=1 // pred_check_branch
      %19 = sbr.rel (0) target = $region9
    $region8: #{rnn_model_forward.3} parent=1 // pred_region
      _
    $region9: #{rnn_model_forward.3} parent=1 // pred_fallthru
      _
    // Predicated region
    $region10: #{rnn_model_forward.3} parent=1 // pred_check
      _
    $region11: #{rnn_model_forward.3} parent=1 // pred_check_branch
      %21 = sbr.rel (0) target = $region13
    $region12: #{rnn_model_forward.3} parent=1 // pred_region
      %23 = vsyncadd [#allocation5], 0
      %s24 = sshll.u32 %s2, 4
      %s25 = int_to_ptr.hbm [resolvable:$true] %s24
      %s26 = sshll.u32 [#allocation4], 4
      %s27 = int_to_ptr.vmem [resolvable:$true] %s26
      %32 = dma.hbm_to_vmem [thread:$0]  %s25, 18432, %s27, [#allocation5], 576, 576, 36
    $region13: #{rnn_model_forward.3} parent=1 // pred_fallthru
      _
    // Predicated region
    $region14: #{rnn_model_forward.3} parent=1 // pred_check
      _
    $region15: #{rnn_model_forward.3} parent=1 // pred_check_branch
      %34 = sbr.rel (0) target = $region17
    $region16: #{rnn_model_forward.3} parent=1 // pred_region
      _
    $region17: #{rnn_model_forward.3} parent=1 // pred_fallthru
      _
    // Predicated region
    $region18: #{rnn_model_forward.3} parent=1 // pred_check
      _
    $region19: #{rnn_model_forward.3} parent=1 // pred_check_branch
      %36 = sbr.rel (0) target = $region21
    $region20: #{rnn_model_forward.3} parent=1 // pred_region
      _
    $region21: #{rnn_model_forward.3} parent=1 // pred_fallthru
      _
    // Predicated region
    $region22: #{rnn_model_forward.3} parent=1 // pred_check
      _
    $region23: #{rnn_model_forward.3} parent=1 // pred_check_branch
      %38 = sbr.rel (0) target = $region25
    $region24: #{rnn_model_forward.3} parent=1 // pred_region
      _
    $region25: #{rnn_model_forward.3} parent=1 // pred_fallthru
      _
    // Predicated region
    $region26: #{rnn_model_forward.3} parent=1 // pred_check
      _
    $region27: #{rnn_model_forward.3} parent=1 // pred_check_branch
      %40 = sbr.rel (0) target = $region29
    $region28: #{rnn_model_forward.3} parent=1 // pred_region
      _
    $region29: #{rnn_model_forward.3} parent=1 // pred_fallthru
      _
    // Predicated region
    $region30: #{rnn_model_forward.3} parent=1 // pred_check
      _
    $region31: #{rnn_model_forward.3} parent=1 // pred_check_branch
      %42 = sbr.rel (0) target = $region33
    $region32: #{rnn_model_forward.3} parent=1 // pred_region
      _
    $region33: #{rnn_model_forward.3} parent=1 // pred_fallthru
      _
    // Predicated region
    $region34: #{rnn_model_forward.3} parent=1 // pred_check
      _
    $region35: #{rnn_model_forward.3} parent=1 // pred_check_branch
      %44 = sbr.rel (0) target = $region37
    $region36: #{rnn_model_forward.3} parent=1 // pred_region
      _
    $region37: #{rnn_model_forward.3} parent=1 // pred_fallthru
      _
    // Predicated region
    $region38: #{rnn_model_forward.3} parent=1 // pred_check
      _
    $region39: #{rnn_model_forward.3} parent=1 // pred_check_branch
      %46 = sbr.rel (0) target = $region41
    $region40: #{rnn_model_forward.3} parent=1 // pred_region
      _
    $region41: #{rnn_model_forward.3} parent=1 // pred_fallthru
      _
    // Predicated region
    $region42: #{rnn_model_forward.3} parent=1 // pred_check
      _
    $region43: #{rnn_model_forward.3} parent=1 // pred_check_branch
      %48 = sbr.rel (0) target = $region45
    $region44: #{rnn_model_forward.3} parent=1 // pred_region
      %50 = dma.done [#allocation5], 18432
    $region45: #{rnn_model_forward.3} parent=1 // pred_fallthru
      _
    %s51 = smul.u32 0, 8
    %p52 = scmp.eq.s32.totalorder 0, 0
    // Predicated region
    $region46: #{rnn_model_forward.3} parent=1 // pred_check
      %p53 = pneg %p52
    $region47: #{rnn_model_forward.3} parent=1 // pred_check_branch
      %55 = sbr.rel (%p53) target = $region49
    $region48: #{rnn_model_forward.3} parent=1 // pred_region
      %56 = vst [vmem:[#allocation2] sm:$0xff] 0.0
      %57 = vst [vmem:[#allocation2 + $0x8] sm:$0xff] 0.0
      %58 = vst [vmem:[#allocation3] sm:$0xff] 0.0
      %59 = vst [vmem:[#allocation3 + $0x8] sm:$0xff] 0.0
    $region49: #{rnn_model_forward.3} parent=1 // pred_fallthru
      _
    %v60 = vld [vmem:[%s0] sm:$0xff]
    %v61 = vld [vmem:[%s0 + $0x8] sm:$0xff]
    %v62 = vld [vmem:[#allocation4] sm:$0xff]
    %v63 = vld [vmem:[#allocation4 + $0x8] sm:$0xff]
    %v64 = vld [vmem:[#allocation4 + $0x10] sm:$0xff]
    %v65 = vld [vmem:[#allocation4 + $0x18] sm:$0xff]
    %v66 = vld [vmem:[#allocation4 + $0x20] sm:$0xf]
    %v67 = vld [vmem:[#allocation4 + $0x24] sm:$0xff]
    %v68 = vld [vmem:[#allocation4 + $0x2c] sm:$0xff]
    %v69 = vld [vmem:[#allocation4 + $0x34] sm:$0xff]
    %v70 = vld [vmem:[#allocation4 + $0x3c] sm:$0xff]
    %v71 = vld [vmem:[#allocation4 + $0x44] sm:$0xf]
    %v72 = vld [vmem:[#allocation4 + $0x48] sm:$0xff]
    %v73 = vld [vmem:[#allocation4 + $0x50] sm:$0xff]
    %v74 = vld [vmem:[#allocation4 + $0x58] sm:$0xff]
    %v75 = vld [vmem:[#allocation4 + $0x60] sm:$0xff]
    %v76 = vld [vmem:[#allocation4 + $0x68] sm:$0xf]
    %v77 = vld [vmem:[#allocation4 + $0x6c] sm:$0xff]
    %v78 = vld [vmem:[#allocation4 + $0x74] sm:$0xff]
    %v79 = vld [vmem:[#allocation4 + $0x7c] sm:$0xff]
    %v80 = vld [vmem:[#allocation4 + $0x84] sm:$0xff]
    %v81 = vld [vmem:[#allocation4 + $0x8c] sm:$0xf]
    %v82 = vld [vmem:[#allocation4 + $0x90] sm:$0xff]
    %v83 = vld [vmem:[#allocation4 + $0x98] sm:$0xff]
    %v84 = vld [vmem:[#allocation4 + $0xa0] sm:$0xff]
    %v85 = vld [vmem:[#allocation4 + $0xa8] sm:$0xff]
    %v86 = vld [vmem:[#allocation4 + $0xb0] sm:$0xf]
    %v87 = vld [vmem:[#allocation4 + $0xb4] sm:$0xff]
    %v88 = vld [vmem:[#allocation4 + $0xbc] sm:$0xff]
    %v89 = vld [vmem:[#allocation4 + $0xc4] sm:$0xff]
    %v90 = vld [vmem:[#allocation4 + $0xcc] sm:$0xff]
    %v91 = vld [vmem:[#allocation4 + $0xd4] sm:$0xf]
    %v92 = vld [vmem:[#allocation4 + $0xd8] sm:$0xff]
    %v93 = vld [vmem:[#allocation4 + $0xe0] sm:$0xff]
    %v94 = vld [vmem:[#allocation4 + $0xe8] sm:$0xff]
    %v95 = vld [vmem:[#allocation4 + $0xf0] sm:$0xff]
    %v96 = vld [vmem:[#allocation4 + $0xf8] sm:$0xf]
    %v97 = vld [vmem:[#allocation4 + $0xfc] sm:$0xff]
    %v98 = vld [vmem:[#allocation4 + $0x104] sm:$0xff]
    %v99 = vld [vmem:[#allocation4 + $0x10c] sm:$0xff]
    %v100 = vld [vmem:[#allocation4 + $0x114] sm:$0xff]
    %v101 = vld [vmem:[#allocation4 + $0x11c] sm:$0xf]
    %v102 = vld [vmem:[#allocation4 + $0x120] sm:$0xff]
    %v103 = vld [vmem:[#allocation4 + $0x128] sm:$0xff]
    %v104 = vld [vmem:[#allocation4 + $0x130] sm:$0xff]
    %v105 = vld [vmem:[#allocation4 + $0x138] sm:$0xff]
    %v106 = vld [vmem:[#allocation4 + $0x140] sm:$0xf]
    %v107 = vld [vmem:[#allocation4 + $0x144] sm:$0xff]
    %v108 = vld [vmem:[#allocation4 + $0x14c] sm:$0xff]
    %v109 = vld [vmem:[#allocation4 + $0x154] sm:$0xff]
    %v110 = vld [vmem:[#allocation4 + $0x15c] sm:$0xff]
    %v111 = vld [vmem:[#allocation4 + $0x164] sm:$0xf]
    %v112 = vld [vmem:[#allocation4 + $0x168] sm:$0xff]
    %v113 = vld [vmem:[#allocation4 + $0x170] sm:$0xff]
    %v114 = vld [vmem:[#allocation4 + $0x178] sm:$0xff]
    %v115 = vld [vmem:[#allocation4 + $0x180] sm:$0xff]
    %v116 = vld [vmem:[#allocation4 + $0x188] sm:$0xf]
    %v117 = vld [vmem:[#allocation4 + $0x18c] sm:$0xff]
    %v118 = vld [vmem:[#allocation4 + $0x194] sm:$0xff]
    %v119 = vld [vmem:[#allocation4 + $0x19c] sm:$0xff]
    %v120 = vld [vmem:[#allocation4 + $0x1a4] sm:$0xff]
    %v121 = vld [vmem:[#allocation4 + $0x1ac] sm:$0xf]
    %v122 = vld [vmem:[#allocation4 + $0x1b0] sm:$0xff]
    %v123 = vld [vmem:[#allocation4 + $0x1b8] sm:$0xff]
    %v124 = vld [vmem:[#allocation4 + $0x1c0] sm:$0xff]
    %v125 = vld [vmem:[#allocation4 + $0x1c8] sm:$0xff]
    %v126 = vld [vmem:[#allocation4 + $0x1d0] sm:$0xf]
    %v127 = vld [vmem:[#allocation4 + $0x1d4] sm:$0xff]
    %v128 = vld [vmem:[#allocation4 + $0x1dc] sm:$0xff]
    %v129 = vld [vmem:[#allocation4 + $0x1e4] sm:$0xff]
    %v130 = vld [vmem:[#allocation4 + $0x1ec] sm:$0xff]
    %v131 = vld [vmem:[#allocation4 + $0x1f4] sm:$0xf]
    %v132 = vld [vmem:[#allocation4 + $0x1f8] sm:$0xff]
    %v133 = vld [vmem:[#allocation4 + $0x200] sm:$0xff]
    %v134 = vld [vmem:[#allocation4 + $0x208] sm:$0xff]
    %v135 = vld [vmem:[#allocation4 + $0x210] sm:$0xff]
    %v136 = vld [vmem:[#allocation4 + $0x218] sm:$0xf]
    %v137 = vld [vmem:[#allocation4 + $0x21c] sm:$0xff]
    %v138 = vld [vmem:[#allocation4 + $0x224] sm:$0xff]
    %v139 = vld [vmem:[#allocation4 + $0x22c] sm:$0xff]
    %v140 = vld [vmem:[#allocation4 + $0x234] sm:$0xff]
    %v141 = vld [vmem:[#allocation4 + $0x23c] sm:$0xf]
    %v142 = vld [vmem:[#allocation4 + $0x240] sm:$0xff]
    %v143 = vld [vmem:[#allocation4 + $0x248] sm:$0xff]
    %v144 = vld [vmem:[#allocation4 + $0x250] sm:$0xff]
    %v145 = vld [vmem:[#allocation4 + $0x258] sm:$0xff]
    %v146 = vld [vmem:[#allocation4 + $0x260] sm:$0xf]
    %v147 = vld [vmem:[#allocation4 + $0x264] sm:$0xff]
    %v148 = vld [vmem:[#allocation4 + $0x26c] sm:$0xff]
    %v149 = vld [vmem:[#allocation4 + $0x274] sm:$0xff]
    %v150 = vld [vmem:[#allocation4 + $0x27c] sm:$0xff]
    %v151 = vld [vmem:[#allocation4 + $0x284] sm:$0xf]
    %v152 = vld [vmem:[#allocation4 + $0x288] sm:$0xff]
    %v153 = vld [vmem:[#allocation4 + $0x290] sm:$0xff]
    %v154 = vld [vmem:[#allocation4 + $0x298] sm:$0xff]
    %v155 = vld [vmem:[#allocation4 + $0x2a0] sm:$0xff]
    %v156 = vld [vmem:[#allocation4 + $0x2a8] sm:$0xf]
    %v157 = vld [vmem:[#allocation4 + $0x2ac] sm:$0xff]
    %v158 = vld [vmem:[#allocation4 + $0x2b4] sm:$0xff]
    %v159 = vld [vmem:[#allocation4 + $0x2bc] sm:$0xff]
    %v160 = vld [vmem:[#allocation4 + $0x2c4] sm:$0xff]
    %v161 = vld [vmem:[#allocation4 + $0x2cc] sm:$0xf]
    %v162 = vld [vmem:[#allocation4 + $0x2d0] sm:$0xff]
    %v163 = vld [vmem:[#allocation4 + $0x2d8] sm:$0xff]
    %v164 = vld [vmem:[#allocation4 + $0x2e0] sm:$0xff]
    %v165 = vld [vmem:[#allocation4 + $0x2e8] sm:$0xff]
    %v166 = vld [vmem:[#allocation4 + $0x2f0] sm:$0xf]
    %v167 = vld [vmem:[#allocation4 + $0x2f4] sm:$0xff]
    %v168 = vld [vmem:[#allocation4 + $0x2fc] sm:$0xff]
    %v169 = vld [vmem:[#allocation4 + $0x304] sm:$0xff]
    %v170 = vld [vmem:[#allocation4 + $0x30c] sm:$0xff]
    %v171 = vld [vmem:[#allocation4 + $0x314] sm:$0xf]
    %v172 = vld [vmem:[#allocation4 + $0x318] sm:$0xff]
    %v173 = vld [vmem:[#allocation4 + $0x320] sm:$0xff]
    %v174 = vld [vmem:[#allocation4 + $0x328] sm:$0xff]
    %v175 = vld [vmem:[#allocation4 + $0x330] sm:$0xff]
    %v176 = vld [vmem:[#allocation4 + $0x338] sm:$0xf]
    %v177 = vld [vmem:[#allocation4 + $0x33c] sm:$0xff]
    %v178 = vld [vmem:[#allocation4 + $0x344] sm:$0xff]
    %v179 = vld [vmem:[#allocation4 + $0x34c] sm:$0xff]
    %v180 = vld [vmem:[#allocation4 + $0x354] sm:$0xff]
    %v181 = vld [vmem:[#allocation4 + $0x35c] sm:$0xf]
    %v182 = vld [vmem:[#allocation4 + $0x360] sm:$0xff]
    %v183 = vld [vmem:[#allocation4 + $0x368] sm:$0xff]
    %v184 = vld [vmem:[#allocation4 + $0x370] sm:$0xff]
    %v185 = vld [vmem:[#allocation4 + $0x378] sm:$0xff]
    %v186 = vld [vmem:[#allocation4 + $0x380] sm:$0xf]
    %v187 = vld [vmem:[#allocation4 + $0x384] sm:$0xff]
    %v188 = vld [vmem:[#allocation4 + $0x38c] sm:$0xff]
    %v189 = vld [vmem:[#allocation4 + $0x394] sm:$0xff]
    %v190 = vld [vmem:[#allocation4 + $0x39c] sm:$0xff]
    %v191 = vld [vmem:[#allocation4 + $0x3a4] sm:$0xf]
    %v192 = vld [vmem:[#allocation4 + $0x3a8] sm:$0xff]
    %v193 = vld [vmem:[#allocation4 + $0x3b0] sm:$0xff]
    %v194 = vld [vmem:[#allocation4 + $0x3b8] sm:$0xff]
    %v195 = vld [vmem:[#allocation4 + $0x3c0] sm:$0xff]
    %v196 = vld [vmem:[#allocation4 + $0x3c8] sm:$0xf]
    %v197 = vld [vmem:[#allocation4 + $0x3cc] sm:$0xff]
    %v198 = vld [vmem:[#allocation4 + $0x3d4] sm:$0xff]
    %v199 = vld [vmem:[#allocation4 + $0x3dc] sm:$0xff]
    %v200 = vld [vmem:[#allocation4 + $0x3e4] sm:$0xff]
    %v201 = vld [vmem:[#allocation4 + $0x3ec] sm:$0xf]
    %v202 = vld [vmem:[#allocation4 + $0x3f0] sm:$0xff]
    %v203 = vld [vmem:[#allocation4 + $0x3f8] sm:$0xff]
    %v204 = vld [vmem:[#allocation4 + $0x400] sm:$0xff]
    %v205 = vld [vmem:[#allocation4 + $0x408] sm:$0xff]
    %v206 = vld [vmem:[#allocation4 + $0x410] sm:$0xf]
    %v207 = vld [vmem:[#allocation4 + $0x414] sm:$0xff]
    %v208 = vld [vmem:[#allocation4 + $0x41c] sm:$0xff]
    %v209 = vld [vmem:[#allocation4 + $0x424] sm:$0xff]
    %v210 = vld [vmem:[#allocation4 + $0x42c] sm:$0xff]
    %v211 = vld [vmem:[#allocation4 + $0x434] sm:$0xf]
    %v212 = vld [vmem:[#allocation4 + $0x438] sm:$0xff]
    %v213 = vld [vmem:[#allocation4 + $0x440] sm:$0xff]
    %v214 = vld [vmem:[#allocation4 + $0x448] sm:$0xff]
    %v215 = vld [vmem:[#allocation4 + $0x450] sm:$0xff]
    %v216 = vld [vmem:[#allocation4 + $0x458] sm:$0xf]
    %v217 = vld [vmem:[#allocation4 + $0x45c] sm:$0xff]
    %v218 = vld [vmem:[#allocation4 + $0x464] sm:$0xff]
    %v219 = vld [vmem:[#allocation4 + $0x46c] sm:$0xff]
    %v220 = vld [vmem:[#allocation4 + $0x474] sm:$0xff]
    %v221 = vld [vmem:[#allocation4 + $0x47c] sm:$0xf]
    %v222 = vld [vmem:[%s4] sm:$0x7]
    %v224 = vperm.slane %v222, 0
    %v225 = vperm.slane %v222, 1
    %v226 = vperm.slane %v222, 2
    %v230 = vld [vmem:[%s3] sm:$0x1]
    %v232 = vperm.slane %v230, 0
    %v234 = vld [vmem:[%s5] sm:$0x1]
    %v236 = vperm.slane %v234, 0
    %v238 = vld [vmem:[#allocation2] sm:$0xff]
    %v239 = vld [vmem:[#allocation2 + $0x8] sm:$0xff]
    %v240 = vld [vmem:[#allocation3] sm:$0xff]
    %v241 = vld [vmem:[#allocation3 + $0x8] sm:$0xff]
    %v242 = vpack.c.bf16 %v238, %v238
    %v243 = vpack.c.bf16 %v239, %v239
    %v244 = vpack.c.bf16 %v240, %v240
    %v245 = vpack.c.bf16 %v241, %v241
    %v248 = vunpack.c.l.b16 %v242
    %v249 = vunpack.c.l.b16 %v243
    %v250 = vpack.c.b16 %v249, %v248
    %v254 = vunpack.c.l.b16 %v244
    %v255 = vunpack.c.l.b16 %v245
    %v256 = vpack.c.b16 %v255, %v254
    %v418 = vunpack.c.l.b16 %v62
    %v419 = vunpack.c.h.b16 %v62
    %v420 = vunpack.c.l.b16 %v63
    %v421 = vunpack.c.h.b16 %v63
    %v422 = vunpack.c.l.b16 %v64
    %v423 = vunpack.c.h.b16 %v64
    %v424 = vunpack.c.l.b16 %v65
    %v425 = vunpack.c.h.b16 %v65
    %v426 = vunpack.c.l.b16 %v66
    %v427 = vunpack.c.l.b16 %v67
    %v428 = vunpack.c.h.b16 %v67
    %v429 = vunpack.c.l.b16 %v68
    %v430 = vunpack.c.h.b16 %v68
    %v431 = vunpack.c.l.b16 %v69
    %v432 = vunpack.c.h.b16 %v69
    %v433 = vunpack.c.l.b16 %v70
    %v434 = vunpack.c.h.b16 %v70
    %v435 = vunpack.c.l.b16 %v71
    %v436 = vunpack.c.l.b16 %v72
    %v437 = vunpack.c.h.b16 %v72
    %v438 = vunpack.c.l.b16 %v73
    %v439 = vunpack.c.h.b16 %v73
    %v440 = vunpack.c.l.b16 %v74
    %v441 = vunpack.c.h.b16 %v74
    %v442 = vunpack.c.l.b16 %v75
    %v443 = vunpack.c.h.b16 %v75
    %v444 = vunpack.c.l.b16 %v76
    %v445 = vunpack.c.l.b16 %v77
    %v446 = vunpack.c.h.b16 %v77
    %v447 = vunpack.c.l.b16 %v78
    %v448 = vunpack.c.h.b16 %v78
    %v449 = vunpack.c.l.b16 %v79
    %v450 = vunpack.c.h.b16 %v79
    %v451 = vunpack.c.l.b16 %v80
    %v452 = vunpack.c.h.b16 %v80
    %v453 = vunpack.c.l.b16 %v81
    %v454 = vunpack.c.l.b16 %v82
    %v455 = vunpack.c.h.b16 %v82
    %v456 = vunpack.c.l.b16 %v83
    %v457 = vunpack.c.h.b16 %v83
    %v458 = vunpack.c.l.b16 %v84
    %v459 = vunpack.c.h.b16 %v84
    %v460 = vunpack.c.l.b16 %v85
    %v461 = vunpack.c.h.b16 %v85
    %v462 = vunpack.c.l.b16 %v86
    %v463 = vunpack.c.l.b16 %v87
    %v464 = vunpack.c.h.b16 %v87
    %v465 = vunpack.c.l.b16 %v88
    %v466 = vunpack.c.h.b16 %v88
    %v467 = vunpack.c.l.b16 %v89
    %v468 = vunpack.c.h.b16 %v89
    %v469 = vunpack.c.l.b16 %v90
    %v470 = vunpack.c.h.b16 %v90
    %v471 = vunpack.c.l.b16 %v91
    %v472 = vunpack.c.l.b16 %v92
    %v473 = vunpack.c.h.b16 %v92
    %v474 = vunpack.c.l.b16 %v93
    %v475 = vunpack.c.h.b16 %v93
    %v476 = vunpack.c.l.b16 %v94
    %v477 = vunpack.c.h.b16 %v94
    %v478 = vunpack.c.l.b16 %v95
    %v479 = vunpack.c.h.b16 %v95
    %v480 = vunpack.c.l.b16 %v96
    %v481 = vunpack.c.l.b16 %v97
    %v482 = vunpack.c.h.b16 %v97
    %v483 = vunpack.c.l.b16 %v98
    %v484 = vunpack.c.h.b16 %v98
    %v485 = vunpack.c.l.b16 %v99
    %v486 = vunpack.c.h.b16 %v99
    %v487 = vunpack.c.l.b16 %v100
    %v488 = vunpack.c.h.b16 %v100
    %v489 = vunpack.c.l.b16 %v101
    %v490 = vunpack.c.l.b16 %v102
    %v491 = vunpack.c.h.b16 %v102
    %v492 = vunpack.c.l.b16 %v103
    %v493 = vunpack.c.h.b16 %v103
    %v494 = vunpack.c.l.b16 %v104
    %v495 = vunpack.c.h.b16 %v104
    %v496 = vunpack.c.l.b16 %v105
    %v497 = vunpack.c.h.b16 %v105
    %v498 = vunpack.c.l.b16 %v106
    %v499 = vunpack.c.l.b16 %v107
    %v500 = vunpack.c.h.b16 %v107
    %v501 = vunpack.c.l.b16 %v108
    %v502 = vunpack.c.h.b16 %v108
    %v503 = vunpack.c.l.b16 %v109
    %v504 = vunpack.c.h.b16 %v109
    %v505 = vunpack.c.l.b16 %v110
    %v506 = vunpack.c.h.b16 %v110
    %v507 = vunpack.c.l.b16 %v111
    %v508 = vunpack.c.l.b16 %v112
    %v509 = vunpack.c.h.b16 %v112
    %v510 = vunpack.c.l.b16 %v113
    %v511 = vunpack.c.h.b16 %v113
    %v512 = vunpack.c.l.b16 %v114
    %v513 = vunpack.c.h.b16 %v114
    %v514 = vunpack.c.l.b16 %v115
    %v515 = vunpack.c.h.b16 %v115
    %v516 = vunpack.c.l.b16 %v116
    %v517 = vunpack.c.l.b16 %v117
    %v518 = vunpack.c.h.b16 %v117
    %v519 = vunpack.c.l.b16 %v118
    %v520 = vunpack.c.h.b16 %v118
    %v521 = vunpack.c.l.b16 %v119
    %v522 = vunpack.c.h.b16 %v119
    %v523 = vunpack.c.l.b16 %v120
    %v524 = vunpack.c.h.b16 %v120
    %v525 = vunpack.c.l.b16 %v121
    %v526 = vunpack.c.l.b16 %v122
    %v527 = vunpack.c.h.b16 %v122
    %v528 = vunpack.c.l.b16 %v123
    %v529 = vunpack.c.h.b16 %v123
    %v530 = vunpack.c.l.b16 %v124
    %v531 = vunpack.c.h.b16 %v124
    %v532 = vunpack.c.l.b16 %v125
    %v533 = vunpack.c.h.b16 %v125
    %v534 = vunpack.c.l.b16 %v126
    %v535 = vunpack.c.l.b16 %v127
    %v536 = vunpack.c.h.b16 %v127
    %v537 = vunpack.c.l.b16 %v128
    %v538 = vunpack.c.h.b16 %v128
    %v539 = vunpack.c.l.b16 %v129
    %v540 = vunpack.c.h.b16 %v129
    %v541 = vunpack.c.l.b16 %v130
    %v542 = vunpack.c.h.b16 %v130
    %v543 = vunpack.c.l.b16 %v131
    %v544 = vunpack.c.l.b16 %v132
    %v545 = vunpack.c.h.b16 %v132
    %v546 = vunpack.c.l.b16 %v133
    %v547 = vunpack.c.h.b16 %v133
    %v548 = vunpack.c.l.b16 %v134
    %v549 = vunpack.c.h.b16 %v134
    %v550 = vunpack.c.l.b16 %v135
    %v551 = vunpack.c.h.b16 %v135
    %v552 = vunpack.c.l.b16 %v136
    %v553 = vunpack.c.l.b16 %v137
    %v554 = vunpack.c.h.b16 %v137
    %v555 = vunpack.c.l.b16 %v138
    %v556 = vunpack.c.h.b16 %v138
    %v557 = vunpack.c.l.b16 %v139
    %v558 = vunpack.c.h.b16 %v139
    %v559 = vunpack.c.l.b16 %v140
    %v560 = vunpack.c.h.b16 %v140
    %v561 = vunpack.c.l.b16 %v141
    %v562 = vunpack.c.l.b16 %v142
    %v563 = vunpack.c.h.b16 %v142
    %v564 = vunpack.c.l.b16 %v143
    %v565 = vunpack.c.h.b16 %v143
    %v566 = vunpack.c.l.b16 %v144
    %v567 = vunpack.c.h.b16 %v144
    %v568 = vunpack.c.l.b16 %v145
    %v569 = vunpack.c.h.b16 %v145
    %v570 = vunpack.c.l.b16 %v146
    %v571 = vunpack.c.l.b16 %v147
    %v572 = vunpack.c.h.b16 %v147
    %v573 = vunpack.c.l.b16 %v148
    %v574 = vunpack.c.h.b16 %v148
    %v575 = vunpack.c.l.b16 %v149
    %v576 = vunpack.c.h.b16 %v149
    %v577 = vunpack.c.l.b16 %v150
    %v578 = vunpack.c.h.b16 %v150
    %v579 = vunpack.c.l.b16 %v151
    %v580 = vunpack.c.l.b16 %v152
    %v581 = vunpack.c.h.b16 %v152
    %v582 = vunpack.c.l.b16 %v153
    %v583 = vunpack.c.h.b16 %v153
    %v584 = vunpack.c.l.b16 %v154
    %v585 = vunpack.c.h.b16 %v154
    %v586 = vunpack.c.l.b16 %v155
    %v587 = vunpack.c.h.b16 %v155
    %v588 = vunpack.c.l.b16 %v156
    %v589 = vunpack.c.l.b16 %v157
    %v590 = vunpack.c.h.b16 %v157
    %v591 = vunpack.c.l.b16 %v158
    %v592 = vunpack.c.h.b16 %v158
    %v593 = vunpack.c.l.b16 %v159
    %v594 = vunpack.c.h.b16 %v159
    %v595 = vunpack.c.l.b16 %v160
    %v596 = vunpack.c.h.b16 %v160
    %v597 = vunpack.c.l.b16 %v161
    %v598 = vunpack.c.l.b16 %v162
    %v599 = vunpack.c.h.b16 %v162
    %v600 = vunpack.c.l.b16 %v163
    %v601 = vunpack.c.h.b16 %v163
    %v602 = vunpack.c.l.b16 %v164
    %v603 = vunpack.c.h.b16 %v164
    %v604 = vunpack.c.l.b16 %v165
    %v605 = vunpack.c.h.b16 %v165
    %v606 = vunpack.c.l.b16 %v166
    %v607 = vunpack.c.l.b16 %v167
    %v608 = vunpack.c.h.b16 %v167
    %v609 = vunpack.c.l.b16 %v168
    %v610 = vunpack.c.h.b16 %v168
    %v611 = vunpack.c.l.b16 %v169
    %v612 = vunpack.c.h.b16 %v169
    %v613 = vunpack.c.l.b16 %v170
    %v614 = vunpack.c.h.b16 %v170
    %v615 = vunpack.c.l.b16 %v171
    %v616 = vunpack.c.l.b16 %v172
    %v617 = vunpack.c.h.b16 %v172
    %v618 = vunpack.c.l.b16 %v173
    %v619 = vunpack.c.h.b16 %v173
    %v620 = vunpack.c.l.b16 %v174
    %v621 = vunpack.c.h.b16 %v174
    %v622 = vunpack.c.l.b16 %v175
    %v623 = vunpack.c.h.b16 %v175
    %v624 = vunpack.c.l.b16 %v176
    %v625 = vunpack.c.l.b16 %v177
    %v626 = vunpack.c.h.b16 %v177
    %v627 = vunpack.c.l.b16 %v178
    %v628 = vunpack.c.h.b16 %v178
    %v629 = vunpack.c.l.b16 %v179
    %v630 = vunpack.c.h.b16 %v179
    %v631 = vunpack.c.l.b16 %v180
    %v632 = vunpack.c.h.b16 %v180
    %v633 = vunpack.c.l.b16 %v181
    %v634 = vunpack.c.l.b16 %v182
    %v635 = vunpack.c.h.b16 %v182
    %v636 = vunpack.c.l.b16 %v183
    %v637 = vunpack.c.h.b16 %v183
    %v638 = vunpack.c.l.b16 %v184
    %v639 = vunpack.c.h.b16 %v184
    %v640 = vunpack.c.l.b16 %v185
    %v641 = vunpack.c.h.b16 %v185
    %v642 = vunpack.c.l.b16 %v186
    %v643 = vunpack.c.l.b16 %v187
    %v644 = vunpack.c.h.b16 %v187
    %v645 = vunpack.c.l.b16 %v188
    %v646 = vunpack.c.h.b16 %v188
    %v647 = vunpack.c.l.b16 %v189
    %v648 = vunpack.c.h.b16 %v189
    %v649 = vunpack.c.l.b16 %v190
    %v650 = vunpack.c.h.b16 %v190
    %v651 = vunpack.c.l.b16 %v191
    %v652 = vunpack.c.l.b16 %v192
    %v653 = vunpack.c.h.b16 %v192
    %v654 = vunpack.c.l.b16 %v193
    %v655 = vunpack.c.h.b16 %v193
    %v656 = vunpack.c.l.b16 %v194
    %v657 = vunpack.c.h.b16 %v194
    %v658 = vunpack.c.l.b16 %v195
    %v659 = vunpack.c.h.b16 %v195
    %v660 = vunpack.c.l.b16 %v196
    %v661 = vunpack.c.l.b16 %v197
    %v662 = vunpack.c.h.b16 %v197
    %v663 = vunpack.c.l.b16 %v198
    %v664 = vunpack.c.h.b16 %v198
    %v665 = vunpack.c.l.b16 %v199
    %v666 = vunpack.c.h.b16 %v199
    %v667 = vunpack.c.l.b16 %v200
    %v668 = vunpack.c.h.b16 %v200
    %v669 = vunpack.c.l.b16 %v201
    %v670 = vunpack.c.l.b16 %v202
    %v671 = vunpack.c.h.b16 %v202
    %v672 = vunpack.c.l.b16 %v203
    %v673 = vunpack.c.h.b16 %v203
    %v674 = vunpack.c.l.b16 %v204
    %v675 = vunpack.c.h.b16 %v204
    %v676 = vunpack.c.l.b16 %v205
    %v677 = vunpack.c.h.b16 %v205
    %v678 = vunpack.c.l.b16 %v206
    %v679 = vunpack.c.l.b16 %v207
    %v680 = vunpack.c.h.b16 %v207
    %v681 = vunpack.c.l.b16 %v208
    %v682 = vunpack.c.h.b16 %v208
    %v683 = vunpack.c.l.b16 %v209
    %v684 = vunpack.c.h.b16 %v209
    %v685 = vunpack.c.l.b16 %v210
    %v686 = vunpack.c.h.b16 %v210
    %v687 = vunpack.c.l.b16 %v211
    %v688 = vunpack.c.l.b16 %v212
    %v689 = vunpack.c.h.b16 %v212
    %v690 = vunpack.c.l.b16 %v213
    %v691 = vunpack.c.h.b16 %v213
    %v692 = vunpack.c.l.b16 %v214
    %v693 = vunpack.c.h.b16 %v214
    %v694 = vunpack.c.l.b16 %v215
    %v695 = vunpack.c.h.b16 %v215
    %v696 = vunpack.c.l.b16 %v216
    %v697 = vunpack.c.l.b16 %v217
    %v698 = vunpack.c.h.b16 %v217
    %v699 = vunpack.c.l.b16 %v218
    %v700 = vunpack.c.h.b16 %v218
    %v701 = vunpack.c.l.b16 %v219
    %v702 = vunpack.c.h.b16 %v219
    %v703 = vunpack.c.l.b16 %v220
    %v704 = vunpack.c.h.b16 %v220
    %v705 = vunpack.c.l.b16 %v221
    %v706 = vpack.c.b16 %v427, %v418
    %v707 = vpack.c.b16 %v428, %v419
    %v708 = vpack.c.b16 %v429, %v420
    %v709 = vpack.c.b16 %v430, %v421
    %v710 = vpack.c.b16 %v431, %v422
    %v711 = vpack.c.b16 %v432, %v423
    %v712 = vpack.c.b16 %v433, %v424
    %v713 = vpack.c.b16 %v434, %v425
    %v714 = vpack.c.b16 %v435, %v426
    %v715 = vpack.c.b16 %v445, %v436
    %v716 = vpack.c.b16 %v446, %v437
    %v717 = vpack.c.b16 %v447, %v438
    %v718 = vpack.c.b16 %v448, %v439
    %v719 = vpack.c.b16 %v449, %v440
    %v720 = vpack.c.b16 %v450, %v441
    %v721 = vpack.c.b16 %v451, %v442
    %v722 = vpack.c.b16 %v452, %v443
    %v723 = vpack.c.b16 %v453, %v444
    %v724 = vpack.c.b16 %v463, %v454
    %v725 = vpack.c.b16 %v464, %v455
    %v726 = vpack.c.b16 %v465, %v456
    %v727 = vpack.c.b16 %v466, %v457
    %v728 = vpack.c.b16 %v467, %v458
    %v729 = vpack.c.b16 %v468, %v459
    %v730 = vpack.c.b16 %v469, %v460
    %v731 = vpack.c.b16 %v470, %v461
    %v732 = vpack.c.b16 %v471, %v462
    %v733 = vpack.c.b16 %v481, %v472
    %v734 = vpack.c.b16 %v482, %v473
    %v735 = vpack.c.b16 %v483, %v474
    %v736 = vpack.c.b16 %v484, %v475
    %v737 = vpack.c.b16 %v485, %v476
    %v738 = vpack.c.b16 %v486, %v477
    %v739 = vpack.c.b16 %v487, %v478
    %v740 = vpack.c.b16 %v488, %v479
    %v741 = vpack.c.b16 %v489, %v480
    %v742 = vpack.c.b16 %v499, %v490
    %v743 = vpack.c.b16 %v500, %v491
    %v744 = vpack.c.b16 %v501, %v492
    %v745 = vpack.c.b16 %v502, %v493
    %v746 = vpack.c.b16 %v503, %v494
    %v747 = vpack.c.b16 %v504, %v495
    %v748 = vpack.c.b16 %v505, %v496
    %v749 = vpack.c.b16 %v506, %v497
    %v750 = vpack.c.b16 %v507, %v498
    %v751 = vpack.c.b16 %v517, %v508
    %v752 = vpack.c.b16 %v518, %v509
    %v753 = vpack.c.b16 %v519, %v510
    %v754 = vpack.c.b16 %v520, %v511
    %v755 = vpack.c.b16 %v521, %v512
    %v756 = vpack.c.b16 %v522, %v513
    %v757 = vpack.c.b16 %v523, %v514
    %v758 = vpack.c.b16 %v524, %v515
    %v759 = vpack.c.b16 %v525, %v516
    %v760 = vpack.c.b16 %v535, %v526
    %v761 = vpack.c.b16 %v536, %v527
    %v762 = vpack.c.b16 %v537, %v528
    %v763 = vpack.c.b16 %v538, %v529
    %v764 = vpack.c.b16 %v539, %v530
    %v765 = vpack.c.b16 %v540, %v531
    %v766 = vpack.c.b16 %v541, %v532
    %v767 = vpack.c.b16 %v542, %v533
    %v768 = vpack.c.b16 %v543, %v534
    %v769 = vpack.c.b16 %v553, %v544
    %v770 = vpack.c.b16 %v554, %v545
    %v771 = vpack.c.b16 %v555, %v546
    %v772 = vpack.c.b16 %v556, %v547
    %v773 = vpack.c.b16 %v557, %v548
    %v774 = vpack.c.b16 %v558, %v549
    %v775 = vpack.c.b16 %v559, %v550
    %v776 = vpack.c.b16 %v560, %v551
    %v777 = vpack.c.b16 %v561, %v552
    %v778 = vpack.c.b16 %v571, %v562
    %v779 = vpack.c.b16 %v572, %v563
    %v780 = vpack.c.b16 %v573, %v564
    %v781 = vpack.c.b16 %v574, %v565
    %v782 = vpack.c.b16 %v575, %v566
    %v783 = vpack.c.b16 %v576, %v567
    %v784 = vpack.c.b16 %v577, %v568
    %v785 = vpack.c.b16 %v578, %v569
    %v786 = vpack.c.b16 %v579, %v570
    %v787 = vpack.c.b16 %v589, %v580
    %v788 = vpack.c.b16 %v590, %v581
    %v789 = vpack.c.b16 %v591, %v582
    %v790 = vpack.c.b16 %v592, %v583
    %v791 = vpack.c.b16 %v593, %v584
    %v792 = vpack.c.b16 %v594, %v585
    %v793 = vpack.c.b16 %v595, %v586
    %v794 = vpack.c.b16 %v596, %v587
    %v795 = vpack.c.b16 %v597, %v588
    %v796 = vpack.c.b16 %v607, %v598
    %v797 = vpack.c.b16 %v608, %v599
    %v798 = vpack.c.b16 %v609, %v600
    %v799 = vpack.c.b16 %v610, %v601
    %v800 = vpack.c.b16 %v611, %v602
    %v801 = vpack.c.b16 %v612, %v603
    %v802 = vpack.c.b16 %v613, %v604
    %v803 = vpack.c.b16 %v614, %v605
    %v804 = vpack.c.b16 %v615, %v606
    %v805 = vpack.c.b16 %v625, %v616
    %v806 = vpack.c.b16 %v626, %v617
    %v807 = vpack.c.b16 %v627, %v618
    %v808 = vpack.c.b16 %v628, %v619
    %v809 = vpack.c.b16 %v629, %v620
    %v810 = vpack.c.b16 %v630, %v621
    %v811 = vpack.c.b16 %v631, %v622
    %v812 = vpack.c.b16 %v632, %v623
    %v813 = vpack.c.b16 %v633, %v624
    %v814 = vpack.c.b16 %v643, %v634
    %v815 = vpack.c.b16 %v644, %v635
    %v816 = vpack.c.b16 %v645, %v636
    %v817 = vpack.c.b16 %v646, %v637
    %v818 = vpack.c.b16 %v647, %v638
    %v819 = vpack.c.b16 %v648, %v639
    %v820 = vpack.c.b16 %v649, %v640
    %v821 = vpack.c.b16 %v650, %v641
    %v822 = vpack.c.b16 %v651, %v642
    %v823 = vpack.c.b16 %v661, %v652
    %v824 = vpack.c.b16 %v662, %v653
    %v825 = vpack.c.b16 %v663, %v654
    %v826 = vpack.c.b16 %v664, %v655
    %v827 = vpack.c.b16 %v665, %v656
    %v828 = vpack.c.b16 %v666, %v657
    %v829 = vpack.c.b16 %v667, %v658
    %v830 = vpack.c.b16 %v668, %v659
    %v831 = vpack.c.b16 %v669, %v660
    %v832 = vpack.c.b16 %v679, %v670
    %v833 = vpack.c.b16 %v680, %v671
    %v834 = vpack.c.b16 %v681, %v672
    %v835 = vpack.c.b16 %v682, %v673
    %v836 = vpack.c.b16 %v683, %v674
    %v837 = vpack.c.b16 %v684, %v675
    %v838 = vpack.c.b16 %v685, %v676
    %v839 = vpack.c.b16 %v686, %v677
    %v840 = vpack.c.b16 %v687, %v678
    %v841 = vpack.c.b16 %v697, %v688
    %v842 = vpack.c.b16 %v698, %v689
    %v843 = vpack.c.b16 %v699, %v690
    %v844 = vpack.c.b16 %v700, %v691
    %v845 = vpack.c.b16 %v701, %v692
    %v846 = vpack.c.b16 %v702, %v693
    %v847 = vpack.c.b16 %v703, %v694
    %v848 = vpack.c.b16 %v704, %v695
    %v849 = vpack.c.b16 %v705, %v696
    %994 = vmatpush.bf16.msra.mxu0 %v769
    %995 = vmatpush.bf16.msra.mxu0 %v760
    %996 = vmatpush.bf16.msra.mxu0 %v751
    %997 = vmatpush.bf16.msra.mxu0 %v742
    %998 = vmatpush.bf16.msra.mxu0 %v733
    %999 = vmatpush.bf16.msra.mxu0 %v724
    %1000 = vmatpush.bf16.msra.mxu0 %v715
    %1001 = vmatpush.bf16.msra.mxu0 %v706
    %1002 = vmatmul.bf16.gmra.mxu0 %v250
    %v1003 = vpop.f32.mrf.mxu0
    %v1004 = vadd.f32 0.0, %v1003
    %v1005 = vpop.f32.mrf.mxu0
    %v1006 = vadd.f32 0.0, %v1005
    %1007 = vdwg.mxu0
    %1008 = vmatpush.bf16.msra.mxu0 %v841
    %1009 = vmatpush.bf16.msra.mxu0 %v832
    %1010 = vmatpush.bf16.msra.mxu0 %v823
    %1011 = vmatpush.bf16.msra.mxu0 %v814
    %1012 = vmatpush.bf16.msra.mxu0 %v805
    %1013 = vmatpush.bf16.msra.mxu0 %v796
    %1014 = vmatpush.bf16.msra.mxu0 %v787
    %1015 = vmatpush.bf16.msra.mxu0 %v778
    %1016 = vmatmul.bf16.gmra.mxu0 %v256
    %v1017 = vpop.f32.mrf.mxu0
    %v1018 = vadd.f32 %v1004, %v1017
    %v1019 = vpop.f32.mrf.mxu0
    %v1020 = vadd.f32 %v1006, %v1019
    %1021 = vdwg.mxu0
    %1022 = vmatpush.bf16.msra.mxu0 %v770
    %1023 = vmatpush.bf16.msra.mxu0 %v761
    %1024 = vmatpush.bf16.msra.mxu0 %v752
    %1025 = vmatpush.bf16.msra.mxu0 %v743
    %1026 = vmatpush.bf16.msra.mxu0 %v734
    %1027 = vmatpush.bf16.msra.mxu0 %v725
    %1028 = vmatpush.bf16.msra.mxu0 %v716
    %1029 = vmatpush.bf16.msra.mxu0 %v707
    %1030 = vmatmul.bf16.gmra.mxu0 %v250
    %v1031 = vpop.f32.mrf.mxu0
    %v1032 = vadd.f32 0.0, %v1031
    %v1033 = vpop.f32.mrf.mxu0
    %v1034 = vadd.f32 0.0, %v1033
    %1035 = vdwg.mxu0
    %1036 = vmatpush.bf16.msra.mxu0 %v842
    %1037 = vmatpush.bf16.msra.mxu0 %v833
    %1038 = vmatpush.bf16.msra.mxu0 %v824
    %1039 = vmatpush.bf16.msra.mxu0 %v815
    %1040 = vmatpush.bf16.msra.mxu0 %v806
    %1041 = vmatpush.bf16.msra.mxu0 %v797
    %1042 = vmatpush.bf16.msra.mxu0 %v788
    %1043 = vmatpush.bf16.msra.mxu0 %v779
    %1044 = vmatmul.bf16.gmra.mxu0 %v256
    %v1045 = vpop.f32.mrf.mxu0
    %v1046 = vadd.f32 %v1032, %v1045
    %v1047 = vpop.f32.mrf.mxu0
    %v1048 = vadd.f32 %v1034, %v1047
    %1049 = vdwg.mxu0
    %1050 = vmatpush.bf16.msra.mxu0 %v771
    %1051 = vmatpush.bf16.msra.mxu0 %v762
    %1052 = vmatpush.bf16.msra.mxu0 %v753
    %1053 = vmatpush.bf16.msra.mxu0 %v744
    %1054 = vmatpush.bf16.msra.mxu0 %v735
    %1055 = vmatpush.bf16.msra.mxu0 %v726
    %1056 = vmatpush.bf16.msra.mxu0 %v717
    %1057 = vmatpush.bf16.msra.mxu0 %v708
    %1058 = vmatmul.bf16.gmra.mxu0 %v250
    %v1059 = vpop.f32.mrf.mxu0
    %v1060 = vadd.f32 0.0, %v1059
    %v1061 = vpop.f32.mrf.mxu0
    %v1062 = vadd.f32 0.0, %v1061
    %1063 = vdwg.mxu0
    %1064 = vmatpush.bf16.msra.mxu0 %v843
    %1065 = vmatpush.bf16.msra.mxu0 %v834
    %1066 = vmatpush.bf16.msra.mxu0 %v825
    %1067 = vmatpush.bf16.msra.mxu0 %v816
    %1068 = vmatpush.bf16.msra.mxu0 %v807
    %1069 = vmatpush.bf16.msra.mxu0 %v798
    %1070 = vmatpush.bf16.msra.mxu0 %v789
    %1071 = vmatpush.bf16.msra.mxu0 %v780
    %1072 = vmatmul.bf16.gmra.mxu0 %v256
    %v1073 = vpop.f32.mrf.mxu0
    %v1074 = vadd.f32 %v1060, %v1073
    %v1075 = vpop.f32.mrf.mxu0
    %v1076 = vadd.f32 %v1062, %v1075
    %1077 = vdwg.mxu0
    %1078 = vmatpush.bf16.msra.mxu0 %v772
    %1079 = vmatpush.bf16.msra.mxu0 %v763
    %1080 = vmatpush.bf16.msra.mxu0 %v754
    %1081 = vmatpush.bf16.msra.mxu0 %v745
    %1082 = vmatpush.bf16.msra.mxu0 %v736
    %1083 = vmatpush.bf16.msra.mxu0 %v727
    %1084 = vmatpush.bf16.msra.mxu0 %v718
    %1085 = vmatpush.bf16.msra.mxu0 %v709
    %1086 = vmatmul.bf16.gmra.mxu0 %v250
    %v1087 = vpop.f32.mrf.mxu0
    %v1088 = vadd.f32 0.0, %v1087
    %v1089 = vpop.f32.mrf.mxu0
    %v1090 = vadd.f32 0.0, %v1089
    %1091 = vdwg.mxu0
    %1092 = vmatpush.bf16.msra.mxu0 %v844
    %1093 = vmatpush.bf16.msra.mxu0 %v835
    %1094 = vmatpush.bf16.msra.mxu0 %v826
    %1095 = vmatpush.bf16.msra.mxu0 %v817
    %1096 = vmatpush.bf16.msra.mxu0 %v808
    %1097 = vmatpush.bf16.msra.mxu0 %v799
    %1098 = vmatpush.bf16.msra.mxu0 %v790
    %1099 = vmatpush.bf16.msra.mxu0 %v781
    %1100 = vmatmul.bf16.gmra.mxu0 %v256
    %v1101 = vpop.f32.mrf.mxu0
    %v1102 = vadd.f32 %v1088, %v1101
    %v1103 = vpop.f32.mrf.mxu0
    %v1104 = vadd.f32 %v1090, %v1103
    %1105 = vdwg.mxu0
    %1106 = vmatpush.bf16.msra.mxu0 %v773
    %1107 = vmatpush.bf16.msra.mxu0 %v764
    %1108 = vmatpush.bf16.msra.mxu0 %v755
    %1109 = vmatpush.bf16.msra.mxu0 %v746
    %1110 = vmatpush.bf16.msra.mxu0 %v737
    %1111 = vmatpush.bf16.msra.mxu0 %v728
    %1112 = vmatpush.bf16.msra.mxu0 %v719
    %1113 = vmatpush.bf16.msra.mxu0 %v710
    %1114 = vmatmul.bf16.gmra.mxu0 %v250
    %v1115 = vpop.f32.mrf.mxu0
    %v1116 = vadd.f32 0.0, %v1115
    %v1117 = vpop.f32.mrf.mxu0
    %v1118 = vadd.f32 0.0, %v1117
    %1119 = vdwg.mxu0
    %1120 = vmatpush.bf16.msra.mxu0 %v845
    %1121 = vmatpush.bf16.msra.mxu0 %v836
    %1122 = vmatpush.bf16.msra.mxu0 %v827
    %1123 = vmatpush.bf16.msra.mxu0 %v818
    %1124 = vmatpush.bf16.msra.mxu0 %v809
    %1125 = vmatpush.bf16.msra.mxu0 %v800
    %1126 = vmatpush.bf16.msra.mxu0 %v791
    %1127 = vmatpush.bf16.msra.mxu0 %v782
    %1128 = vmatmul.bf16.gmra.mxu0 %v256
    %v1129 = vpop.f32.mrf.mxu0
    %v1130 = vadd.f32 %v1116, %v1129
    %v1131 = vpop.f32.mrf.mxu0
    %v1132 = vadd.f32 %v1118, %v1131
    %1133 = vdwg.mxu0
    %1134 = vmatpush.bf16.msra.mxu0 %v774
    %1135 = vmatpush.bf16.msra.mxu0 %v765
    %1136 = vmatpush.bf16.msra.mxu0 %v756
    %1137 = vmatpush.bf16.msra.mxu0 %v747
    %1138 = vmatpush.bf16.msra.mxu0 %v738
    %1139 = vmatpush.bf16.msra.mxu0 %v729
    %1140 = vmatpush.bf16.msra.mxu0 %v720
    %1141 = vmatpush.bf16.msra.mxu0 %v711
    %1142 = vmatmul.bf16.gmra.mxu0 %v250
    %v1143 = vpop.f32.mrf.mxu0
    %v1144 = vadd.f32 0.0, %v1143
    %v1145 = vpop.f32.mrf.mxu0
    %v1146 = vadd.f32 0.0, %v1145
    %1147 = vdwg.mxu0
    %1148 = vmatpush.bf16.msra.mxu0 %v846
    %1149 = vmatpush.bf16.msra.mxu0 %v837
    %1150 = vmatpush.bf16.msra.mxu0 %v828
    %1151 = vmatpush.bf16.msra.mxu0 %v819
    %1152 = vmatpush.bf16.msra.mxu0 %v810
    %1153 = vmatpush.bf16.msra.mxu0 %v801
    %1154 = vmatpush.bf16.msra.mxu0 %v792
    %1155 = vmatpush.bf16.msra.mxu0 %v783
    %1156 = vmatmul.bf16.gmra.mxu0 %v256
    %v1157 = vpop.f32.mrf.mxu0
    %v1158 = vadd.f32 %v1144, %v1157
    %v1159 = vpop.f32.mrf.mxu0
    %v1160 = vadd.f32 %v1146, %v1159
    %1161 = vdwg.mxu0
    %1162 = vmatpush.bf16.msra.mxu0 %v775
    %1163 = vmatpush.bf16.msra.mxu0 %v766
    %1164 = vmatpush.bf16.msra.mxu0 %v757
    %1165 = vmatpush.bf16.msra.mxu0 %v748
    %1166 = vmatpush.bf16.msra.mxu0 %v739
    %1167 = vmatpush.bf16.msra.mxu0 %v730
    %1168 = vmatpush.bf16.msra.mxu0 %v721
    %1169 = vmatpush.bf16.msra.mxu0 %v712
    %1170 = vmatmul.bf16.gmra.mxu0 %v250
    %v1171 = vpop.f32.mrf.mxu0
    %v1172 = vadd.f32 0.0, %v1171
    %v1173 = vpop.f32.mrf.mxu0
    %v1174 = vadd.f32 0.0, %v1173
    %1175 = vdwg.mxu0
    %1176 = vmatpush.bf16.msra.mxu0 %v847
    %1177 = vmatpush.bf16.msra.mxu0 %v838
    %1178 = vmatpush.bf16.msra.mxu0 %v829
    %1179 = vmatpush.bf16.msra.mxu0 %v820
    %1180 = vmatpush.bf16.msra.mxu0 %v811
    %1181 = vmatpush.bf16.msra.mxu0 %v802
    %1182 = vmatpush.bf16.msra.mxu0 %v793
    %1183 = vmatpush.bf16.msra.mxu0 %v784
    %1184 = vmatmul.bf16.gmra.mxu0 %v256
    %v1185 = vpop.f32.mrf.mxu0
    %v1186 = vadd.f32 %v1172, %v1185
    %v1187 = vpop.f32.mrf.mxu0
    %v1188 = vadd.f32 %v1174, %v1187
    %1189 = vdwg.mxu0
    %1190 = vmatpush.bf16.msra.mxu0 %v776
    %1191 = vmatpush.bf16.msra.mxu0 %v767
    %1192 = vmatpush.bf16.msra.mxu0 %v758
    %1193 = vmatpush.bf16.msra.mxu0 %v749
    %1194 = vmatpush.bf16.msra.mxu0 %v740
    %1195 = vmatpush.bf16.msra.mxu0 %v731
    %1196 = vmatpush.bf16.msra.mxu0 %v722
    %1197 = vmatpush.bf16.msra.mxu0 %v713
    %1198 = vmatmul.bf16.gmra.mxu0 %v250
    %v1199 = vpop.f32.mrf.mxu0
    %v1200 = vadd.f32 0.0, %v1199
    %v1201 = vpop.f32.mrf.mxu0
    %v1202 = vadd.f32 0.0, %v1201
    %1203 = vdwg.mxu0
    %1204 = vmatpush.bf16.msra.mxu0 %v848
    %1205 = vmatpush.bf16.msra.mxu0 %v839
    %1206 = vmatpush.bf16.msra.mxu0 %v830
    %1207 = vmatpush.bf16.msra.mxu0 %v821
    %1208 = vmatpush.bf16.msra.mxu0 %v812
    %1209 = vmatpush.bf16.msra.mxu0 %v803
    %1210 = vmatpush.bf16.msra.mxu0 %v794
    %1211 = vmatpush.bf16.msra.mxu0 %v785
    %1212 = vmatmul.bf16.gmra.mxu0 %v256
    %v1213 = vpop.f32.mrf.mxu0
    %v1214 = vadd.f32 %v1200, %v1213
    %v1215 = vpop.f32.mrf.mxu0
    %v1216 = vadd.f32 %v1202, %v1215
    %1217 = vdwg.mxu0
    %1218 = vmatpush.bf16.msra.mxu0 %v777
    %1219 = vmatpush.bf16.msra.mxu0 %v768
    %1220 = vmatpush.bf16.msra.mxu0 %v759
    %1221 = vmatpush.bf16.msra.mxu0 %v750
    %1222 = vmatpush.bf16.msra.mxu0 %v741
    %1223 = vmatpush.bf16.msra.mxu0 %v732
    %1224 = vmatpush.bf16.msra.mxu0 %v723
    %1225 = vmatpush.bf16.msra.mxu0 %v714
    %1226 = vmatmul.bf16.gmra.mxu0 %v250
    %v1227 = vpop.f32.mrf.mxu0
    %v1228 = vadd.f32 0.0, %v1227
    %v1229 = vpop.f32.mrf.mxu0
    %v1230 = vadd.f32 0.0, %v1229
    %1231 = vdwg.mxu0
    %1232 = vmatpush.bf16.msra.mxu0 %v849
    %1233 = vmatpush.bf16.msra.mxu0 %v840
    %1234 = vmatpush.bf16.msra.mxu0 %v831
    %1235 = vmatpush.bf16.msra.mxu0 %v822
    %1236 = vmatpush.bf16.msra.mxu0 %v813
    %1237 = vmatpush.bf16.msra.mxu0 %v804
    %1238 = vmatpush.bf16.msra.mxu0 %v795
    %1239 = vmatpush.bf16.msra.mxu0 %v786
    %1240 = vmatmul.bf16.gmra.mxu0 %v256
    %v1241 = vpop.f32.mrf.mxu0
    %v1242 = vadd.f32 %v1228, %v1241
    %v1243 = vpop.f32.mrf.mxu0
    %v1244 = vadd.f32 %v1230, %v1243
    %1245 = vdwg.mxu0
    %s1246 = sadd.s32 %s51, 4294967295
    %v1247 = vstv %s1246
    %vm1248 = vcmp.gt.s32.totalorder %v60, %v1247
    %vm1249 = vcmp.gt.s32.totalorder %v61, %v1247
    %p1250 = scmp.ge.s32.totalorder %s1246, 0
    %s1251 = scalar_select %p1250, 1, 0
    %v1252 = vstv %s1251
    %vm1253 = vcmp.eq.s32.totalorder %v1252, 1
    %vm1254 = vmand %vm1248, %vm1253
    %vm1255 = vmand %vm1249, %vm1253
    %v1256 = vadd.f32 %v1102, %v224
    %v1257 = vadd.f32 %v1130, %v225
    %v1258 = vadd.f32 %v1158, %v226
    %v1259 = vadd.f32 %v1104, %v224
    %v1260 = vadd.f32 %v1132, %v225
    %v1261 = vadd.f32 %v1160, %v226
    %v1262 = vadd.f32 %v1256, %v1186
    %v1263 = vadd.f32 %v1259, %v1188
    %v1264 = vmul.f32 %v1262, 0.5
    %v1265 = vmul.f32 %v1263, 0.5
    %v1266 = vtanh.pop %v1264
    %v1267 = vtanh.pop %v1265
    %v1268 = vadd.f32 %v1266, 1.0
    %v1269 = vadd.f32 %v1267, 1.0
    %v1270 = vmul.f32 %v1268, 0.5
    %v1271 = vmul.f32 %v1269, 0.5
    %v1272 = vadd.f32 %v1257, %v1214
    %v1273 = vadd.f32 %v1260, %v1216
    %v1274 = vmul.f32 %v1272, 0.5
    %v1275 = vmul.f32 %v1273, 0.5
    %v1276 = vtanh.pop %v1274
    %v1277 = vtanh.pop %v1275
    %v1278 = vadd.f32 %v1276, 1.0
    %v1279 = vadd.f32 %v1277, 1.0
    %v1280 = vmul.f32 %v1278, 0.5
    %v1281 = vmul.f32 %v1279, 0.5
    %v1282 = vadd.f32 %v1242, %v236
    %v1283 = vadd.f32 %v1244, %v236
    %v1284 = vmul.f32 %v1270, %v1282
    %v1285 = vmul.f32 %v1271, %v1283
    %v1286 = vadd.f32 %v1258, %v1284
    %v1287 = vadd.f32 %v1261, %v1285
    %v1288 = vtanh.pop %v1286
    %v1289 = vtanh.pop %v1287
    %v1290 = vsub.f32 1.0, %v1280
    %v1291 = vsub.f32 1.0, %v1281
    %v1292 = vmul.f32 %v1290, %v1288
    %v1293 = vmul.f32 %v1291, %v1289
    %v1294 = vmul.f32 %v1280, %v240
    %v1295 = vmul.f32 %v1281, %v241
    %v1296 = vadd.f32 %v1292, %v1294
    %v1297 = vadd.f32 %v1293, %v1295
    %v1298 = vsel %vm1254, 1, 0
    %v1299 = vsel %vm1255, 1, 0
    %1300 = vset.pattern.permute.xlu0 0
    %1301 = vperm.xlu0 %1300, %v1298
    %v1302 = vpop.permute.xlu0 %1301
    %1303 = vset.pattern.permute.xlu0 0
    %1304 = vperm.xlu0 %1303, %v1299
    %v1305 = vpop.permute.xlu0 %1304
    %vm1306 = vcmp.eq.s32.totalorder %v1302, 1
    %vm1307 = vcmp.eq.s32.totalorder %v1305, 1
    %v1308 = vsel %vm1306, %v1296, %v240
    %v1309 = vsel %vm1307, %v1297, %v241
    %v1310 = vstv %s51
    %vm1311 = vcmp.gt.s32.totalorder %v60, %v1310
    %vm1312 = vcmp.gt.s32.totalorder %v61, %v1310
    %v1313 = vld [vmem:[%s1] sm:$0xff]
    %v1314 = vld [vmem:[%s1 + $0x8] sm:$0xf]
    %v1315 = vld [vmem:[%s1 + $0xc] sm:$0xff]
    %v1316 = vld [vmem:[%s1 + $0x14] sm:$0xf]
    %v1317 = vunpack.c.l.bf16 %v1313
    %v1318 = vunpack.c.h.bf16 %v1313
    %v1319 = vunpack.c.l.bf16 %v1314
    %v1320 = vunpack.c.l.bf16 %v1315
    %v1321 = vunpack.c.h.bf16 %v1315
    %v1322 = vunpack.c.l.bf16 %v1316
    %v1323 = vadd.f32 %v1317, %v1018
    %v1324 = vadd.f32 %v1320, %v1020
    %v1325 = vmul.f32 %v1323, 0.5
    %v1326 = vmul.f32 %v1324, 0.5
    %v1327 = vtanh.pop %v1325
    %v1328 = vtanh.pop %v1326
    %v1329 = vadd.f32 %v1327, 1.0
    %v1330 = vadd.f32 %v1328, 1.0
    %v1331 = vmul.f32 %v1329, 0.5
    %v1332 = vmul.f32 %v1330, 0.5
    %v1333 = vadd.f32 %v1318, %v1046
    %v1334 = vadd.f32 %v1321, %v1048
    %v1335 = vmul.f32 %v1333, 0.5
    %v1336 = vmul.f32 %v1334, 0.5
    %v1337 = vtanh.pop %v1335
    %v1338 = vtanh.pop %v1336
    %v1339 = vadd.f32 %v1337, 1.0
    %v1340 = vadd.f32 %v1338, 1.0
    %v1341 = vmul.f32 %v1339, 0.5
    %v1342 = vmul.f32 %v1340, 0.5
    %v1343 = vadd.f32 %v1074, %v232
    %v1344 = vadd.f32 %v1076, %v232
    %v1345 = vmul.f32 %v1331, %v1343
    %v1346 = vmul.f32 %v1332, %v1344
    %v1347 = vadd.f32 %v1319, %v1345
    %v1348 = vadd.f32 %v1322, %v1346
    %v1349 = vtanh.pop %v1347
    %v1350 = vtanh.pop %v1348
    %v1351 = vsub.f32 1.0, %v1341
    %v1352 = vsub.f32 1.0, %v1342
    %v1353 = vmul.f32 %v1351, %v1349
    %v1354 = vmul.f32 %v1352, %v1350
    %v1355 = vmul.f32 %v1341, %v238
    %v1356 = vmul.f32 %v1342, %v239
    %v1357 = vadd.f32 %v1353, %v1355
    %v1358 = vadd.f32 %v1354, %v1356
    %v1359 = vsel %vm1311, 1, 0
    %v1360 = vsel %vm1312, 1, 0
    %1361 = vset.pattern.permute.xlu0 0
    %1362 = vperm.xlu0 %1361, %v1359
    %v1363 = vpop.permute.xlu0 %1362
    %1364 = vset.pattern.permute.xlu0 0
    %1365 = vperm.xlu0 %1364, %v1360
    %v1366 = vpop.permute.xlu0 %1365
    %vm1367 = vcmp.eq.s32.totalorder %v1363, 1
    %vm1368 = vcmp.eq.s32.totalorder %v1366, 1
    %v1369 = vsel %vm1367, %v1357, %v238
    %v1370 = vsel %vm1368, %v1358, %v239
    %v1371 = vpack.c.bf16 %v1369, %v1369
    %v1372 = vpack.c.bf16 %v1370, %v1370
    %v1373 = vpack.c.bf16 %v1308, %v1308
    %v1374 = vpack.c.bf16 %v1309, %v1309
    %v1377 = vunpack.c.l.b16 %v1371
    %v1378 = vunpack.c.l.b16 %v1372
    %v1379 = vpack.c.b16 %v1378, %v1377
    %v1383 = vunpack.c.l.b16 %v1373
    %v1384 = vunpack.c.l.b16 %v1374
    %v1385 = vpack.c.b16 %v1384, %v1383
    %1387 = vmatpush.bf16.msra.mxu0 %v769
    %1388 = vmatpush.bf16.msra.mxu0 %v760
    %1389 = vmatpush.bf16.msra.mxu0 %v751
    %1390 = vmatpush.bf16.msra.mxu0 %v742
    %1391 = vmatpush.bf16.msra.mxu0 %v733
    %1392 = vmatpush.bf16.msra.mxu0 %v724
    %1393 = vmatpush.bf16.msra.mxu0 %v715
    %1394 = vmatpush.bf16.msra.mxu0 %v706
    %1395 = vmatmul.bf16.gmra.mxu0 %v1379
    %v1396 = vpop.f32.mrf.mxu0
    %v1397 = vadd.f32 0.0, %v1396
    %v1398 = vpop.f32.mrf.mxu0
    %v1399 = vadd.f32 0.0, %v1398
    %1400 = vdwg.mxu0
    %1401 = vmatpush.bf16.msra.mxu0 %v841
    %1402 = vmatpush.bf16.msra.mxu0 %v832
    %1403 = vmatpush.bf16.msra.mxu0 %v823
    %1404 = vmatpush.bf16.msra.mxu0 %v814
    %1405 = vmatpush.bf16.msra.mxu0 %v805
    %1406 = vmatpush.bf16.msra.mxu0 %v796
    %1407 = vmatpush.bf16.msra.mxu0 %v787
    %1408 = vmatpush.bf16.msra.mxu0 %v778
    %1409 = vmatmul.bf16.gmra.mxu0 %v1385
    %v1410 = vpop.f32.mrf.mxu0
    %v1411 = vadd.f32 %v1397, %v1410
    %v1412 = vpop.f32.mrf.mxu0
    %v1413 = vadd.f32 %v1399, %v1412
    %1414 = vdwg.mxu0
    %1415 = vmatpush.bf16.msra.mxu0 %v770
    %1416 = vmatpush.bf16.msra.mxu0 %v761
    %1417 = vmatpush.bf16.msra.mxu0 %v752
    %1418 = vmatpush.bf16.msra.mxu0 %v743
    %1419 = vmatpush.bf16.msra.mxu0 %v734
    %1420 = vmatpush.bf16.msra.mxu0 %v725
    %1421 = vmatpush.bf16.msra.mxu0 %v716
    %1422 = vmatpush.bf16.msra.mxu0 %v707
    %1423 = vmatmul.bf16.gmra.mxu0 %v1379
    %v1424 = vpop.f32.mrf.mxu0
    %v1425 = vadd.f32 0.0, %v1424
    %v1426 = vpop.f32.mrf.mxu0
    %v1427 = vadd.f32 0.0, %v1426
    %1428 = vdwg.mxu0
    %1429 = vmatpush.bf16.msra.mxu0 %v842
    %1430 = vmatpush.bf16.msra.mxu0 %v833
    %1431 = vmatpush.bf16.msra.mxu0 %v824
    %1432 = vmatpush.bf16.msra.mxu0 %v815
    %1433 = vmatpush.bf16.msra.mxu0 %v806
    %1434 = vmatpush.bf16.msra.mxu0 %v797
    %1435 = vmatpush.bf16.msra.mxu0 %v788
    %1436 = vmatpush.bf16.msra.mxu0 %v779
    %1437 = vmatmul.bf16.gmra.mxu0 %v1385
    %v1438 = vpop.f32.mrf.mxu0
    %v1439 = vadd.f32 %v1425, %v1438
    %v1440 = vpop.f32.mrf.mxu0
    %v1441 = vadd.f32 %v1427, %v1440
    %1442 = vdwg.mxu0
    %1443 = vmatpush.bf16.msra.mxu0 %v771
    %1444 = vmatpush.bf16.msra.mxu0 %v762
    %1445 = vmatpush.bf16.msra.mxu0 %v753
    %1446 = vmatpush.bf16.msra.mxu0 %v744
    %1447 = vmatpush.bf16.msra.mxu0 %v735
    %1448 = vmatpush.bf16.msra.mxu0 %v726
    %1449 = vmatpush.bf16.msra.mxu0 %v717
    %1450 = vmatpush.bf16.msra.mxu0 %v708
    %1451 = vmatmul.bf16.gmra.mxu0 %v1379
    %v1452 = vpop.f32.mrf.mxu0
    %v1453 = vadd.f32 0.0, %v1452
    %v1454 = vpop.f32.mrf.mxu0
    %v1455 = vadd.f32 0.0, %v1454
    %1456 = vdwg.mxu0
    %1457 = vmatpush.bf16.msra.mxu0 %v843
    %1458 = vmatpush.bf16.msra.mxu0 %v834
    %1459 = vmatpush.bf16.msra.mxu0 %v825
    %1460 = vmatpush.bf16.msra.mxu0 %v816
    %1461 = vmatpush.bf16.msra.mxu0 %v807
    %1462 = vmatpush.bf16.msra.mxu0 %v798
    %1463 = vmatpush.bf16.msra.mxu0 %v789
    %1464 = vmatpush.bf16.msra.mxu0 %v780
    %1465 = vmatmul.bf16.gmra.mxu0 %v1385
    %v1466 = vpop.f32.mrf.mxu0
    %v1467 = vadd.f32 %v1453, %v1466
    %v1468 = vpop.f32.mrf.mxu0
    %v1469 = vadd.f32 %v1455, %v1468
    %1470 = vdwg.mxu0
    %1471 = vmatpush.bf16.msra.mxu0 %v772
    %1472 = vmatpush.bf16.msra.mxu0 %v763
    %1473 = vmatpush.bf16.msra.mxu0 %v754
    %1474 = vmatpush.bf16.msra.mxu0 %v745
    %1475 = vmatpush.bf16.msra.mxu0 %v736
    %1476 = vmatpush.bf16.msra.mxu0 %v727
    %1477 = vmatpush.bf16.msra.mxu0 %v718
    %1478 = vmatpush.bf16.msra.mxu0 %v709
    %1479 = vmatmul.bf16.gmra.mxu0 %v1379
    %v1480 = vpop.f32.mrf.mxu0
    %v1481 = vadd.f32 0.0, %v1480
    %v1482 = vpop.f32.mrf.mxu0
    %v1483 = vadd.f32 0.0, %v1482
    %1484 = vdwg.mxu0
    %1485 = vmatpush.bf16.msra.mxu0 %v844
    %1486 = vmatpush.bf16.msra.mxu0 %v835
    %1487 = vmatpush.bf16.msra.mxu0 %v826
    %1488 = vmatpush.bf16.msra.mxu0 %v817
    %1489 = vmatpush.bf16.msra.mxu0 %v808
    %1490 = vmatpush.bf16.msra.mxu0 %v799
    %1491 = vmatpush.bf16.msra.mxu0 %v790
    %1492 = vmatpush.bf16.msra.mxu0 %v781
    %1493 = vmatmul.bf16.gmra.mxu0 %v1385
    %v1494 = vpop.f32.mrf.mxu0
    %v1495 = vadd.f32 %v1481, %v1494
    %v1496 = vpop.f32.mrf.mxu0
    %v1497 = vadd.f32 %v1483, %v1496
    %1498 = vdwg.mxu0
    %1499 = vmatpush.bf16.msra.mxu0 %v773
    %1500 = vmatpush.bf16.msra.mxu0 %v764
    %1501 = vmatpush.bf16.msra.mxu0 %v755
    %1502 = vmatpush.bf16.msra.mxu0 %v746
    %1503 = vmatpush.bf16.msra.mxu0 %v737
    %1504 = vmatpush.bf16.msra.mxu0 %v728
    %1505 = vmatpush.bf16.msra.mxu0 %v719
    %1506 = vmatpush.bf16.msra.mxu0 %v710
    %1507 = vmatmul.bf16.gmra.mxu0 %v1379
    %v1508 = vpop.f32.mrf.mxu0
    %v1509 = vadd.f32 0.0, %v1508
    %v1510 = vpop.f32.mrf.mxu0
    %v1511 = vadd.f32 0.0, %v1510
    %1512 = vdwg.mxu0
    %1513 = vmatpush.bf16.msra.mxu0 %v845
    %1514 = vmatpush.bf16.msra.mxu0 %v836
    %1515 = vmatpush.bf16.msra.mxu0 %v827
    %1516 = vmatpush.bf16.msra.mxu0 %v818
    %1517 = vmatpush.bf16.msra.mxu0 %v809
    %1518 = vmatpush.bf16.msra.mxu0 %v800
    %1519 = vmatpush.bf16.msra.mxu0 %v791
    %1520 = vmatpush.bf16.msra.mxu0 %v782
    %1521 = vmatmul.bf16.gmra.mxu0 %v1385
    %v1522 = vpop.f32.mrf.mxu0
    %v1523 = vadd.f32 %v1509, %v1522
    %v1524 = vpop.f32.mrf.mxu0
    %v1525 = vadd.f32 %v1511, %v1524
    %1526 = vdwg.mxu0
    %1527 = vmatpush.bf16.msra.mxu0 %v774
    %1528 = vmatpush.bf16.msra.mxu0 %v765
    %1529 = vmatpush.bf16.msra.mxu0 %v756
    %1530 = vmatpush.bf16.msra.mxu0 %v747
    %1531 = vmatpush.bf16.msra.mxu0 %v738
    %1532 = vmatpush.bf16.msra.mxu0 %v729
    %1533 = vmatpush.bf16.msra.mxu0 %v720
    %1534 = vmatpush.bf16.msra.mxu0 %v711
    %1535 = vmatmul.bf16.gmra.mxu0 %v1379
    %v1536 = vpop.f32.mrf.mxu0
    %v1537 = vadd.f32 0.0, %v1536
    %v1538 = vpop.f32.mrf.mxu0
    %v1539 = vadd.f32 0.0, %v1538
    %1540 = vdwg.mxu0
    %1541 = vmatpush.bf16.msra.mxu0 %v846
    %1542 = vmatpush.bf16.msra.mxu0 %v837
    %1543 = vmatpush.bf16.msra.mxu0 %v828
    %1544 = vmatpush.bf16.msra.mxu0 %v819
    %1545 = vmatpush.bf16.msra.mxu0 %v810
    %1546 = vmatpush.bf16.msra.mxu0 %v801
    %1547 = vmatpush.bf16.msra.mxu0 %v792
    %1548 = vmatpush.bf16.msra.mxu0 %v783
    %1549 = vmatmul.bf16.gmra.mxu0 %v1385
    %v1550 = vpop.f32.mrf.mxu0
    %v1551 = vadd.f32 %v1537, %v1550
    %v1552 = vpop.f32.mrf.mxu0
    %v1553 = vadd.f32 %v1539, %v1552
    %1554 = vdwg.mxu0
    %1555 = vmatpush.bf16.msra.mxu0 %v775
    %1556 = vmatpush.bf16.msra.mxu0 %v766
    %1557 = vmatpush.bf16.msra.mxu0 %v757
    %1558 = vmatpush.bf16.msra.mxu0 %v748
    %1559 = vmatpush.bf16.msra.mxu0 %v739
    %1560 = vmatpush.bf16.msra.mxu0 %v730
    %1561 = vmatpush.bf16.msra.mxu0 %v721
    %1562 = vmatpush.bf16.msra.mxu0 %v712
    %1563 = vmatmul.bf16.gmra.mxu0 %v1379
    %v1564 = vpop.f32.mrf.mxu0
    %v1565 = vadd.f32 0.0, %v1564
    %v1566 = vpop.f32.mrf.mxu0
    %v1567 = vadd.f32 0.0, %v1566
    %1568 = vdwg.mxu0
    %1569 = vmatpush.bf16.msra.mxu0 %v847
    %1570 = vmatpush.bf16.msra.mxu0 %v838
    %1571 = vmatpush.bf16.msra.mxu0 %v829
    %1572 = vmatpush.bf16.msra.mxu0 %v820
    %1573 = vmatpush.bf16.msra.mxu0 %v811
    %1574 = vmatpush.bf16.msra.mxu0 %v802
    %1575 = vmatpush.bf16.msra.mxu0 %v793
    %1576 = vmatpush.bf16.msra.mxu0 %v784
    %1577 = vmatmul.bf16.gmra.mxu0 %v1385
    %v1578 = vpop.f32.mrf.mxu0
    %v1579 = vadd.f32 %v1565, %v1578
    %v1580 = vpop.f32.mrf.mxu0
    %v1581 = vadd.f32 %v1567, %v1580
    %1582 = vdwg.mxu0
    %1583 = vmatpush.bf16.msra.mxu0 %v776
    %1584 = vmatpush.bf16.msra.mxu0 %v767
    %1585 = vmatpush.bf16.msra.mxu0 %v758
    %1586 = vmatpush.bf16.msra.mxu0 %v749
    %1587 = vmatpush.bf16.msra.mxu0 %v740
    %1588 = vmatpush.bf16.msra.mxu0 %v731
    %1589 = vmatpush.bf16.msra.mxu0 %v722
    %1590 = vmatpush.bf16.msra.mxu0 %v713
    %1591 = vmatmul.bf16.gmra.mxu0 %v1379
    %v1592 = vpop.f32.mrf.mxu0
    %v1593 = vadd.f32 0.0, %v1592
    %v1594 = vpop.f32.mrf.mxu0
    %v1595 = vadd.f32 0.0, %v1594
    %1596 = vdwg.mxu0
    %1597 = vmatpush.bf16.msra.mxu0 %v848
    %1598 = vmatpush.bf16.msra.mxu0 %v839
    %1599 = vmatpush.bf16.msra.mxu0 %v830
    %1600 = vmatpush.bf16.msra.mxu0 %v821
    %1601 = vmatpush.bf16.msra.mxu0 %v812
    %1602 = vmatpush.bf16.msra.mxu0 %v803
    %1603 = vmatpush.bf16.msra.mxu0 %v794
    %1604 = vmatpush.bf16.msra.mxu0 %v785
    %1605 = vmatmul.bf16.gmra.mxu0 %v1385
    %v1606 = vpop.f32.mrf.mxu0
    %v1607 = vadd.f32 %v1593, %v1606
    %v1608 = vpop.f32.mrf.mxu0
    %v1609 = vadd.f32 %v1595, %v1608
    %1610 = vdwg.mxu0
    %1611 = vmatpush.bf16.msra.mxu0 %v777
    %1612 = vmatpush.bf16.msra.mxu0 %v768
    %1613 = vmatpush.bf16.msra.mxu0 %v759
    %1614 = vmatpush.bf16.msra.mxu0 %v750
    %1615 = vmatpush.bf16.msra.mxu0 %v741
    %1616 = vmatpush.bf16.msra.mxu0 %v732
    %1617 = vmatpush.bf16.msra.mxu0 %v723
    %1618 = vmatpush.bf16.msra.mxu0 %v714
    %1619 = vmatmul.bf16.gmra.mxu0 %v1379
    %v1620 = vpop.f32.mrf.mxu0
    %v1621 = vadd.f32 0.0, %v1620
    %v1622 = vpop.f32.mrf.mxu0
    %v1623 = vadd.f32 0.0, %v1622
    %1624 = vdwg.mxu0
    %1625 = vmatpush.bf16.msra.mxu0 %v849
    %1626 = vmatpush.bf16.msra.mxu0 %v840
    %1627 = vmatpush.bf16.msra.mxu0 %v831
    %1628 = vmatpush.bf16.msra.mxu0 %v822
    %1629 = vmatpush.bf16.msra.mxu0 %v813
    %1630 = vmatpush.bf16.msra.mxu0 %v804
    %1631 = vmatpush.bf16.msra.mxu0 %v795
    %1632 = vmatpush.bf16.msra.mxu0 %v786
    %1633 = vmatmul.bf16.gmra.mxu0 %v1385
    %v1634 = vpop.f32.mrf.mxu0
    %v1635 = vadd.f32 %v1621, %v1634
    %v1636 = vpop.f32.mrf.mxu0
    %v1637 = vadd.f32 %v1623, %v1636
    %1638 = vdwg.mxu0
    %v1639 = vadd.f32 %v1495, %v224
    %v1640 = vadd.f32 %v1523, %v225
    %v1641 = vadd.f32 %v1551, %v226
    %v1642 = vadd.f32 %v1497, %v224
    %v1643 = vadd.f32 %v1525, %v225
    %v1644 = vadd.f32 %v1553, %v226
    %v1645 = vadd.f32 %v1639, %v1579
    %v1646 = vadd.f32 %v1642, %v1581
    %v1647 = vmul.f32 %v1645, 0.5
    %v1648 = vmul.f32 %v1646, 0.5
    %v1649 = vtanh.pop %v1647
    %v1650 = vtanh.pop %v1648
    %v1651 = vadd.f32 %v1649, 1.0
    %v1652 = vadd.f32 %v1650, 1.0
    %v1653 = vmul.f32 %v1651, 0.5
    %v1654 = vmul.f32 %v1652, 0.5
    %v1655 = vadd.f32 %v1640, %v1607
    %v1656 = vadd.f32 %v1643, %v1609
    %v1657 = vmul.f32 %v1655, 0.5
    %v1658 = vmul.f32 %v1656, 0.5
    %v1659 = vtanh.pop %v1657
    %v1660 = vtanh.pop %v1658
    %v1661 = vadd.f32 %v1659, 1.0
    %v1662 = vadd.f32 %v1660, 1.0
    %v1663 = vmul.f32 %v1661, 0.5
    %v1664 = vmul.f32 %v1662, 0.5
    %v1665 = vadd.f32 %v1635, %v236
    %v1666 = vadd.f32 %v1637, %v236
    %v1667 = vmul.f32 %v1653, %v1665
    %v1668 = vmul.f32 %v1654, %v1666
    %v1669 = vadd.f32 %v1641, %v1667
    %v1670 = vadd.f32 %v1644, %v1668
    %v1671 = vtanh.pop %v1669
    %v1672 = vtanh.pop %v1670
    %v1673 = vsub.f32 1.0, %v1663
    %v1674 = vsub.f32 1.0, %v1664
    %v1675 = vmul.f32 %v1673, %v1671
    %v1676 = vmul.f32 %v1674, %v1672
    %v1677 = vmul.f32 %v1663, %v1308
    %v1678 = vmul.f32 %v1664, %v1309
    %v1679 = vadd.f32 %v1675, %v1677
    %v1680 = vadd.f32 %v1676, %v1678
    %v1681 = vsel %vm1367, %v1679, %v1308
    %v1682 = vsel %vm1368, %v1680, %v1309
    %s1683 = sadd.s32 %s51, 1
    %v1684 = vstv %s1683
    %vm1685 = vcmp.gt.s32.totalorder %v60, %v1684
    %vm1686 = vcmp.gt.s32.totalorder %v61, %v1684
    %s1687 = scalar_lea.vmem %s1, 24
    %v1688 = vld [vmem:[%s1687] sm:$0xff]
    %v1689 = vld [vmem:[%s1687 + $0x8] sm:$0xf]
    %v1690 = vld [vmem:[%s1687 + $0xc] sm:$0xff]
    %v1691 = vld [vmem:[%s1687 + $0x14] sm:$0xf]
    %v1692 = vunpack.c.l.bf16 %v1688
    %v1693 = vunpack.c.h.bf16 %v1688
    %v1694 = vunpack.c.l.bf16 %v1689
    %v1695 = vunpack.c.l.bf16 %v1690
    %v1696 = vunpack.c.h.bf16 %v1690
    %v1697 = vunpack.c.l.bf16 %v1691
    %v1698 = vadd.f32 %v1692, %v1411
    %v1699 = vadd.f32 %v1695, %v1413
    %v1700 = vmul.f32 %v1698, 0.5
    %v1701 = vmul.f32 %v1699, 0.5
    %v1702 = vtanh.pop %v1700
    %v1703 = vtanh.pop %v1701
    %v1704 = vadd.f32 %v1702, 1.0
    %v1705 = vadd.f32 %v1703, 1.0
    %v1706 = vmul.f32 %v1704, 0.5
    %v1707 = vmul.f32 %v1705, 0.5
    %v1708 = vadd.f32 %v1693, %v1439
    %v1709 = vadd.f32 %v1696, %v1441
    %v1710 = vmul.f32 %v1708, 0.5
    %v1711 = vmul.f32 %v1709, 0.5
    %v1712 = vtanh.pop %v1710
    %v1713 = vtanh.pop %v1711
    %v1714 = vadd.f32 %v1712, 1.0
    %v1715 = vadd.f32 %v1713, 1.0
    %v1716 = vmul.f32 %v1714, 0.5
    %v1717 = vmul.f32 %v1715, 0.5
    %v1718 = vadd.f32 %v1467, %v232
    %v1719 = vadd.f32 %v1469, %v232
    %v1720 = vmul.f32 %v1706, %v1718
    %v1721 = vmul.f32 %v1707, %v1719
    %v1722 = vadd.f32 %v1694, %v1720
    %v1723 = vadd.f32 %v1697, %v1721
    %v1724 = vtanh.pop %v1722
    %v1725 = vtanh.pop %v1723
    %v1726 = vsub.f32 1.0, %v1716
    %v1727 = vsub.f32 1.0, %v1717
    %v1728 = vmul.f32 %v1726, %v1724
    %v1729 = vmul.f32 %v1727, %v1725
    %v1730 = vmul.f32 %v1716, %v1369
    %v1731 = vmul.f32 %v1717, %v1370
    %v1732 = vadd.f32 %v1728, %v1730
    %v1733 = vadd.f32 %v1729, %v1731
    %v1734 = vsel %vm1685, 1, 0
    %v1735 = vsel %vm1686, 1, 0
    %1736 = vset.pattern.permute.xlu0 0
    %1737 = vperm.xlu0 %1736, %v1734
    %v1738 = vpop.permute.xlu0 %1737
    %1739 = vset.pattern.permute.xlu0 0
    %1740 = vperm.xlu0 %1739, %v1735
    %v1741 = vpop.permute.xlu0 %1740
    %vm1742 = vcmp.eq.s32.totalorder %v1738, 1
    %vm1743 = vcmp.eq.s32.totalorder %v1741, 1
    %v1744 = vsel %vm1742, %v1732, %v1369
    %v1745 = vsel %vm1743, %v1733, %v1370
    %v1746 = vpack.c.bf16 %v1744, %v1744
    %v1747 = vpack.c.bf16 %v1745, %v1745
    %v1748 = vpack.c.bf16 %v1681, %v1681
    %v1749 = vpack.c.bf16 %v1682, %v1682
    %v1752 = vunpack.c.l.b16 %v1746
    %v1753 = vunpack.c.l.b16 %v1747
    %v1754 = vpack.c.b16 %v1753, %v1752
    %v1758 = vunpack.c.l.b16 %v1748
    %v1759 = vunpack.c.l.b16 %v1749
    %v1760 = vpack.c.b16 %v1759, %v1758
    %1762 = vmatpush.bf16.msra.mxu0 %v769
    %1763 = vmatpush.bf16.msra.mxu0 %v760
    %1764 = vmatpush.bf16.msra.mxu0 %v751
    %1765 = vmatpush.bf16.msra.mxu0 %v742
    %1766 = vmatpush.bf16.msra.mxu0 %v733
    %1767 = vmatpush.bf16.msra.mxu0 %v724
    %1768 = vmatpush.bf16.msra.mxu0 %v715
    %1769 = vmatpush.bf16.msra.mxu0 %v706
    %1770 = vmatmul.bf16.gmra.mxu0 %v1754
    %v1771 = vpop.f32.mrf.mxu0
    %v1772 = vadd.f32 0.0, %v1771
    %v1773 = vpop.f32.mrf.mxu0
    %v1774 = vadd.f32 0.0, %v1773
    %1775 = vdwg.mxu0
    %1776 = vmatpush.bf16.msra.mxu0 %v841
    %1777 = vmatpush.bf16.msra.mxu0 %v832
    %1778 = vmatpush.bf16.msra.mxu0 %v823
    %1779 = vmatpush.bf16.msra.mxu0 %v814
    %1780 = vmatpush.bf16.msra.mxu0 %v805
    %1781 = vmatpush.bf16.msra.mxu0 %v796
    %1782 = vmatpush.bf16.msra.mxu0 %v787
    %1783 = vmatpush.bf16.msra.mxu0 %v778
    %1784 = vmatmul.bf16.gmra.mxu0 %v1760
    %v1785 = vpop.f32.mrf.mxu0
    %v1786 = vadd.f32 %v1772, %v1785
    %v1787 = vpop.f32.mrf.mxu0
    %v1788 = vadd.f32 %v1774, %v1787
    %1789 = vdwg.mxu0
    %1790 = vmatpush.bf16.msra.mxu0 %v770
    %1791 = vmatpush.bf16.msra.mxu0 %v761
    %1792 = vmatpush.bf16.msra.mxu0 %v752
    %1793 = vmatpush.bf16.msra.mxu0 %v743
    %1794 = vmatpush.bf16.msra.mxu0 %v734
    %1795 = vmatpush.bf16.msra.mxu0 %v725
    %1796 = vmatpush.bf16.msra.mxu0 %v716
    %1797 = vmatpush.bf16.msra.mxu0 %v707
    %1798 = vmatmul.bf16.gmra.mxu0 %v1754
    %v1799 = vpop.f32.mrf.mxu0
    %v1800 = vadd.f32 0.0, %v1799
    %v1801 = vpop.f32.mrf.mxu0
    %v1802 = vadd.f32 0.0, %v1801
    %1803 = vdwg.mxu0
    %1804 = vmatpush.bf16.msra.mxu0 %v842
    %1805 = vmatpush.bf16.msra.mxu0 %v833
    %1806 = vmatpush.bf16.msra.mxu0 %v824
    %1807 = vmatpush.bf16.msra.mxu0 %v815
    %1808 = vmatpush.bf16.msra.mxu0 %v806
    %1809 = vmatpush.bf16.msra.mxu0 %v797
    %1810 = vmatpush.bf16.msra.mxu0 %v788
    %1811 = vmatpush.bf16.msra.mxu0 %v779
    %1812 = vmatmul.bf16.gmra.mxu0 %v1760
    %v1813 = vpop.f32.mrf.mxu0
    %v1814 = vadd.f32 %v1800, %v1813
    %v1815 = vpop.f32.mrf.mxu0
    %v1816 = vadd.f32 %v1802, %v1815
    %1817 = vdwg.mxu0
    %1818 = vmatpush.bf16.msra.mxu0 %v771
    %1819 = vmatpush.bf16.msra.mxu0 %v762
    %1820 = vmatpush.bf16.msra.mxu0 %v753
    %1821 = vmatpush.bf16.msra.mxu0 %v744
    %1822 = vmatpush.bf16.msra.mxu0 %v735
    %1823 = vmatpush.bf16.msra.mxu0 %v726
    %1824 = vmatpush.bf16.msra.mxu0 %v717
    %1825 = vmatpush.bf16.msra.mxu0 %v708
    %1826 = vmatmul.bf16.gmra.mxu0 %v1754
    %v1827 = vpop.f32.mrf.mxu0
    %v1828 = vadd.f32 0.0, %v1827
    %v1829 = vpop.f32.mrf.mxu0
    %v1830 = vadd.f32 0.0, %v1829
    %1831 = vdwg.mxu0
    %1832 = vmatpush.bf16.msra.mxu0 %v843
    %1833 = vmatpush.bf16.msra.mxu0 %v834
    %1834 = vmatpush.bf16.msra.mxu0 %v825
    %1835 = vmatpush.bf16.msra.mxu0 %v816
    %1836 = vmatpush.bf16.msra.mxu0 %v807
    %1837 = vmatpush.bf16.msra.mxu0 %v798
    %1838 = vmatpush.bf16.msra.mxu0 %v789
    %1839 = vmatpush.bf16.msra.mxu0 %v780
    %1840 = vmatmul.bf16.gmra.mxu0 %v1760
    %v1841 = vpop.f32.mrf.mxu0
    %v1842 = vadd.f32 %v1828, %v1841
    %v1843 = vpop.f32.mrf.mxu0
    %v1844 = vadd.f32 %v1830, %v1843
    %1845 = vdwg.mxu0
    %1846 = vmatpush.bf16.msra.mxu0 %v772
    %1847 = vmatpush.bf16.msra.mxu0 %v763
    %1848 = vmatpush.bf16.msra.mxu0 %v754
    %1849 = vmatpush.bf16.msra.mxu0 %v745
    %1850 = vmatpush.bf16.msra.mxu0 %v736
    %1851 = vmatpush.bf16.msra.mxu0 %v727
    %1852 = vmatpush.bf16.msra.mxu0 %v718
    %1853 = vmatpush.bf16.msra.mxu0 %v709
    %1854 = vmatmul.bf16.gmra.mxu0 %v1754
    %v1855 = vpop.f32.mrf.mxu0
    %v1856 = vadd.f32 0.0, %v1855
    %v1857 = vpop.f32.mrf.mxu0
    %v1858 = vadd.f32 0.0, %v1857
    %1859 = vdwg.mxu0
    %1860 = vmatpush.bf16.msra.mxu0 %v844
    %1861 = vmatpush.bf16.msra.mxu0 %v835
    %1862 = vmatpush.bf16.msra.mxu0 %v826
    %1863 = vmatpush.bf16.msra.mxu0 %v817
    %1864 = vmatpush.bf16.msra.mxu0 %v808
    %1865 = vmatpush.bf16.msra.mxu0 %v799
    %1866 = vmatpush.bf16.msra.mxu0 %v790
    %1867 = vmatpush.bf16.msra.mxu0 %v781
    %1868 = vmatmul.bf16.gmra.mxu0 %v1760
    %v1869 = vpop.f32.mrf.mxu0
    %v1870 = vadd.f32 %v1856, %v1869
    %v1871 = vpop.f32.mrf.mxu0
    %v1872 = vadd.f32 %v1858, %v1871
    %1873 = vdwg.mxu0
    %1874 = vmatpush.bf16.msra.mxu0 %v773
    %1875 = vmatpush.bf16.msra.mxu0 %v764
    %1876 = vmatpush.bf16.msra.mxu0 %v755
    %1877 = vmatpush.bf16.msra.mxu0 %v746
    %1878 = vmatpush.bf16.msra.mxu0 %v737
    %1879 = vmatpush.bf16.msra.mxu0 %v728
    %1880 = vmatpush.bf16.msra.mxu0 %v719
    %1881 = vmatpush.bf16.msra.mxu0 %v710
    %1882 = vmatmul.bf16.gmra.mxu0 %v1754
    %v1883 = vpop.f32.mrf.mxu0
    %v1884 = vadd.f32 0.0, %v1883
    %v1885 = vpop.f32.mrf.mxu0
    %v1886 = vadd.f32 0.0, %v1885
    %1887 = vdwg.mxu0
    %1888 = vmatpush.bf16.msra.mxu0 %v845
    %1889 = vmatpush.bf16.msra.mxu0 %v836
    %1890 = vmatpush.bf16.msra.mxu0 %v827
    %1891 = vmatpush.bf16.msra.mxu0 %v818
    %1892 = vmatpush.bf16.msra.mxu0 %v809
    %1893 = vmatpush.bf16.msra.mxu0 %v800
    %1894 = vmatpush.bf16.msra.mxu0 %v791
    %1895 = vmatpush.bf16.msra.mxu0 %v782
    %1896 = vmatmul.bf16.gmra.mxu0 %v1760
    %v1897 = vpop.f32.mrf.mxu0
    %v1898 = vadd.f32 %v1884, %v1897
    %v1899 = vpop.f32.mrf.mxu0
    %v1900 = vadd.f32 %v1886, %v1899
    %1901 = vdwg.mxu0
    %1902 = vmatpush.bf16.msra.mxu0 %v774
    %1903 = vmatpush.bf16.msra.mxu0 %v765
    %1904 = vmatpush.bf16.msra.mxu0 %v756
    %1905 = vmatpush.bf16.msra.mxu0 %v747
    %1906 = vmatpush.bf16.msra.mxu0 %v738
    %1907 = vmatpush.bf16.msra.mxu0 %v729
    %1908 = vmatpush.bf16.msra.mxu0 %v720
    %1909 = vmatpush.bf16.msra.mxu0 %v711
    %1910 = vmatmul.bf16.gmra.mxu0 %v1754
    %v1911 = vpop.f32.mrf.mxu0
    %v1912 = vadd.f32 0.0, %v1911
    %v1913 = vpop.f32.mrf.mxu0
    %v1914 = vadd.f32 0.0, %v1913
    %1915 = vdwg.mxu0
    %1916 = vmatpush.bf16.msra.mxu0 %v846
    %1917 = vmatpush.bf16.msra.mxu0 %v837
    %1918 = vmatpush.bf16.msra.mxu0 %v828
    %1919 = vmatpush.bf16.msra.mxu0 %v819
    %1920 = vmatpush.bf16.msra.mxu0 %v810
    %1921 = vmatpush.bf16.msra.mxu0 %v801
    %1922 = vmatpush.bf16.msra.mxu0 %v792
    %1923 = vmatpush.bf16.msra.mxu0 %v783
    %1924 = vmatmul.bf16.gmra.mxu0 %v1760
    %v1925 = vpop.f32.mrf.mxu0
    %v1926 = vadd.f32 %v1912, %v1925
    %v1927 = vpop.f32.mrf.mxu0
    %v1928 = vadd.f32 %v1914, %v1927
    %1929 = vdwg.mxu0
    %1930 = vmatpush.bf16.msra.mxu0 %v775
    %1931 = vmatpush.bf16.msra.mxu0 %v766
    %1932 = vmatpush.bf16.msra.mxu0 %v757
    %1933 = vmatpush.bf16.msra.mxu0 %v748
    %1934 = vmatpush.bf16.msra.mxu0 %v739
    %1935 = vmatpush.bf16.msra.mxu0 %v730
    %1936 = vmatpush.bf16.msra.mxu0 %v721
    %1937 = vmatpush.bf16.msra.mxu0 %v712
    %1938 = vmatmul.bf16.gmra.mxu0 %v1754
    %v1939 = vpop.f32.mrf.mxu0
    %v1940 = vadd.f32 0.0, %v1939
    %v1941 = vpop.f32.mrf.mxu0
    %v1942 = vadd.f32 0.0, %v1941
    %1943 = vdwg.mxu0
    %1944 = vmatpush.bf16.msra.mxu0 %v847
    %1945 = vmatpush.bf16.msra.mxu0 %v838
    %1946 = vmatpush.bf16.msra.mxu0 %v829
    %1947 = vmatpush.bf16.msra.mxu0 %v820
    %1948 = vmatpush.bf16.msra.mxu0 %v811
    %1949 = vmatpush.bf16.msra.mxu0 %v802
    %1950 = vmatpush.bf16.msra.mxu0 %v793
    %1951 = vmatpush.bf16.msra.mxu0 %v784
    %1952 = vmatmul.bf16.gmra.mxu0 %v1760
    %v1953 = vpop.f32.mrf.mxu0
    %v1954 = vadd.f32 %v1940, %v1953
    %v1955 = vpop.f32.mrf.mxu0
    %v1956 = vadd.f32 %v1942, %v1955
    %1957 = vdwg.mxu0
    %1958 = vmatpush.bf16.msra.mxu0 %v776
    %1959 = vmatpush.bf16.msra.mxu0 %v767
    %1960 = vmatpush.bf16.msra.mxu0 %v758
    %1961 = vmatpush.bf16.msra.mxu0 %v749
    %1962 = vmatpush.bf16.msra.mxu0 %v740
    %1963 = vmatpush.bf16.msra.mxu0 %v731
    %1964 = vmatpush.bf16.msra.mxu0 %v722
    %1965 = vmatpush.bf16.msra.mxu0 %v713
    %1966 = vmatmul.bf16.gmra.mxu0 %v1754
    %v1967 = vpop.f32.mrf.mxu0
    %v1968 = vadd.f32 0.0, %v1967
    %v1969 = vpop.f32.mrf.mxu0
    %v1970 = vadd.f32 0.0, %v1969
    %1971 = vdwg.mxu0
    %1972 = vmatpush.bf16.msra.mxu0 %v848
    %1973 = vmatpush.bf16.msra.mxu0 %v839
    %1974 = vmatpush.bf16.msra.mxu0 %v830
    %1975 = vmatpush.bf16.msra.mxu0 %v821
    %1976 = vmatpush.bf16.msra.mxu0 %v812
    %1977 = vmatpush.bf16.msra.mxu0 %v803
    %1978 = vmatpush.bf16.msra.mxu0 %v794
    %1979 = vmatpush.bf16.msra.mxu0 %v785
    %1980 = vmatmul.bf16.gmra.mxu0 %v1760
    %v1981 = vpop.f32.mrf.mxu0
    %v1982 = vadd.f32 %v1968, %v1981
    %v1983 = vpop.f32.mrf.mxu0
    %v1984 = vadd.f32 %v1970, %v1983
    %1985 = vdwg.mxu0
    %1986 = vmatpush.bf16.msra.mxu0 %v777
    %1987 = vmatpush.bf16.msra.mxu0 %v768
    %1988 = vmatpush.bf16.msra.mxu0 %v759
    %1989 = vmatpush.bf16.msra.mxu0 %v750
    %1990 = vmatpush.bf16.msra.mxu0 %v741
    %1991 = vmatpush.bf16.msra.mxu0 %v732
    %1992 = vmatpush.bf16.msra.mxu0 %v723
    %1993 = vmatpush.bf16.msra.mxu0 %v714
    %1994 = vmatmul.bf16.gmra.mxu0 %v1754
    %v1995 = vpop.f32.mrf.mxu0
    %v1996 = vadd.f32 0.0, %v1995
    %v1997 = vpop.f32.mrf.mxu0
    %v1998 = vadd.f32 0.0, %v1997
    %1999 = vdwg.mxu0
    %2000 = vmatpush.bf16.msra.mxu0 %v849
    %2001 = vmatpush.bf16.msra.mxu0 %v840
    %2002 = vmatpush.bf16.msra.mxu0 %v831
    %2003 = vmatpush.bf16.msra.mxu0 %v822
    %2004 = vmatpush.bf16.msra.mxu0 %v813
    %2005 = vmatpush.bf16.msra.mxu0 %v804
    %2006 = vmatpush.bf16.msra.mxu0 %v795
    %2007 = vmatpush.bf16.msra.mxu0 %v786
    %2008 = vmatmul.bf16.gmra.mxu0 %v1760
    %v2009 = vpop.f32.mrf.mxu0
    %v2010 = vadd.f32 %v1996, %v2009
    %v2011 = vpop.f32.mrf.mxu0
    %v2012 = vadd.f32 %v1998, %v2011
    %2013 = vdwg.mxu0
    %v2014 = vadd.f32 %v1870, %v224
    %v2015 = vadd.f32 %v1898, %v225
    %v2016 = vadd.f32 %v1926, %v226
    %v2017 = vadd.f32 %v1872, %v224
    %v2018 = vadd.f32 %v1900, %v225
    %v2019 = vadd.f32 %v1928, %v226
    %v2020 = vadd.f32 %v2014, %v1954
    %v2021 = vadd.f32 %v2017, %v1956
    %v2022 = vmul.f32 %v2020, 0.5
    %v2023 = vmul.f32 %v2021, 0.5
    %v2024 = vtanh.pop %v2022
    %v2025 = vtanh.pop %v2023
    %v2026 = vadd.f32 %v2024, 1.0
    %v2027 = vadd.f32 %v2025, 1.0
    %v2028 = vmul.f32 %v2026, 0.5
    %v2029 = vmul.f32 %v2027, 0.5
    %v2030 = vadd.f32 %v2015, %v1982
    %v2031 = vadd.f32 %v2018, %v1984
    %v2032 = vmul.f32 %v2030, 0.5
    %v2033 = vmul.f32 %v2031, 0.5
    %v2034 = vtanh.pop %v2032
    %v2035 = vtanh.pop %v2033
    %v2036 = vadd.f32 %v2034, 1.0
    %v2037 = vadd.f32 %v2035, 1.0
    %v2038 = vmul.f32 %v2036, 0.5
    %v2039 = vmul.f32 %v2037, 0.5
    %v2040 = vadd.f32 %v2010, %v236
    %v2041 = vadd.f32 %v2012, %v236
    %v2042 = vmul.f32 %v2028, %v2040
    %v2043 = vmul.f32 %v2029, %v2041
    %v2044 = vadd.f32 %v2016, %v2042
    %v2045 = vadd.f32 %v2019, %v2043
    %v2046 = vtanh.pop %v2044
    %v2047 = vtanh.pop %v2045
    %v2048 = vsub.f32 1.0, %v2038
    %v2049 = vsub.f32 1.0, %v2039
    %v2050 = vmul.f32 %v2048, %v2046
    %v2051 = vmul.f32 %v2049, %v2047
    %v2052 = vmul.f32 %v2038, %v1681
    %v2053 = vmul.f32 %v2039, %v1682
    %v2054 = vadd.f32 %v2050, %v2052
    %v2055 = vadd.f32 %v2051, %v2053
    %v2056 = vsel %vm1742, %v2054, %v1681
    %v2057 = vsel %vm1743, %v2055, %v1682
    %s2058 = sadd.s32 %s51, 2
    %v2059 = vstv %s2058
    %vm2060 = vcmp.gt.s32.totalorder %v60, %v2059
    %vm2061 = vcmp.gt.s32.totalorder %v61, %v2059
    %s2062 = scalar_lea.vmem %s1, 48
    %v2063 = vld [vmem:[%s2062] sm:$0xff]
    %v2064 = vld [vmem:[%s2062 + $0x8] sm:$0xf]
    %v2065 = vld [vmem:[%s2062 + $0xc] sm:$0xff]
    %v2066 = vld [vmem:[%s2062 + $0x14] sm:$0xf]
    %v2067 = vunpack.c.l.bf16 %v2063
    %v2068 = vunpack.c.h.bf16 %v2063
    %v2069 = vunpack.c.l.bf16 %v2064
    %v2070 = vunpack.c.l.bf16 %v2065
    %v2071 = vunpack.c.h.bf16 %v2065
    %v2072 = vunpack.c.l.bf16 %v2066
    %v2073 = vadd.f32 %v2067, %v1786
    %v2074 = vadd.f32 %v2070, %v1788
    %v2075 = vmul.f32 %v2073, 0.5
    %v2076 = vmul.f32 %v2074, 0.5
    %v2077 = vtanh.pop %v2075
    %v2078 = vtanh.pop %v2076
    %v2079 = vadd.f32 %v2077, 1.0
    %v2080 = vadd.f32 %v2078, 1.0
    %v2081 = vmul.f32 %v2079, 0.5
    %v2082 = vmul.f32 %v2080, 0.5
    %v2083 = vadd.f32 %v2068, %v1814
    %v2084 = vadd.f32 %v2071, %v1816
    %v2085 = vmul.f32 %v2083, 0.5
    %v2086 = vmul.f32 %v2084, 0.5
    %v2087 = vtanh.pop %v2085
    %v2088 = vtanh.pop %v2086
    %v2089 = vadd.f32 %v2087, 1.0
    %v2090 = vadd.f32 %v2088, 1.0
    %v2091 = vmul.f32 %v2089, 0.5
    %v2092 = vmul.f32 %v2090, 0.5
    %v2093 = vadd.f32 %v1842, %v232
    %v2094 = vadd.f32 %v1844, %v232
    %v2095 = vmul.f32 %v2081, %v2093
    %v2096 = vmul.f32 %v2082, %v2094
    %v2097 = vadd.f32 %v2069, %v2095
    %v2098 = vadd.f32 %v2072, %v2096
    %v2099 = vtanh.pop %v2097
    %v2100 = vtanh.pop %v2098
    %v2101 = vsub.f32 1.0, %v2091
    %v2102 = vsub.f32 1.0, %v2092
    %v2103 = vmul.f32 %v2101, %v2099
    %v2104 = vmul.f32 %v2102, %v2100
    %v2105 = vmul.f32 %v2091, %v1744
    %v2106 = vmul.f32 %v2092, %v1745
    %v2107 = vadd.f32 %v2103, %v2105
    %v2108 = vadd.f32 %v2104, %v2106
    %v2109 = vsel %vm2060, 1, 0
    %v2110 = vsel %vm2061, 1, 0
    %2111 = vset.pattern.permute.xlu0 0
    %2112 = vperm.xlu0 %2111, %v2109
    %v2113 = vpop.permute.xlu0 %2112
    %2114 = vset.pattern.permute.xlu0 0
    %2115 = vperm.xlu0 %2114, %v2110
    %v2116 = vpop.permute.xlu0 %2115
    %vm2117 = vcmp.eq.s32.totalorder %v2113, 1
    %vm2118 = vcmp.eq.s32.totalorder %v2116, 1
    %v2119 = vsel %vm2117, %v2107, %v1744
    %v2120 = vsel %vm2118, %v2108, %v1745
    %v2121 = vpack.c.bf16 %v2119, %v2119
    %v2122 = vpack.c.bf16 %v2120, %v2120
    %v2123 = vpack.c.bf16 %v2056, %v2056
    %v2124 = vpack.c.bf16 %v2057, %v2057
    %v2127 = vunpack.c.l.b16 %v2121
    %v2128 = vunpack.c.l.b16 %v2122
    %v2129 = vpack.c.b16 %v2128, %v2127
    %v2133 = vunpack.c.l.b16 %v2123
    %v2134 = vunpack.c.l.b16 %v2124
    %v2135 = vpack.c.b16 %v2134, %v2133
    %2137 = vmatpush.bf16.msra.mxu0 %v769
    %2138 = vmatpush.bf16.msra.mxu0 %v760
    %2139 = vmatpush.bf16.msra.mxu0 %v751
    %2140 = vmatpush.bf16.msra.mxu0 %v742
    %2141 = vmatpush.bf16.msra.mxu0 %v733
    %2142 = vmatpush.bf16.msra.mxu0 %v724
    %2143 = vmatpush.bf16.msra.mxu0 %v715
    %2144 = vmatpush.bf16.msra.mxu0 %v706
    %2145 = vmatmul.bf16.gmra.mxu0 %v2129
    %v2146 = vpop.f32.mrf.mxu0
    %v2147 = vadd.f32 0.0, %v2146
    %v2148 = vpop.f32.mrf.mxu0
    %v2149 = vadd.f32 0.0, %v2148
    %2150 = vdwg.mxu0
    %2151 = vmatpush.bf16.msra.mxu0 %v841
    %2152 = vmatpush.bf16.msra.mxu0 %v832
    %2153 = vmatpush.bf16.msra.mxu0 %v823
    %2154 = vmatpush.bf16.msra.mxu0 %v814
    %2155 = vmatpush.bf16.msra.mxu0 %v805
    %2156 = vmatpush.bf16.msra.mxu0 %v796
    %2157 = vmatpush.bf16.msra.mxu0 %v787
    %2158 = vmatpush.bf16.msra.mxu0 %v778
    %2159 = vmatmul.bf16.gmra.mxu0 %v2135
    %v2160 = vpop.f32.mrf.mxu0
    %v2161 = vadd.f32 %v2147, %v2160
    %v2162 = vpop.f32.mrf.mxu0
    %v2163 = vadd.f32 %v2149, %v2162
    %2164 = vdwg.mxu0
    %2165 = vmatpush.bf16.msra.mxu0 %v770
    %2166 = vmatpush.bf16.msra.mxu0 %v761
    %2167 = vmatpush.bf16.msra.mxu0 %v752
    %2168 = vmatpush.bf16.msra.mxu0 %v743
    %2169 = vmatpush.bf16.msra.mxu0 %v734
    %2170 = vmatpush.bf16.msra.mxu0 %v725
    %2171 = vmatpush.bf16.msra.mxu0 %v716
    %2172 = vmatpush.bf16.msra.mxu0 %v707
    %2173 = vmatmul.bf16.gmra.mxu0 %v2129
    %v2174 = vpop.f32.mrf.mxu0
    %v2175 = vadd.f32 0.0, %v2174
    %v2176 = vpop.f32.mrf.mxu0
    %v2177 = vadd.f32 0.0, %v2176
    %2178 = vdwg.mxu0
    %2179 = vmatpush.bf16.msra.mxu0 %v842
    %2180 = vmatpush.bf16.msra.mxu0 %v833
    %2181 = vmatpush.bf16.msra.mxu0 %v824
    %2182 = vmatpush.bf16.msra.mxu0 %v815
    %2183 = vmatpush.bf16.msra.mxu0 %v806
    %2184 = vmatpush.bf16.msra.mxu0 %v797
    %2185 = vmatpush.bf16.msra.mxu0 %v788
    %2186 = vmatpush.bf16.msra.mxu0 %v779
    %2187 = vmatmul.bf16.gmra.mxu0 %v2135
    %v2188 = vpop.f32.mrf.mxu0
    %v2189 = vadd.f32 %v2175, %v2188
    %v2190 = vpop.f32.mrf.mxu0
    %v2191 = vadd.f32 %v2177, %v2190
    %2192 = vdwg.mxu0
    %2193 = vmatpush.bf16.msra.mxu0 %v771
    %2194 = vmatpush.bf16.msra.mxu0 %v762
    %2195 = vmatpush.bf16.msra.mxu0 %v753
    %2196 = vmatpush.bf16.msra.mxu0 %v744
    %2197 = vmatpush.bf16.msra.mxu0 %v735
    %2198 = vmatpush.bf16.msra.mxu0 %v726
    %2199 = vmatpush.bf16.msra.mxu0 %v717
    %2200 = vmatpush.bf16.msra.mxu0 %v708
    %2201 = vmatmul.bf16.gmra.mxu0 %v2129
    %v2202 = vpop.f32.mrf.mxu0
    %v2203 = vadd.f32 0.0, %v2202
    %v2204 = vpop.f32.mrf.mxu0
    %v2205 = vadd.f32 0.0, %v2204
    %2206 = vdwg.mxu0
    %2207 = vmatpush.bf16.msra.mxu0 %v843
    %2208 = vmatpush.bf16.msra.mxu0 %v834
    %2209 = vmatpush.bf16.msra.mxu0 %v825
    %2210 = vmatpush.bf16.msra.mxu0 %v816
    %2211 = vmatpush.bf16.msra.mxu0 %v807
    %2212 = vmatpush.bf16.msra.mxu0 %v798
    %2213 = vmatpush.bf16.msra.mxu0 %v789
    %2214 = vmatpush.bf16.msra.mxu0 %v780
    %2215 = vmatmul.bf16.gmra.mxu0 %v2135
    %v2216 = vpop.f32.mrf.mxu0
    %v2217 = vadd.f32 %v2203, %v2216
    %v2218 = vpop.f32.mrf.mxu0
    %v2219 = vadd.f32 %v2205, %v2218
    %2220 = vdwg.mxu0
    %2221 = vmatpush.bf16.msra.mxu0 %v772
    %2222 = vmatpush.bf16.msra.mxu0 %v763
    %2223 = vmatpush.bf16.msra.mxu0 %v754
    %2224 = vmatpush.bf16.msra.mxu0 %v745
    %2225 = vmatpush.bf16.msra.mxu0 %v736
    %2226 = vmatpush.bf16.msra.mxu0 %v727
    %2227 = vmatpush.bf16.msra.mxu0 %v718
    %2228 = vmatpush.bf16.msra.mxu0 %v709
    %2229 = vmatmul.bf16.gmra.mxu0 %v2129
    %v2230 = vpop.f32.mrf.mxu0
    %v2231 = vadd.f32 0.0, %v2230
    %v2232 = vpop.f32.mrf.mxu0
    %v2233 = vadd.f32 0.0, %v2232
    %2234 = vdwg.mxu0
    %2235 = vmatpush.bf16.msra.mxu0 %v844
    %2236 = vmatpush.bf16.msra.mxu0 %v835
    %2237 = vmatpush.bf16.msra.mxu0 %v826
    %2238 = vmatpush.bf16.msra.mxu0 %v817
    %2239 = vmatpush.bf16.msra.mxu0 %v808
    %2240 = vmatpush.bf16.msra.mxu0 %v799
    %2241 = vmatpush.bf16.msra.mxu0 %v790
    %2242 = vmatpush.bf16.msra.mxu0 %v781
    %2243 = vmatmul.bf16.gmra.mxu0 %v2135
    %v2244 = vpop.f32.mrf.mxu0
    %v2245 = vadd.f32 %v2231, %v2244
    %v2246 = vpop.f32.mrf.mxu0
    %v2247 = vadd.f32 %v2233, %v2246
    %2248 = vdwg.mxu0
    %2249 = vmatpush.bf16.msra.mxu0 %v773
    %2250 = vmatpush.bf16.msra.mxu0 %v764
    %2251 = vmatpush.bf16.msra.mxu0 %v755
    %2252 = vmatpush.bf16.msra.mxu0 %v746
    %2253 = vmatpush.bf16.msra.mxu0 %v737
    %2254 = vmatpush.bf16.msra.mxu0 %v728
    %2255 = vmatpush.bf16.msra.mxu0 %v719
    %2256 = vmatpush.bf16.msra.mxu0 %v710
    %2257 = vmatmul.bf16.gmra.mxu0 %v2129
    %v2258 = vpop.f32.mrf.mxu0
    %v2259 = vadd.f32 0.0, %v2258
    %v2260 = vpop.f32.mrf.mxu0
    %v2261 = vadd.f32 0.0, %v2260
    %2262 = vdwg.mxu0
    %2263 = vmatpush.bf16.msra.mxu0 %v845
    %2264 = vmatpush.bf16.msra.mxu0 %v836
    %2265 = vmatpush.bf16.msra.mxu0 %v827
    %2266 = vmatpush.bf16.msra.mxu0 %v818
    %2267 = vmatpush.bf16.msra.mxu0 %v809
    %2268 = vmatpush.bf16.msra.mxu0 %v800
    %2269 = vmatpush.bf16.msra.mxu0 %v791
    %2270 = vmatpush.bf16.msra.mxu0 %v782
    %2271 = vmatmul.bf16.gmra.mxu0 %v2135
    %v2272 = vpop.f32.mrf.mxu0
    %v2273 = vadd.f32 %v2259, %v2272
    %v2274 = vpop.f32.mrf.mxu0
    %v2275 = vadd.f32 %v2261, %v2274
    %2276 = vdwg.mxu0
    %2277 = vmatpush.bf16.msra.mxu0 %v774
    %2278 = vmatpush.bf16.msra.mxu0 %v765
    %2279 = vmatpush.bf16.msra.mxu0 %v756
    %2280 = vmatpush.bf16.msra.mxu0 %v747
    %2281 = vmatpush.bf16.msra.mxu0 %v738
    %2282 = vmatpush.bf16.msra.mxu0 %v729
    %2283 = vmatpush.bf16.msra.mxu0 %v720
    %2284 = vmatpush.bf16.msra.mxu0 %v711
    %2285 = vmatmul.bf16.gmra.mxu0 %v2129
    %v2286 = vpop.f32.mrf.mxu0
    %v2287 = vadd.f32 0.0, %v2286
    %v2288 = vpop.f32.mrf.mxu0
    %v2289 = vadd.f32 0.0, %v2288
    %2290 = vdwg.mxu0
    %2291 = vmatpush.bf16.msra.mxu0 %v846
    %2292 = vmatpush.bf16.msra.mxu0 %v837
    %2293 = vmatpush.bf16.msra.mxu0 %v828
    %2294 = vmatpush.bf16.msra.mxu0 %v819
    %2295 = vmatpush.bf16.msra.mxu0 %v810
    %2296 = vmatpush.bf16.msra.mxu0 %v801
    %2297 = vmatpush.bf16.msra.mxu0 %v792
    %2298 = vmatpush.bf16.msra.mxu0 %v783
    %2299 = vmatmul.bf16.gmra.mxu0 %v2135
    %v2300 = vpop.f32.mrf.mxu0
    %v2301 = vadd.f32 %v2287, %v2300
    %v2302 = vpop.f32.mrf.mxu0
    %v2303 = vadd.f32 %v2289, %v2302
    %2304 = vdwg.mxu0
    %2305 = vmatpush.bf16.msra.mxu0 %v775
    %2306 = vmatpush.bf16.msra.mxu0 %v766
    %2307 = vmatpush.bf16.msra.mxu0 %v757
    %2308 = vmatpush.bf16.msra.mxu0 %v748
    %2309 = vmatpush.bf16.msra.mxu0 %v739
    %2310 = vmatpush.bf16.msra.mxu0 %v730
    %2311 = vmatpush.bf16.msra.mxu0 %v721
    %2312 = vmatpush.bf16.msra.mxu0 %v712
    %2313 = vmatmul.bf16.gmra.mxu0 %v2129
    %v2314 = vpop.f32.mrf.mxu0
    %v2315 = vadd.f32 0.0, %v2314
    %v2316 = vpop.f32.mrf.mxu0
    %v2317 = vadd.f32 0.0, %v2316
    %2318 = vdwg.mxu0
    %2319 = vmatpush.bf16.msra.mxu0 %v847
    %2320 = vmatpush.bf16.msra.mxu0 %v838
    %2321 = vmatpush.bf16.msra.mxu0 %v829
    %2322 = vmatpush.bf16.msra.mxu0 %v820
    %2323 = vmatpush.bf16.msra.mxu0 %v811
    %2324 = vmatpush.bf16.msra.mxu0 %v802
    %2325 = vmatpush.bf16.msra.mxu0 %v793
    %2326 = vmatpush.bf16.msra.mxu0 %v784
    %2327 = vmatmul.bf16.gmra.mxu0 %v2135
    %v2328 = vpop.f32.mrf.mxu0
    %v2329 = vadd.f32 %v2315, %v2328
    %v2330 = vpop.f32.mrf.mxu0
    %v2331 = vadd.f32 %v2317, %v2330
    %2332 = vdwg.mxu0
    %2333 = vmatpush.bf16.msra.mxu0 %v776
    %2334 = vmatpush.bf16.msra.mxu0 %v767
    %2335 = vmatpush.bf16.msra.mxu0 %v758
    %2336 = vmatpush.bf16.msra.mxu0 %v749
    %2337 = vmatpush.bf16.msra.mxu0 %v740
    %2338 = vmatpush.bf16.msra.mxu0 %v731
    %2339 = vmatpush.bf16.msra.mxu0 %v722
    %2340 = vmatpush.bf16.msra.mxu0 %v713
    %2341 = vmatmul.bf16.gmra.mxu0 %v2129
    %v2342 = vpop.f32.mrf.mxu0
    %v2343 = vadd.f32 0.0, %v2342
    %v2344 = vpop.f32.mrf.mxu0
    %v2345 = vadd.f32 0.0, %v2344
    %2346 = vdwg.mxu0
    %2347 = vmatpush.bf16.msra.mxu0 %v848
    %2348 = vmatpush.bf16.msra.mxu0 %v839
    %2349 = vmatpush.bf16.msra.mxu0 %v830
    %2350 = vmatpush.bf16.msra.mxu0 %v821
    %2351 = vmatpush.bf16.msra.mxu0 %v812
    %2352 = vmatpush.bf16.msra.mxu0 %v803
    %2353 = vmatpush.bf16.msra.mxu0 %v794
    %2354 = vmatpush.bf16.msra.mxu0 %v785
    %2355 = vmatmul.bf16.gmra.mxu0 %v2135
    %v2356 = vpop.f32.mrf.mxu0
    %v2357 = vadd.f32 %v2343, %v2356
    %v2358 = vpop.f32.mrf.mxu0
    %v2359 = vadd.f32 %v2345, %v2358
    %2360 = vdwg.mxu0
    %2361 = vmatpush.bf16.msra.mxu0 %v777
    %2362 = vmatpush.bf16.msra.mxu0 %v768
    %2363 = vmatpush.bf16.msra.mxu0 %v759
    %2364 = vmatpush.bf16.msra.mxu0 %v750
    %2365 = vmatpush.bf16.msra.mxu0 %v741
    %2366 = vmatpush.bf16.msra.mxu0 %v732
    %2367 = vmatpush.bf16.msra.mxu0 %v723
    %2368 = vmatpush.bf16.msra.mxu0 %v714
    %2369 = vmatmul.bf16.gmra.mxu0 %v2129
    %v2370 = vpop.f32.mrf.mxu0
    %v2371 = vadd.f32 0.0, %v2370
    %v2372 = vpop.f32.mrf.mxu0
    %v2373 = vadd.f32 0.0, %v2372
    %2374 = vdwg.mxu0
    %2375 = vmatpush.bf16.msra.mxu0 %v849
    %2376 = vmatpush.bf16.msra.mxu0 %v840
    %2377 = vmatpush.bf16.msra.mxu0 %v831
    %2378 = vmatpush.bf16.msra.mxu0 %v822
    %2379 = vmatpush.bf16.msra.mxu0 %v813
    %2380 = vmatpush.bf16.msra.mxu0 %v804
    %2381 = vmatpush.bf16.msra.mxu0 %v795
    %2382 = vmatpush.bf16.msra.mxu0 %v786
    %2383 = vmatmul.bf16.gmra.mxu0 %v2135
    %v2384 = vpop.f32.mrf.mxu0
    %v2385 = vadd.f32 %v2371, %v2384
    %v2386 = vpop.f32.mrf.mxu0
    %v2387 = vadd.f32 %v2373, %v2386
    %2388 = vdwg.mxu0
    %v2389 = vadd.f32 %v2245, %v224
    %v2390 = vadd.f32 %v2273, %v225
    %v2391 = vadd.f32 %v2301, %v226
    %v2392 = vadd.f32 %v2247, %v224
    %v2393 = vadd.f32 %v2275, %v225
    %v2394 = vadd.f32 %v2303, %v226
    %v2395 = vadd.f32 %v2389, %v2329
    %v2396 = vadd.f32 %v2392, %v2331
    %v2397 = vmul.f32 %v2395, 0.5
    %v2398 = vmul.f32 %v2396, 0.5
    %v2399 = vtanh.pop %v2397
    %v2400 = vtanh.pop %v2398
    %v2401 = vadd.f32 %v2399, 1.0
    %v2402 = vadd.f32 %v2400, 1.0
    %v2403 = vmul.f32 %v2401, 0.5
    %v2404 = vmul.f32 %v2402, 0.5
    %v2405 = vadd.f32 %v2390, %v2357
    %v2406 = vadd.f32 %v2393, %v2359
    %v2407 = vmul.f32 %v2405, 0.5
    %v2408 = vmul.f32 %v2406, 0.5
    %v2409 = vtanh.pop %v2407
    %v2410 = vtanh.pop %v2408
    %v2411 = vadd.f32 %v2409, 1.0
    %v2412 = vadd.f32 %v2410, 1.0
    %v2413 = vmul.f32 %v2411, 0.5
    %v2414 = vmul.f32 %v2412, 0.5
    %v2415 = vadd.f32 %v2385, %v236
    %v2416 = vadd.f32 %v2387, %v236
    %v2417 = vmul.f32 %v2403, %v2415
    %v2418 = vmul.f32 %v2404, %v2416
    %v2419 = vadd.f32 %v2391, %v2417
    %v2420 = vadd.f32 %v2394, %v2418
    %v2421 = vtanh.pop %v2419
    %v2422 = vtanh.pop %v2420
    %v2423 = vsub.f32 1.0, %v2413
    %v2424 = vsub.f32 1.0, %v2414
    %v2425 = vmul.f32 %v2423, %v2421
    %v2426 = vmul.f32 %v2424, %v2422
    %v2427 = vmul.f32 %v2413, %v2056
    %v2428 = vmul.f32 %v2414, %v2057
    %v2429 = vadd.f32 %v2425, %v2427
    %v2430 = vadd.f32 %v2426, %v2428
    %v2431 = vsel %vm2117, %v2429, %v2056
    %v2432 = vsel %vm2118, %v2430, %v2057
    %s2433 = sadd.s32 %s51, 3
    %v2434 = vstv %s2433
    %vm2435 = vcmp.gt.s32.totalorder %v60, %v2434
    %vm2436 = vcmp.gt.s32.totalorder %v61, %v2434
    %s2437 = scalar_lea.vmem %s1, 72
    %v2438 = vld [vmem:[%s2437] sm:$0xff]
    %v2439 = vld [vmem:[%s2437 + $0x8] sm:$0xf]
    %v2440 = vld [vmem:[%s2437 + $0xc] sm:$0xff]
    %v2441 = vld [vmem:[%s2437 + $0x14] sm:$0xf]
    %v2442 = vunpack.c.l.bf16 %v2438
    %v2443 = vunpack.c.h.bf16 %v2438
    %v2444 = vunpack.c.l.bf16 %v2439
    %v2445 = vunpack.c.l.bf16 %v2440
    %v2446 = vunpack.c.h.bf16 %v2440
    %v2447 = vunpack.c.l.bf16 %v2441
    %v2448 = vadd.f32 %v2442, %v2161
    %v2449 = vadd.f32 %v2445, %v2163
    %v2450 = vmul.f32 %v2448, 0.5
    %v2451 = vmul.f32 %v2449, 0.5
    %v2452 = vtanh.pop %v2450
    %v2453 = vtanh.pop %v2451
    %v2454 = vadd.f32 %v2452, 1.0
    %v2455 = vadd.f32 %v2453, 1.0
    %v2456 = vmul.f32 %v2454, 0.5
    %v2457 = vmul.f32 %v2455, 0.5
    %v2458 = vadd.f32 %v2443, %v2189
    %v2459 = vadd.f32 %v2446, %v2191
    %v2460 = vmul.f32 %v2458, 0.5
    %v2461 = vmul.f32 %v2459, 0.5
    %v2462 = vtanh.pop %v2460
    %v2463 = vtanh.pop %v2461
    %v2464 = vadd.f32 %v2462, 1.0
    %v2465 = vadd.f32 %v2463, 1.0
    %v2466 = vmul.f32 %v2464, 0.5
    %v2467 = vmul.f32 %v2465, 0.5
    %v2468 = vadd.f32 %v2217, %v232
    %v2469 = vadd.f32 %v2219, %v232
    %v2470 = vmul.f32 %v2456, %v2468
    %v2471 = vmul.f32 %v2457, %v2469
    %v2472 = vadd.f32 %v2444, %v2470
    %v2473 = vadd.f32 %v2447, %v2471
    %v2474 = vtanh.pop %v2472
    %v2475 = vtanh.pop %v2473
    %v2476 = vsub.f32 1.0, %v2466
    %v2477 = vsub.f32 1.0, %v2467
    %v2478 = vmul.f32 %v2476, %v2474
    %v2479 = vmul.f32 %v2477, %v2475
    %v2480 = vmul.f32 %v2466, %v2119
    %v2481 = vmul.f32 %v2467, %v2120
    %v2482 = vadd.f32 %v2478, %v2480
    %v2483 = vadd.f32 %v2479, %v2481
    %v2484 = vsel %vm2435, 1, 0
    %v2485 = vsel %vm2436, 1, 0
    %2486 = vset.pattern.permute.xlu0 0
    %2487 = vperm.xlu0 %2486, %v2484
    %v2488 = vpop.permute.xlu0 %2487
    %2489 = vset.pattern.permute.xlu0 0
    %2490 = vperm.xlu0 %2489, %v2485
    %v2491 = vpop.permute.xlu0 %2490
    %vm2492 = vcmp.eq.s32.totalorder %v2488, 1
    %vm2493 = vcmp.eq.s32.totalorder %v2491, 1
    %v2494 = vsel %vm2492, %v2482, %v2119
    %v2495 = vsel %vm2493, %v2483, %v2120
    %v2496 = vpack.c.bf16 %v2494, %v2494
    %v2497 = vpack.c.bf16 %v2495, %v2495
    %v2498 = vpack.c.bf16 %v2431, %v2431
    %v2499 = vpack.c.bf16 %v2432, %v2432
    %v2502 = vunpack.c.l.b16 %v2496
    %v2503 = vunpack.c.l.b16 %v2497
    %v2504 = vpack.c.b16 %v2503, %v2502
    %v2508 = vunpack.c.l.b16 %v2498
    %v2509 = vunpack.c.l.b16 %v2499
    %v2510 = vpack.c.b16 %v2509, %v2508
    %2512 = vmatpush.bf16.msra.mxu0 %v769
    %2513 = vmatpush.bf16.msra.mxu0 %v760
    %2514 = vmatpush.bf16.msra.mxu0 %v751
    %2515 = vmatpush.bf16.msra.mxu0 %v742
    %2516 = vmatpush.bf16.msra.mxu0 %v733
    %2517 = vmatpush.bf16.msra.mxu0 %v724
    %2518 = vmatpush.bf16.msra.mxu0 %v715
    %2519 = vmatpush.bf16.msra.mxu0 %v706
    %2520 = vmatmul.bf16.gmra.mxu0 %v2504
    %v2521 = vpop.f32.mrf.mxu0
    %v2522 = vadd.f32 0.0, %v2521
    %v2523 = vpop.f32.mrf.mxu0
    %v2524 = vadd.f32 0.0, %v2523
    %2525 = vdwg.mxu0
    %2526 = vmatpush.bf16.msra.mxu0 %v841
    %2527 = vmatpush.bf16.msra.mxu0 %v832
    %2528 = vmatpush.bf16.msra.mxu0 %v823
    %2529 = vmatpush.bf16.msra.mxu0 %v814
    %2530 = vmatpush.bf16.msra.mxu0 %v805
    %2531 = vmatpush.bf16.msra.mxu0 %v796
    %2532 = vmatpush.bf16.msra.mxu0 %v787
    %2533 = vmatpush.bf16.msra.mxu0 %v778
    %2534 = vmatmul.bf16.gmra.mxu0 %v2510
    %v2535 = vpop.f32.mrf.mxu0
    %v2536 = vadd.f32 %v2522, %v2535
    %v2537 = vpop.f32.mrf.mxu0
    %v2538 = vadd.f32 %v2524, %v2537
    %2539 = vdwg.mxu0
    %2540 = vmatpush.bf16.msra.mxu0 %v770
    %2541 = vmatpush.bf16.msra.mxu0 %v761
    %2542 = vmatpush.bf16.msra.mxu0 %v752
    %2543 = vmatpush.bf16.msra.mxu0 %v743
    %2544 = vmatpush.bf16.msra.mxu0 %v734
    %2545 = vmatpush.bf16.msra.mxu0 %v725
    %2546 = vmatpush.bf16.msra.mxu0 %v716
    %2547 = vmatpush.bf16.msra.mxu0 %v707
    %2548 = vmatmul.bf16.gmra.mxu0 %v2504
    %v2549 = vpop.f32.mrf.mxu0
    %v2550 = vadd.f32 0.0, %v2549
    %v2551 = vpop.f32.mrf.mxu0
    %v2552 = vadd.f32 0.0, %v2551
    %2553 = vdwg.mxu0
    %2554 = vmatpush.bf16.msra.mxu0 %v842
    %2555 = vmatpush.bf16.msra.mxu0 %v833
    %2556 = vmatpush.bf16.msra.mxu0 %v824
    %2557 = vmatpush.bf16.msra.mxu0 %v815
    %2558 = vmatpush.bf16.msra.mxu0 %v806
    %2559 = vmatpush.bf16.msra.mxu0 %v797
    %2560 = vmatpush.bf16.msra.mxu0 %v788
    %2561 = vmatpush.bf16.msra.mxu0 %v779
    %2562 = vmatmul.bf16.gmra.mxu0 %v2510
    %v2563 = vpop.f32.mrf.mxu0
    %v2564 = vadd.f32 %v2550, %v2563
    %v2565 = vpop.f32.mrf.mxu0
    %v2566 = vadd.f32 %v2552, %v2565
    %2567 = vdwg.mxu0
    %2568 = vmatpush.bf16.msra.mxu0 %v771
    %2569 = vmatpush.bf16.msra.mxu0 %v762
    %2570 = vmatpush.bf16.msra.mxu0 %v753
    %2571 = vmatpush.bf16.msra.mxu0 %v744
    %2572 = vmatpush.bf16.msra.mxu0 %v735
    %2573 = vmatpush.bf16.msra.mxu0 %v726
    %2574 = vmatpush.bf16.msra.mxu0 %v717
    %2575 = vmatpush.bf16.msra.mxu0 %v708
    %2576 = vmatmul.bf16.gmra.mxu0 %v2504
    %v2577 = vpop.f32.mrf.mxu0
    %v2578 = vadd.f32 0.0, %v2577
    %v2579 = vpop.f32.mrf.mxu0
    %v2580 = vadd.f32 0.0, %v2579
    %2581 = vdwg.mxu0
    %2582 = vmatpush.bf16.msra.mxu0 %v843
    %2583 = vmatpush.bf16.msra.mxu0 %v834
    %2584 = vmatpush.bf16.msra.mxu0 %v825
    %2585 = vmatpush.bf16.msra.mxu0 %v816
    %2586 = vmatpush.bf16.msra.mxu0 %v807
    %2587 = vmatpush.bf16.msra.mxu0 %v798
    %2588 = vmatpush.bf16.msra.mxu0 %v789
    %2589 = vmatpush.bf16.msra.mxu0 %v780
    %2590 = vmatmul.bf16.gmra.mxu0 %v2510
    %v2591 = vpop.f32.mrf.mxu0
    %v2592 = vadd.f32 %v2578, %v2591
    %v2593 = vpop.f32.mrf.mxu0
    %v2594 = vadd.f32 %v2580, %v2593
    %2595 = vdwg.mxu0
    %2596 = vmatpush.bf16.msra.mxu0 %v772
    %2597 = vmatpush.bf16.msra.mxu0 %v763
    %2598 = vmatpush.bf16.msra.mxu0 %v754
    %2599 = vmatpush.bf16.msra.mxu0 %v745
    %2600 = vmatpush.bf16.msra.mxu0 %v736
    %2601 = vmatpush.bf16.msra.mxu0 %v727
    %2602 = vmatpush.bf16.msra.mxu0 %v718
    %2603 = vmatpush.bf16.msra.mxu0 %v709
    %2604 = vmatmul.bf16.gmra.mxu0 %v2504
    %v2605 = vpop.f32.mrf.mxu0
    %v2606 = vadd.f32 0.0, %v2605
    %v2607 = vpop.f32.mrf.mxu0
    %v2608 = vadd.f32 0.0, %v2607
    %2609 = vdwg.mxu0
    %2610 = vmatpush.bf16.msra.mxu0 %v844
    %2611 = vmatpush.bf16.msra.mxu0 %v835
    %2612 = vmatpush.bf16.msra.mxu0 %v826
    %2613 = vmatpush.bf16.msra.mxu0 %v817
    %2614 = vmatpush.bf16.msra.mxu0 %v808
    %2615 = vmatpush.bf16.msra.mxu0 %v799
    %2616 = vmatpush.bf16.msra.mxu0 %v790
    %2617 = vmatpush.bf16.msra.mxu0 %v781
    %2618 = vmatmul.bf16.gmra.mxu0 %v2510
    %v2619 = vpop.f32.mrf.mxu0
    %v2620 = vadd.f32 %v2606, %v2619
    %v2621 = vpop.f32.mrf.mxu0
    %v2622 = vadd.f32 %v2608, %v2621
    %2623 = vdwg.mxu0
    %2624 = vmatpush.bf16.msra.mxu0 %v773
    %2625 = vmatpush.bf16.msra.mxu0 %v764
    %2626 = vmatpush.bf16.msra.mxu0 %v755
    %2627 = vmatpush.bf16.msra.mxu0 %v746
    %2628 = vmatpush.bf16.msra.mxu0 %v737
    %2629 = vmatpush.bf16.msra.mxu0 %v728
    %2630 = vmatpush.bf16.msra.mxu0 %v719
    %2631 = vmatpush.bf16.msra.mxu0 %v710
    %2632 = vmatmul.bf16.gmra.mxu0 %v2504
    %v2633 = vpop.f32.mrf.mxu0
    %v2634 = vadd.f32 0.0, %v2633
    %v2635 = vpop.f32.mrf.mxu0
    %v2636 = vadd.f32 0.0, %v2635
    %2637 = vdwg.mxu0
    %2638 = vmatpush.bf16.msra.mxu0 %v845
    %2639 = vmatpush.bf16.msra.mxu0 %v836
    %2640 = vmatpush.bf16.msra.mxu0 %v827
    %2641 = vmatpush.bf16.msra.mxu0 %v818
    %2642 = vmatpush.bf16.msra.mxu0 %v809
    %2643 = vmatpush.bf16.msra.mxu0 %v800
    %2644 = vmatpush.bf16.msra.mxu0 %v791
    %2645 = vmatpush.bf16.msra.mxu0 %v782
    %2646 = vmatmul.bf16.gmra.mxu0 %v2510
    %v2647 = vpop.f32.mrf.mxu0
    %v2648 = vadd.f32 %v2634, %v2647
    %v2649 = vpop.f32.mrf.mxu0
    %v2650 = vadd.f32 %v2636, %v2649
    %2651 = vdwg.mxu0
    %2652 = vmatpush.bf16.msra.mxu0 %v774
    %2653 = vmatpush.bf16.msra.mxu0 %v765
    %2654 = vmatpush.bf16.msra.mxu0 %v756
    %2655 = vmatpush.bf16.msra.mxu0 %v747
    %2656 = vmatpush.bf16.msra.mxu0 %v738
    %2657 = vmatpush.bf16.msra.mxu0 %v729
    %2658 = vmatpush.bf16.msra.mxu0 %v720
    %2659 = vmatpush.bf16.msra.mxu0 %v711
    %2660 = vmatmul.bf16.gmra.mxu0 %v2504
    %v2661 = vpop.f32.mrf.mxu0
    %v2662 = vadd.f32 0.0, %v2661
    %v2663 = vpop.f32.mrf.mxu0
    %v2664 = vadd.f32 0.0, %v2663
    %2665 = vdwg.mxu0
    %2666 = vmatpush.bf16.msra.mxu0 %v846
    %2667 = vmatpush.bf16.msra.mxu0 %v837
    %2668 = vmatpush.bf16.msra.mxu0 %v828
    %2669 = vmatpush.bf16.msra.mxu0 %v819
    %2670 = vmatpush.bf16.msra.mxu0 %v810
    %2671 = vmatpush.bf16.msra.mxu0 %v801
    %2672 = vmatpush.bf16.msra.mxu0 %v792
    %2673 = vmatpush.bf16.msra.mxu0 %v783
    %2674 = vmatmul.bf16.gmra.mxu0 %v2510
    %v2675 = vpop.f32.mrf.mxu0
    %v2676 = vadd.f32 %v2662, %v2675
    %v2677 = vpop.f32.mrf.mxu0
    %v2678 = vadd.f32 %v2664, %v2677
    %2679 = vdwg.mxu0
    %2680 = vmatpush.bf16.msra.mxu0 %v775
    %2681 = vmatpush.bf16.msra.mxu0 %v766
    %2682 = vmatpush.bf16.msra.mxu0 %v757
    %2683 = vmatpush.bf16.msra.mxu0 %v748
    %2684 = vmatpush.bf16.msra.mxu0 %v739
    %2685 = vmatpush.bf16.msra.mxu0 %v730
    %2686 = vmatpush.bf16.msra.mxu0 %v721
    %2687 = vmatpush.bf16.msra.mxu0 %v712
    %2688 = vmatmul.bf16.gmra.mxu0 %v2504
    %v2689 = vpop.f32.mrf.mxu0
    %v2690 = vadd.f32 0.0, %v2689
    %v2691 = vpop.f32.mrf.mxu0
    %v2692 = vadd.f32 0.0, %v2691
    %2693 = vdwg.mxu0
    %2694 = vmatpush.bf16.msra.mxu0 %v847
    %2695 = vmatpush.bf16.msra.mxu0 %v838
    %2696 = vmatpush.bf16.msra.mxu0 %v829
    %2697 = vmatpush.bf16.msra.mxu0 %v820
    %2698 = vmatpush.bf16.msra.mxu0 %v811
    %2699 = vmatpush.bf16.msra.mxu0 %v802
    %2700 = vmatpush.bf16.msra.mxu0 %v793
    %2701 = vmatpush.bf16.msra.mxu0 %v784
    %2702 = vmatmul.bf16.gmra.mxu0 %v2510
    %v2703 = vpop.f32.mrf.mxu0
    %v2704 = vadd.f32 %v2690, %v2703
    %v2705 = vpop.f32.mrf.mxu0
    %v2706 = vadd.f32 %v2692, %v2705
    %2707 = vdwg.mxu0
    %2708 = vmatpush.bf16.msra.mxu0 %v776
    %2709 = vmatpush.bf16.msra.mxu0 %v767
    %2710 = vmatpush.bf16.msra.mxu0 %v758
    %2711 = vmatpush.bf16.msra.mxu0 %v749
    %2712 = vmatpush.bf16.msra.mxu0 %v740
    %2713 = vmatpush.bf16.msra.mxu0 %v731
    %2714 = vmatpush.bf16.msra.mxu0 %v722
    %2715 = vmatpush.bf16.msra.mxu0 %v713
    %2716 = vmatmul.bf16.gmra.mxu0 %v2504
    %v2717 = vpop.f32.mrf.mxu0
    %v2718 = vadd.f32 0.0, %v2717
    %v2719 = vpop.f32.mrf.mxu0
    %v2720 = vadd.f32 0.0, %v2719
    %2721 = vdwg.mxu0
    %2722 = vmatpush.bf16.msra.mxu0 %v848
    %2723 = vmatpush.bf16.msra.mxu0 %v839
    %2724 = vmatpush.bf16.msra.mxu0 %v830
    %2725 = vmatpush.bf16.msra.mxu0 %v821
    %2726 = vmatpush.bf16.msra.mxu0 %v812
    %2727 = vmatpush.bf16.msra.mxu0 %v803
    %2728 = vmatpush.bf16.msra.mxu0 %v794
    %2729 = vmatpush.bf16.msra.mxu0 %v785
    %2730 = vmatmul.bf16.gmra.mxu0 %v2510
    %v2731 = vpop.f32.mrf.mxu0
    %v2732 = vadd.f32 %v2718, %v2731
    %v2733 = vpop.f32.mrf.mxu0
    %v2734 = vadd.f32 %v2720, %v2733
    %2735 = vdwg.mxu0
    %2736 = vmatpush.bf16.msra.mxu0 %v777
    %2737 = vmatpush.bf16.msra.mxu0 %v768
    %2738 = vmatpush.bf16.msra.mxu0 %v759
    %2739 = vmatpush.bf16.msra.mxu0 %v750
    %2740 = vmatpush.bf16.msra.mxu0 %v741
    %2741 = vmatpush.bf16.msra.mxu0 %v732
    %2742 = vmatpush.bf16.msra.mxu0 %v723
    %2743 = vmatpush.bf16.msra.mxu0 %v714
    %2744 = vmatmul.bf16.gmra.mxu0 %v2504
    %v2745 = vpop.f32.mrf.mxu0
    %v2746 = vadd.f32 0.0, %v2745
    %v2747 = vpop.f32.mrf.mxu0
    %v2748 = vadd.f32 0.0, %v2747
    %2749 = vdwg.mxu0
    %2750 = vmatpush.bf16.msra.mxu0 %v849
    %2751 = vmatpush.bf16.msra.mxu0 %v840
    %2752 = vmatpush.bf16.msra.mxu0 %v831
    %2753 = vmatpush.bf16.msra.mxu0 %v822
    %2754 = vmatpush.bf16.msra.mxu0 %v813
    %2755 = vmatpush.bf16.msra.mxu0 %v804
    %2756 = vmatpush.bf16.msra.mxu0 %v795
    %2757 = vmatpush.bf16.msra.mxu0 %v786
    %2758 = vmatmul.bf16.gmra.mxu0 %v2510
    %v2759 = vpop.f32.mrf.mxu0
    %v2760 = vadd.f32 %v2746, %v2759
    %v2761 = vpop.f32.mrf.mxu0
    %v2762 = vadd.f32 %v2748, %v2761
    %2763 = vdwg.mxu0
    %v2764 = vadd.f32 %v2620, %v224
    %v2765 = vadd.f32 %v2648, %v225
    %v2766 = vadd.f32 %v2676, %v226
    %v2767 = vadd.f32 %v2622, %v224
    %v2768 = vadd.f32 %v2650, %v225
    %v2769 = vadd.f32 %v2678, %v226
    %v2770 = vadd.f32 %v2764, %v2704
    %v2771 = vadd.f32 %v2767, %v2706
    %v2772 = vmul.f32 %v2770, 0.5
    %v2773 = vmul.f32 %v2771, 0.5
    %v2774 = vtanh.pop %v2772
    %v2775 = vtanh.pop %v2773
    %v2776 = vadd.f32 %v2774, 1.0
    %v2777 = vadd.f32 %v2775, 1.0
    %v2778 = vmul.f32 %v2776, 0.5
    %v2779 = vmul.f32 %v2777, 0.5
    %v2780 = vadd.f32 %v2765, %v2732
    %v2781 = vadd.f32 %v2768, %v2734
    %v2782 = vmul.f32 %v2780, 0.5
    %v2783 = vmul.f32 %v2781, 0.5
    %v2784 = vtanh.pop %v2782
    %v2785 = vtanh.pop %v2783
    %v2786 = vadd.f32 %v2784, 1.0
    %v2787 = vadd.f32 %v2785, 1.0
    %v2788 = vmul.f32 %v2786, 0.5
    %v2789 = vmul.f32 %v2787, 0.5
    %v2790 = vadd.f32 %v2760, %v236
    %v2791 = vadd.f32 %v2762, %v236
    %v2792 = vmul.f32 %v2778, %v2790
    %v2793 = vmul.f32 %v2779, %v2791
    %v2794 = vadd.f32 %v2766, %v2792
    %v2795 = vadd.f32 %v2769, %v2793
    %v2796 = vtanh.pop %v2794
    %v2797 = vtanh.pop %v2795
    %v2798 = vsub.f32 1.0, %v2788
    %v2799 = vsub.f32 1.0, %v2789
    %v2800 = vmul.f32 %v2798, %v2796
    %v2801 = vmul.f32 %v2799, %v2797
    %v2802 = vmul.f32 %v2788, %v2431
    %v2803 = vmul.f32 %v2789, %v2432
    %v2804 = vadd.f32 %v2800, %v2802
    %v2805 = vadd.f32 %v2801, %v2803
    %v2806 = vsel %vm2492, %v2804, %v2431
    %v2807 = vsel %vm2493, %v2805, %v2432
    %s2808 = sadd.s32 %s51, 4
    %v2809 = vstv %s2808
    %vm2810 = vcmp.gt.s32.totalorder %v60, %v2809
    %vm2811 = vcmp.gt.s32.totalorder %v61, %v2809
    %s2812 = scalar_lea.vmem %s1, 96
    %v2813 = vld [vmem:[%s2812] sm:$0xff]
    %v2814 = vld [vmem:[%s2812 + $0x8] sm:$0xf]
    %v2815 = vld [vmem:[%s2812 + $0xc] sm:$0xff]
    %v2816 = vld [vmem:[%s2812 + $0x14] sm:$0xf]
    %v2817 = vunpack.c.l.bf16 %v2813
    %v2818 = vunpack.c.h.bf16 %v2813
    %v2819 = vunpack.c.l.bf16 %v2814
    %v2820 = vunpack.c.l.bf16 %v2815
    %v2821 = vunpack.c.h.bf16 %v2815
    %v2822 = vunpack.c.l.bf16 %v2816
    %v2823 = vadd.f32 %v2817, %v2536
    %v2824 = vadd.f32 %v2820, %v2538
    %v2825 = vmul.f32 %v2823, 0.5
    %v2826 = vmul.f32 %v2824, 0.5
    %v2827 = vtanh.pop %v2825
    %v2828 = vtanh.pop %v2826
    %v2829 = vadd.f32 %v2827, 1.0
    %v2830 = vadd.f32 %v2828, 1.0
    %v2831 = vmul.f32 %v2829, 0.5
    %v2832 = vmul.f32 %v2830, 0.5
    %v2833 = vadd.f32 %v2818, %v2564
    %v2834 = vadd.f32 %v2821, %v2566
    %v2835 = vmul.f32 %v2833, 0.5
    %v2836 = vmul.f32 %v2834, 0.5
    %v2837 = vtanh.pop %v2835
    %v2838 = vtanh.pop %v2836
    %v2839 = vadd.f32 %v2837, 1.0
    %v2840 = vadd.f32 %v2838, 1.0
    %v2841 = vmul.f32 %v2839, 0.5
    %v2842 = vmul.f32 %v2840, 0.5
    %v2843 = vadd.f32 %v2592, %v232
    %v2844 = vadd.f32 %v2594, %v232
    %v2845 = vmul.f32 %v2831, %v2843
    %v2846 = vmul.f32 %v2832, %v2844
    %v2847 = vadd.f32 %v2819, %v2845
    %v2848 = vadd.f32 %v2822, %v2846
    %v2849 = vtanh.pop %v2847
    %v2850 = vtanh.pop %v2848
    %v2851 = vsub.f32 1.0, %v2841
    %v2852 = vsub.f32 1.0, %v2842
    %v2853 = vmul.f32 %v2851, %v2849
    %v2854 = vmul.f32 %v2852, %v2850
    %v2855 = vmul.f32 %v2841, %v2494
    %v2856 = vmul.f32 %v2842, %v2495
    %v2857 = vadd.f32 %v2853, %v2855
    %v2858 = vadd.f32 %v2854, %v2856
    %v2859 = vsel %vm2810, 1, 0
    %v2860 = vsel %vm2811, 1, 0
    %2861 = vset.pattern.permute.xlu0 0
    %2862 = vperm.xlu0 %2861, %v2859
    %v2863 = vpop.permute.xlu0 %2862
    %2864 = vset.pattern.permute.xlu0 0
    %2865 = vperm.xlu0 %2864, %v2860
    %v2866 = vpop.permute.xlu0 %2865
    %vm2867 = vcmp.eq.s32.totalorder %v2863, 1
    %vm2868 = vcmp.eq.s32.totalorder %v2866, 1
    %v2869 = vsel %vm2867, %v2857, %v2494
    %v2870 = vsel %vm2868, %v2858, %v2495
    %v2871 = vpack.c.bf16 %v2869, %v2869
    %v2872 = vpack.c.bf16 %v2870, %v2870
    %v2873 = vpack.c.bf16 %v2806, %v2806
    %v2874 = vpack.c.bf16 %v2807, %v2807
    %v2877 = vunpack.c.l.b16 %v2871
    %v2878 = vunpack.c.l.b16 %v2872
    %v2879 = vpack.c.b16 %v2878, %v2877
    %v2883 = vunpack.c.l.b16 %v2873
    %v2884 = vunpack.c.l.b16 %v2874
    %v2885 = vpack.c.b16 %v2884, %v2883
    %2887 = vmatpush.bf16.msra.mxu0 %v769
    %2888 = vmatpush.bf16.msra.mxu0 %v760
    %2889 = vmatpush.bf16.msra.mxu0 %v751
    %2890 = vmatpush.bf16.msra.mxu0 %v742
    %2891 = vmatpush.bf16.msra.mxu0 %v733
    %2892 = vmatpush.bf16.msra.mxu0 %v724
    %2893 = vmatpush.bf16.msra.mxu0 %v715
    %2894 = vmatpush.bf16.msra.mxu0 %v706
    %2895 = vmatmul.bf16.gmra.mxu0 %v2879
    %v2896 = vpop.f32.mrf.mxu0
    %v2897 = vadd.f32 0.0, %v2896
    %v2898 = vpop.f32.mrf.mxu0
    %v2899 = vadd.f32 0.0, %v2898
    %2900 = vdwg.mxu0
    %2901 = vmatpush.bf16.msra.mxu0 %v841
    %2902 = vmatpush.bf16.msra.mxu0 %v832
    %2903 = vmatpush.bf16.msra.mxu0 %v823
    %2904 = vmatpush.bf16.msra.mxu0 %v814
    %2905 = vmatpush.bf16.msra.mxu0 %v805
    %2906 = vmatpush.bf16.msra.mxu0 %v796
    %2907 = vmatpush.bf16.msra.mxu0 %v787
    %2908 = vmatpush.bf16.msra.mxu0 %v778
    %2909 = vmatmul.bf16.gmra.mxu0 %v2885
    %v2910 = vpop.f32.mrf.mxu0
    %v2911 = vadd.f32 %v2897, %v2910
    %v2912 = vpop.f32.mrf.mxu0
    %v2913 = vadd.f32 %v2899, %v2912
    %2914 = vdwg.mxu0
    %2915 = vmatpush.bf16.msra.mxu0 %v770
    %2916 = vmatpush.bf16.msra.mxu0 %v761
    %2917 = vmatpush.bf16.msra.mxu0 %v752
    %2918 = vmatpush.bf16.msra.mxu0 %v743
    %2919 = vmatpush.bf16.msra.mxu0 %v734
    %2920 = vmatpush.bf16.msra.mxu0 %v725
    %2921 = vmatpush.bf16.msra.mxu0 %v716
    %2922 = vmatpush.bf16.msra.mxu0 %v707
    %2923 = vmatmul.bf16.gmra.mxu0 %v2879
    %v2924 = vpop.f32.mrf.mxu0
    %v2925 = vadd.f32 0.0, %v2924
    %v2926 = vpop.f32.mrf.mxu0
    %v2927 = vadd.f32 0.0, %v2926
    %2928 = vdwg.mxu0
    %2929 = vmatpush.bf16.msra.mxu0 %v842
    %2930 = vmatpush.bf16.msra.mxu0 %v833
    %2931 = vmatpush.bf16.msra.mxu0 %v824
    %2932 = vmatpush.bf16.msra.mxu0 %v815
    %2933 = vmatpush.bf16.msra.mxu0 %v806
    %2934 = vmatpush.bf16.msra.mxu0 %v797
    %2935 = vmatpush.bf16.msra.mxu0 %v788
    %2936 = vmatpush.bf16.msra.mxu0 %v779
    %2937 = vmatmul.bf16.gmra.mxu0 %v2885
    %v2938 = vpop.f32.mrf.mxu0
    %v2939 = vadd.f32 %v2925, %v2938
    %v2940 = vpop.f32.mrf.mxu0
    %v2941 = vadd.f32 %v2927, %v2940
    %2942 = vdwg.mxu0
    %2943 = vmatpush.bf16.msra.mxu0 %v771
    %2944 = vmatpush.bf16.msra.mxu0 %v762
    %2945 = vmatpush.bf16.msra.mxu0 %v753
    %2946 = vmatpush.bf16.msra.mxu0 %v744
    %2947 = vmatpush.bf16.msra.mxu0 %v735
    %2948 = vmatpush.bf16.msra.mxu0 %v726
    %2949 = vmatpush.bf16.msra.mxu0 %v717
    %2950 = vmatpush.bf16.msra.mxu0 %v708
    %2951 = vmatmul.bf16.gmra.mxu0 %v2879
    %v2952 = vpop.f32.mrf.mxu0
    %v2953 = vadd.f32 0.0, %v2952
    %v2954 = vpop.f32.mrf.mxu0
    %v2955 = vadd.f32 0.0, %v2954
    %2956 = vdwg.mxu0
    %2957 = vmatpush.bf16.msra.mxu0 %v843
    %2958 = vmatpush.bf16.msra.mxu0 %v834
    %2959 = vmatpush.bf16.msra.mxu0 %v825
    %2960 = vmatpush.bf16.msra.mxu0 %v816
    %2961 = vmatpush.bf16.msra.mxu0 %v807
    %2962 = vmatpush.bf16.msra.mxu0 %v798
    %2963 = vmatpush.bf16.msra.mxu0 %v789
    %2964 = vmatpush.bf16.msra.mxu0 %v780
    %2965 = vmatmul.bf16.gmra.mxu0 %v2885
    %v2966 = vpop.f32.mrf.mxu0
    %v2967 = vadd.f32 %v2953, %v2966
    %v2968 = vpop.f32.mrf.mxu0
    %v2969 = vadd.f32 %v2955, %v2968
    %2970 = vdwg.mxu0
    %2971 = vmatpush.bf16.msra.mxu0 %v772
    %2972 = vmatpush.bf16.msra.mxu0 %v763
    %2973 = vmatpush.bf16.msra.mxu0 %v754
    %2974 = vmatpush.bf16.msra.mxu0 %v745
    %2975 = vmatpush.bf16.msra.mxu0 %v736
    %2976 = vmatpush.bf16.msra.mxu0 %v727
    %2977 = vmatpush.bf16.msra.mxu0 %v718
    %2978 = vmatpush.bf16.msra.mxu0 %v709
    %2979 = vmatmul.bf16.gmra.mxu0 %v2879
    %v2980 = vpop.f32.mrf.mxu0
    %v2981 = vadd.f32 0.0, %v2980
    %v2982 = vpop.f32.mrf.mxu0
    %v2983 = vadd.f32 0.0, %v2982
    %2984 = vdwg.mxu0
    %2985 = vmatpush.bf16.msra.mxu0 %v844
    %2986 = vmatpush.bf16.msra.mxu0 %v835
    %2987 = vmatpush.bf16.msra.mxu0 %v826
    %2988 = vmatpush.bf16.msra.mxu0 %v817
    %2989 = vmatpush.bf16.msra.mxu0 %v808
    %2990 = vmatpush.bf16.msra.mxu0 %v799
    %2991 = vmatpush.bf16.msra.mxu0 %v790
    %2992 = vmatpush.bf16.msra.mxu0 %v781
    %2993 = vmatmul.bf16.gmra.mxu0 %v2885
    %v2994 = vpop.f32.mrf.mxu0
    %v2995 = vadd.f32 %v2981, %v2994
    %v2996 = vpop.f32.mrf.mxu0
    %v2997 = vadd.f32 %v2983, %v2996
    %2998 = vdwg.mxu0
    %2999 = vmatpush.bf16.msra.mxu0 %v773
    %3000 = vmatpush.bf16.msra.mxu0 %v764
    %3001 = vmatpush.bf16.msra.mxu0 %v755
    %3002 = vmatpush.bf16.msra.mxu0 %v746
    %3003 = vmatpush.bf16.msra.mxu0 %v737
    %3004 = vmatpush.bf16.msra.mxu0 %v728
    %3005 = vmatpush.bf16.msra.mxu0 %v719
    %3006 = vmatpush.bf16.msra.mxu0 %v710
    %3007 = vmatmul.bf16.gmra.mxu0 %v2879
    %v3008 = vpop.f32.mrf.mxu0
    %v3009 = vadd.f32 0.0, %v3008
    %v3010 = vpop.f32.mrf.mxu0
    %v3011 = vadd.f32 0.0, %v3010
    %3012 = vdwg.mxu0
    %3013 = vmatpush.bf16.msra.mxu0 %v845
    %3014 = vmatpush.bf16.msra.mxu0 %v836
    %3015 = vmatpush.bf16.msra.mxu0 %v827
    %3016 = vmatpush.bf16.msra.mxu0 %v818
    %3017 = vmatpush.bf16.msra.mxu0 %v809
    %3018 = vmatpush.bf16.msra.mxu0 %v800
    %3019 = vmatpush.bf16.msra.mxu0 %v791
    %3020 = vmatpush.bf16.msra.mxu0 %v782
    %3021 = vmatmul.bf16.gmra.mxu0 %v2885
    %v3022 = vpop.f32.mrf.mxu0
    %v3023 = vadd.f32 %v3009, %v3022
    %v3024 = vpop.f32.mrf.mxu0
    %v3025 = vadd.f32 %v3011, %v3024
    %3026 = vdwg.mxu0
    %3027 = vmatpush.bf16.msra.mxu0 %v774
    %3028 = vmatpush.bf16.msra.mxu0 %v765
    %3029 = vmatpush.bf16.msra.mxu0 %v756
    %3030 = vmatpush.bf16.msra.mxu0 %v747
    %3031 = vmatpush.bf16.msra.mxu0 %v738
    %3032 = vmatpush.bf16.msra.mxu0 %v729
    %3033 = vmatpush.bf16.msra.mxu0 %v720
    %3034 = vmatpush.bf16.msra.mxu0 %v711
    %3035 = vmatmul.bf16.gmra.mxu0 %v2879
    %v3036 = vpop.f32.mrf.mxu0
    %v3037 = vadd.f32 0.0, %v3036
    %v3038 = vpop.f32.mrf.mxu0
    %v3039 = vadd.f32 0.0, %v3038
    %3040 = vdwg.mxu0
    %3041 = vmatpush.bf16.msra.mxu0 %v846
    %3042 = vmatpush.bf16.msra.mxu0 %v837
    %3043 = vmatpush.bf16.msra.mxu0 %v828
    %3044 = vmatpush.bf16.msra.mxu0 %v819
    %3045 = vmatpush.bf16.msra.mxu0 %v810
    %3046 = vmatpush.bf16.msra.mxu0 %v801
    %3047 = vmatpush.bf16.msra.mxu0 %v792
    %3048 = vmatpush.bf16.msra.mxu0 %v783
    %3049 = vmatmul.bf16.gmra.mxu0 %v2885
    %v3050 = vpop.f32.mrf.mxu0
    %v3051 = vadd.f32 %v3037, %v3050
    %v3052 = vpop.f32.mrf.mxu0
    %v3053 = vadd.f32 %v3039, %v3052
    %3054 = vdwg.mxu0
    %3055 = vmatpush.bf16.msra.mxu0 %v775
    %3056 = vmatpush.bf16.msra.mxu0 %v766
    %3057 = vmatpush.bf16.msra.mxu0 %v757
    %3058 = vmatpush.bf16.msra.mxu0 %v748
    %3059 = vmatpush.bf16.msra.mxu0 %v739
    %3060 = vmatpush.bf16.msra.mxu0 %v730
    %3061 = vmatpush.bf16.msra.mxu0 %v721
    %3062 = vmatpush.bf16.msra.mxu0 %v712
    %3063 = vmatmul.bf16.gmra.mxu0 %v2879
    %v3064 = vpop.f32.mrf.mxu0
    %v3065 = vadd.f32 0.0, %v3064
    %v3066 = vpop.f32.mrf.mxu0
    %v3067 = vadd.f32 0.0, %v3066
    %3068 = vdwg.mxu0
    %3069 = vmatpush.bf16.msra.mxu0 %v847
    %3070 = vmatpush.bf16.msra.mxu0 %v838
    %3071 = vmatpush.bf16.msra.mxu0 %v829
    %3072 = vmatpush.bf16.msra.mxu0 %v820
    %3073 = vmatpush.bf16.msra.mxu0 %v811
    %3074 = vmatpush.bf16.msra.mxu0 %v802
    %3075 = vmatpush.bf16.msra.mxu0 %v793
    %3076 = vmatpush.bf16.msra.mxu0 %v784
    %3077 = vmatmul.bf16.gmra.mxu0 %v2885
    %v3078 = vpop.f32.mrf.mxu0
    %v3079 = vadd.f32 %v3065, %v3078
    %v3080 = vpop.f32.mrf.mxu0
    %v3081 = vadd.f32 %v3067, %v3080
    %3082 = vdwg.mxu0
    %3083 = vmatpush.bf16.msra.mxu0 %v776
    %3084 = vmatpush.bf16.msra.mxu0 %v767
    %3085 = vmatpush.bf16.msra.mxu0 %v758
    %3086 = vmatpush.bf16.msra.mxu0 %v749
    %3087 = vmatpush.bf16.msra.mxu0 %v740
    %3088 = vmatpush.bf16.msra.mxu0 %v731
    %3089 = vmatpush.bf16.msra.mxu0 %v722
    %3090 = vmatpush.bf16.msra.mxu0 %v713
    %3091 = vmatmul.bf16.gmra.mxu0 %v2879
    %v3092 = vpop.f32.mrf.mxu0
    %v3093 = vadd.f32 0.0, %v3092
    %v3094 = vpop.f32.mrf.mxu0
    %v3095 = vadd.f32 0.0, %v3094
    %3096 = vdwg.mxu0
    %3097 = vmatpush.bf16.msra.mxu0 %v848
    %3098 = vmatpush.bf16.msra.mxu0 %v839
    %3099 = vmatpush.bf16.msra.mxu0 %v830
    %3100 = vmatpush.bf16.msra.mxu0 %v821
    %3101 = vmatpush.bf16.msra.mxu0 %v812
    %3102 = vmatpush.bf16.msra.mxu0 %v803
    %3103 = vmatpush.bf16.msra.mxu0 %v794
    %3104 = vmatpush.bf16.msra.mxu0 %v785
    %3105 = vmatmul.bf16.gmra.mxu0 %v2885
    %v3106 = vpop.f32.mrf.mxu0
    %v3107 = vadd.f32 %v3093, %v3106
    %v3108 = vpop.f32.mrf.mxu0
    %v3109 = vadd.f32 %v3095, %v3108
    %3110 = vdwg.mxu0
    %3111 = vmatpush.bf16.msra.mxu0 %v777
    %3112 = vmatpush.bf16.msra.mxu0 %v768
    %3113 = vmatpush.bf16.msra.mxu0 %v759
    %3114 = vmatpush.bf16.msra.mxu0 %v750
    %3115 = vmatpush.bf16.msra.mxu0 %v741
    %3116 = vmatpush.bf16.msra.mxu0 %v732
    %3117 = vmatpush.bf16.msra.mxu0 %v723
    %3118 = vmatpush.bf16.msra.mxu0 %v714
    %3119 = vmatmul.bf16.gmra.mxu0 %v2879
    %v3120 = vpop.f32.mrf.mxu0
    %v3121 = vadd.f32 0.0, %v3120
    %v3122 = vpop.f32.mrf.mxu0
    %v3123 = vadd.f32 0.0, %v3122
    %3124 = vdwg.mxu0
    %3125 = vmatpush.bf16.msra.mxu0 %v849
    %3126 = vmatpush.bf16.msra.mxu0 %v840
    %3127 = vmatpush.bf16.msra.mxu0 %v831
    %3128 = vmatpush.bf16.msra.mxu0 %v822
    %3129 = vmatpush.bf16.msra.mxu0 %v813
    %3130 = vmatpush.bf16.msra.mxu0 %v804
    %3131 = vmatpush.bf16.msra.mxu0 %v795
    %3132 = vmatpush.bf16.msra.mxu0 %v786
    %3133 = vmatmul.bf16.gmra.mxu0 %v2885
    %v3134 = vpop.f32.mrf.mxu0
    %v3135 = vadd.f32 %v3121, %v3134
    %v3136 = vpop.f32.mrf.mxu0
    %v3137 = vadd.f32 %v3123, %v3136
    %3138 = vdwg.mxu0
    %v3139 = vadd.f32 %v2995, %v224
    %v3140 = vadd.f32 %v3023, %v225
    %v3141 = vadd.f32 %v3051, %v226
    %v3142 = vadd.f32 %v2997, %v224
    %v3143 = vadd.f32 %v3025, %v225
    %v3144 = vadd.f32 %v3053, %v226
    %v3145 = vadd.f32 %v3139, %v3079
    %v3146 = vadd.f32 %v3142, %v3081
    %v3147 = vmul.f32 %v3145, 0.5
    %v3148 = vmul.f32 %v3146, 0.5
    %v3149 = vtanh.pop %v3147
    %v3150 = vtanh.pop %v3148
    %v3151 = vadd.f32 %v3149, 1.0
    %v3152 = vadd.f32 %v3150, 1.0
    %v3153 = vmul.f32 %v3151, 0.5
    %v3154 = vmul.f32 %v3152, 0.5
    %v3155 = vadd.f32 %v3140, %v3107
    %v3156 = vadd.f32 %v3143, %v3109
    %v3157 = vmul.f32 %v3155, 0.5
    %v3158 = vmul.f32 %v3156, 0.5
    %v3159 = vtanh.pop %v3157
    %v3160 = vtanh.pop %v3158
    %v3161 = vadd.f32 %v3159, 1.0
    %v3162 = vadd.f32 %v3160, 1.0
    %v3163 = vmul.f32 %v3161, 0.5
    %v3164 = vmul.f32 %v3162, 0.5
    %v3165 = vadd.f32 %v3135, %v236
    %v3166 = vadd.f32 %v3137, %v236
    %v3167 = vmul.f32 %v3153, %v3165
    %v3168 = vmul.f32 %v3154, %v3166
    %v3169 = vadd.f32 %v3141, %v3167
    %v3170 = vadd.f32 %v3144, %v3168
    %v3171 = vtanh.pop %v3169
    %v3172 = vtanh.pop %v3170
    %v3173 = vsub.f32 1.0, %v3163
    %v3174 = vsub.f32 1.0, %v3164
    %v3175 = vmul.f32 %v3173, %v3171
    %v3176 = vmul.f32 %v3174, %v3172
    %v3177 = vmul.f32 %v3163, %v2806
    %v3178 = vmul.f32 %v3164, %v2807
    %v3179 = vadd.f32 %v3175, %v3177
    %v3180 = vadd.f32 %v3176, %v3178
    %v3181 = vsel %vm2867, %v3179, %v2806
    %v3182 = vsel %vm2868, %v3180, %v2807
    %s3183 = sadd.s32 %s51, 5
    %v3184 = vstv %s3183
    %vm3185 = vcmp.gt.s32.totalorder %v60, %v3184
    %vm3186 = vcmp.gt.s32.totalorder %v61, %v3184
    %s3187 = scalar_lea.vmem %s1, 120
    %v3188 = vld [vmem:[%s3187] sm:$0xff]
    %v3189 = vld [vmem:[%s3187 + $0x8] sm:$0xf]
    %v3190 = vld [vmem:[%s3187 + $0xc] sm:$0xff]
    %v3191 = vld [vmem:[%s3187 + $0x14] sm:$0xf]
    %v3192 = vunpack.c.l.bf16 %v3188
    %v3193 = vunpack.c.h.bf16 %v3188
    %v3194 = vunpack.c.l.bf16 %v3189
    %v3195 = vunpack.c.l.bf16 %v3190
    %v3196 = vunpack.c.h.bf16 %v3190
    %v3197 = vunpack.c.l.bf16 %v3191
    %v3198 = vadd.f32 %v3192, %v2911
    %v3199 = vadd.f32 %v3195, %v2913
    %v3200 = vmul.f32 %v3198, 0.5
    %v3201 = vmul.f32 %v3199, 0.5
    %v3202 = vtanh.pop %v3200
    %v3203 = vtanh.pop %v3201
    %v3204 = vadd.f32 %v3202, 1.0
    %v3205 = vadd.f32 %v3203, 1.0
    %v3206 = vmul.f32 %v3204, 0.5
    %v3207 = vmul.f32 %v3205, 0.5
    %v3208 = vadd.f32 %v3193, %v2939
    %v3209 = vadd.f32 %v3196, %v2941
    %v3210 = vmul.f32 %v3208, 0.5
    %v3211 = vmul.f32 %v3209, 0.5
    %v3212 = vtanh.pop %v3210
    %v3213 = vtanh.pop %v3211
    %v3214 = vadd.f32 %v3212, 1.0
    %v3215 = vadd.f32 %v3213, 1.0
    %v3216 = vmul.f32 %v3214, 0.5
    %v3217 = vmul.f32 %v3215, 0.5
    %v3218 = vadd.f32 %v2967, %v232
    %v3219 = vadd.f32 %v2969, %v232
    %v3220 = vmul.f32 %v3206, %v3218
    %v3221 = vmul.f32 %v3207, %v3219
    %v3222 = vadd.f32 %v3194, %v3220
    %v3223 = vadd.f32 %v3197, %v3221
    %v3224 = vtanh.pop %v3222
    %v3225 = vtanh.pop %v3223
    %v3226 = vsub.f32 1.0, %v3216
    %v3227 = vsub.f32 1.0, %v3217
    %v3228 = vmul.f32 %v3226, %v3224
    %v3229 = vmul.f32 %v3227, %v3225
    %v3230 = vmul.f32 %v3216, %v2869
    %v3231 = vmul.f32 %v3217, %v2870
    %v3232 = vadd.f32 %v3228, %v3230
    %v3233 = vadd.f32 %v3229, %v3231
    %v3234 = vsel %vm3185, 1, 0
    %v3235 = vsel %vm3186, 1, 0
    %3236 = vset.pattern.permute.xlu0 0
    %3237 = vperm.xlu0 %3236, %v3234
    %v3238 = vpop.permute.xlu0 %3237
    %3239 = vset.pattern.permute.xlu0 0
    %3240 = vperm.xlu0 %3239, %v3235
    %v3241 = vpop.permute.xlu0 %3240
    %vm3242 = vcmp.eq.s32.totalorder %v3238, 1
    %vm3243 = vcmp.eq.s32.totalorder %v3241, 1
    %v3244 = vsel %vm3242, %v3232, %v2869
    %v3245 = vsel %vm3243, %v3233, %v2870
    %v3246 = vpack.c.bf16 %v3244, %v3244
    %v3247 = vpack.c.bf16 %v3245, %v3245
    %v3248 = vpack.c.bf16 %v3181, %v3181
    %v3249 = vpack.c.bf16 %v3182, %v3182
    %v3252 = vunpack.c.l.b16 %v3246
    %v3253 = vunpack.c.l.b16 %v3247
    %v3254 = vpack.c.b16 %v3253, %v3252
    %v3258 = vunpack.c.l.b16 %v3248
    %v3259 = vunpack.c.l.b16 %v3249
    %v3260 = vpack.c.b16 %v3259, %v3258
    %3262 = vmatpush.bf16.msra.mxu0 %v769
    %3263 = vmatpush.bf16.msra.mxu0 %v760
    %3264 = vmatpush.bf16.msra.mxu0 %v751
    %3265 = vmatpush.bf16.msra.mxu0 %v742
    %3266 = vmatpush.bf16.msra.mxu0 %v733
    %3267 = vmatpush.bf16.msra.mxu0 %v724
    %3268 = vmatpush.bf16.msra.mxu0 %v715
    %3269 = vmatpush.bf16.msra.mxu0 %v706
    %3270 = vmatmul.bf16.gmra.mxu0 %v3254
    %v3271 = vpop.f32.mrf.mxu0
    %v3272 = vadd.f32 0.0, %v3271
    %v3273 = vpop.f32.mrf.mxu0
    %v3274 = vadd.f32 0.0, %v3273
    %3275 = vdwg.mxu0
    %3276 = vmatpush.bf16.msra.mxu0 %v841
    %3277 = vmatpush.bf16.msra.mxu0 %v832
    %3278 = vmatpush.bf16.msra.mxu0 %v823
    %3279 = vmatpush.bf16.msra.mxu0 %v814
    %3280 = vmatpush.bf16.msra.mxu0 %v805
    %3281 = vmatpush.bf16.msra.mxu0 %v796
    %3282 = vmatpush.bf16.msra.mxu0 %v787
    %3283 = vmatpush.bf16.msra.mxu0 %v778
    %3284 = vmatmul.bf16.gmra.mxu0 %v3260
    %v3285 = vpop.f32.mrf.mxu0
    %v3286 = vadd.f32 %v3272, %v3285
    %v3287 = vpop.f32.mrf.mxu0
    %v3288 = vadd.f32 %v3274, %v3287
    %3289 = vdwg.mxu0
    %3290 = vmatpush.bf16.msra.mxu0 %v770
    %3291 = vmatpush.bf16.msra.mxu0 %v761
    %3292 = vmatpush.bf16.msra.mxu0 %v752
    %3293 = vmatpush.bf16.msra.mxu0 %v743
    %3294 = vmatpush.bf16.msra.mxu0 %v734
    %3295 = vmatpush.bf16.msra.mxu0 %v725
    %3296 = vmatpush.bf16.msra.mxu0 %v716
    %3297 = vmatpush.bf16.msra.mxu0 %v707
    %3298 = vmatmul.bf16.gmra.mxu0 %v3254
    %v3299 = vpop.f32.mrf.mxu0
    %v3300 = vadd.f32 0.0, %v3299
    %v3301 = vpop.f32.mrf.mxu0
    %v3302 = vadd.f32 0.0, %v3301
    %3303 = vdwg.mxu0
    %3304 = vmatpush.bf16.msra.mxu0 %v842
    %3305 = vmatpush.bf16.msra.mxu0 %v833
    %3306 = vmatpush.bf16.msra.mxu0 %v824
    %3307 = vmatpush.bf16.msra.mxu0 %v815
    %3308 = vmatpush.bf16.msra.mxu0 %v806
    %3309 = vmatpush.bf16.msra.mxu0 %v797
    %3310 = vmatpush.bf16.msra.mxu0 %v788
    %3311 = vmatpush.bf16.msra.mxu0 %v779
    %3312 = vmatmul.bf16.gmra.mxu0 %v3260
    %v3313 = vpop.f32.mrf.mxu0
    %v3314 = vadd.f32 %v3300, %v3313
    %v3315 = vpop.f32.mrf.mxu0
    %v3316 = vadd.f32 %v3302, %v3315
    %3317 = vdwg.mxu0
    %3318 = vmatpush.bf16.msra.mxu0 %v771
    %3319 = vmatpush.bf16.msra.mxu0 %v762
    %3320 = vmatpush.bf16.msra.mxu0 %v753
    %3321 = vmatpush.bf16.msra.mxu0 %v744
    %3322 = vmatpush.bf16.msra.mxu0 %v735
    %3323 = vmatpush.bf16.msra.mxu0 %v726
    %3324 = vmatpush.bf16.msra.mxu0 %v717
    %3325 = vmatpush.bf16.msra.mxu0 %v708
    %3326 = vmatmul.bf16.gmra.mxu0 %v3254
    %v3327 = vpop.f32.mrf.mxu0
    %v3328 = vadd.f32 0.0, %v3327
    %v3329 = vpop.f32.mrf.mxu0
    %v3330 = vadd.f32 0.0, %v3329
    %3331 = vdwg.mxu0
    %3332 = vmatpush.bf16.msra.mxu0 %v843
    %3333 = vmatpush.bf16.msra.mxu0 %v834
    %3334 = vmatpush.bf16.msra.mxu0 %v825
    %3335 = vmatpush.bf16.msra.mxu0 %v816
    %3336 = vmatpush.bf16.msra.mxu0 %v807
    %3337 = vmatpush.bf16.msra.mxu0 %v798
    %3338 = vmatpush.bf16.msra.mxu0 %v789
    %3339 = vmatpush.bf16.msra.mxu0 %v780
    %3340 = vmatmul.bf16.gmra.mxu0 %v3260
    %v3341 = vpop.f32.mrf.mxu0
    %v3342 = vadd.f32 %v3328, %v3341
    %v3343 = vpop.f32.mrf.mxu0
    %v3344 = vadd.f32 %v3330, %v3343
    %3345 = vdwg.mxu0
    %3346 = vmatpush.bf16.msra.mxu0 %v772
    %3347 = vmatpush.bf16.msra.mxu0 %v763
    %3348 = vmatpush.bf16.msra.mxu0 %v754
    %3349 = vmatpush.bf16.msra.mxu0 %v745
    %3350 = vmatpush.bf16.msra.mxu0 %v736
    %3351 = vmatpush.bf16.msra.mxu0 %v727
    %3352 = vmatpush.bf16.msra.mxu0 %v718
    %3353 = vmatpush.bf16.msra.mxu0 %v709
    %3354 = vmatmul.bf16.gmra.mxu0 %v3254
    %v3355 = vpop.f32.mrf.mxu0
    %v3356 = vadd.f32 0.0, %v3355
    %v3357 = vpop.f32.mrf.mxu0
    %v3358 = vadd.f32 0.0, %v3357
    %3359 = vdwg.mxu0
    %3360 = vmatpush.bf16.msra.mxu0 %v844
    %3361 = vmatpush.bf16.msra.mxu0 %v835
    %3362 = vmatpush.bf16.msra.mxu0 %v826
    %3363 = vmatpush.bf16.msra.mxu0 %v817
    %3364 = vmatpush.bf16.msra.mxu0 %v808
    %3365 = vmatpush.bf16.msra.mxu0 %v799
    %3366 = vmatpush.bf16.msra.mxu0 %v790
    %3367 = vmatpush.bf16.msra.mxu0 %v781
    %3368 = vmatmul.bf16.gmra.mxu0 %v3260
    %v3369 = vpop.f32.mrf.mxu0
    %v3370 = vadd.f32 %v3356, %v3369
    %v3371 = vpop.f32.mrf.mxu0
    %v3372 = vadd.f32 %v3358, %v3371
    %3373 = vdwg.mxu0
    %3374 = vmatpush.bf16.msra.mxu0 %v773
    %3375 = vmatpush.bf16.msra.mxu0 %v764
    %3376 = vmatpush.bf16.msra.mxu0 %v755
    %3377 = vmatpush.bf16.msra.mxu0 %v746
    %3378 = vmatpush.bf16.msra.mxu0 %v737
    %3379 = vmatpush.bf16.msra.mxu0 %v728
    %3380 = vmatpush.bf16.msra.mxu0 %v719
    %3381 = vmatpush.bf16.msra.mxu0 %v710
    %3382 = vmatmul.bf16.gmra.mxu0 %v3254
    %v3383 = vpop.f32.mrf.mxu0
    %v3384 = vadd.f32 0.0, %v3383
    %v3385 = vpop.f32.mrf.mxu0
    %v3386 = vadd.f32 0.0, %v3385
    %3387 = vdwg.mxu0
    %3388 = vmatpush.bf16.msra.mxu0 %v845
    %3389 = vmatpush.bf16.msra.mxu0 %v836
    %3390 = vmatpush.bf16.msra.mxu0 %v827
    %3391 = vmatpush.bf16.msra.mxu0 %v818
    %3392 = vmatpush.bf16.msra.mxu0 %v809
    %3393 = vmatpush.bf16.msra.mxu0 %v800
    %3394 = vmatpush.bf16.msra.mxu0 %v791
    %3395 = vmatpush.bf16.msra.mxu0 %v782
    %3396 = vmatmul.bf16.gmra.mxu0 %v3260
    %v3397 = vpop.f32.mrf.mxu0
    %v3398 = vadd.f32 %v3384, %v3397
    %v3399 = vpop.f32.mrf.mxu0
    %v3400 = vadd.f32 %v3386, %v3399
    %3401 = vdwg.mxu0
    %3402 = vmatpush.bf16.msra.mxu0 %v774
    %3403 = vmatpush.bf16.msra.mxu0 %v765
    %3404 = vmatpush.bf16.msra.mxu0 %v756
    %3405 = vmatpush.bf16.msra.mxu0 %v747
    %3406 = vmatpush.bf16.msra.mxu0 %v738
    %3407 = vmatpush.bf16.msra.mxu0 %v729
    %3408 = vmatpush.bf16.msra.mxu0 %v720
    %3409 = vmatpush.bf16.msra.mxu0 %v711
    %3410 = vmatmul.bf16.gmra.mxu0 %v3254
    %v3411 = vpop.f32.mrf.mxu0
    %v3412 = vadd.f32 0.0, %v3411
    %v3413 = vpop.f32.mrf.mxu0
    %v3414 = vadd.f32 0.0, %v3413
    %3415 = vdwg.mxu0
    %3416 = vmatpush.bf16.msra.mxu0 %v846
    %3417 = vmatpush.bf16.msra.mxu0 %v837
    %3418 = vmatpush.bf16.msra.mxu0 %v828
    %3419 = vmatpush.bf16.msra.mxu0 %v819
    %3420 = vmatpush.bf16.msra.mxu0 %v810
    %3421 = vmatpush.bf16.msra.mxu0 %v801
    %3422 = vmatpush.bf16.msra.mxu0 %v792
    %3423 = vmatpush.bf16.msra.mxu0 %v783
    %3424 = vmatmul.bf16.gmra.mxu0 %v3260
    %v3425 = vpop.f32.mrf.mxu0
    %v3426 = vadd.f32 %v3412, %v3425
    %v3427 = vpop.f32.mrf.mxu0
    %v3428 = vadd.f32 %v3414, %v3427
    %3429 = vdwg.mxu0
    %3430 = vmatpush.bf16.msra.mxu0 %v775
    %3431 = vmatpush.bf16.msra.mxu0 %v766
    %3432 = vmatpush.bf16.msra.mxu0 %v757
    %3433 = vmatpush.bf16.msra.mxu0 %v748
    %3434 = vmatpush.bf16.msra.mxu0 %v739
    %3435 = vmatpush.bf16.msra.mxu0 %v730
    %3436 = vmatpush.bf16.msra.mxu0 %v721
    %3437 = vmatpush.bf16.msra.mxu0 %v712
    %3438 = vmatmul.bf16.gmra.mxu0 %v3254
    %v3439 = vpop.f32.mrf.mxu0
    %v3440 = vadd.f32 0.0, %v3439
    %v3441 = vpop.f32.mrf.mxu0
    %v3442 = vadd.f32 0.0, %v3441
    %3443 = vdwg.mxu0
    %3444 = vmatpush.bf16.msra.mxu0 %v847
    %3445 = vmatpush.bf16.msra.mxu0 %v838
    %3446 = vmatpush.bf16.msra.mxu0 %v829
    %3447 = vmatpush.bf16.msra.mxu0 %v820
    %3448 = vmatpush.bf16.msra.mxu0 %v811
    %3449 = vmatpush.bf16.msra.mxu0 %v802
    %3450 = vmatpush.bf16.msra.mxu0 %v793
    %3451 = vmatpush.bf16.msra.mxu0 %v784
    %3452 = vmatmul.bf16.gmra.mxu0 %v3260
    %v3453 = vpop.f32.mrf.mxu0
    %v3454 = vadd.f32 %v3440, %v3453
    %v3455 = vpop.f32.mrf.mxu0
    %v3456 = vadd.f32 %v3442, %v3455
    %3457 = vdwg.mxu0
    %3458 = vmatpush.bf16.msra.mxu0 %v776
    %3459 = vmatpush.bf16.msra.mxu0 %v767
    %3460 = vmatpush.bf16.msra.mxu0 %v758
    %3461 = vmatpush.bf16.msra.mxu0 %v749
    %3462 = vmatpush.bf16.msra.mxu0 %v740
    %3463 = vmatpush.bf16.msra.mxu0 %v731
    %3464 = vmatpush.bf16.msra.mxu0 %v722
    %3465 = vmatpush.bf16.msra.mxu0 %v713
    %3466 = vmatmul.bf16.gmra.mxu0 %v3254
    %v3467 = vpop.f32.mrf.mxu0
    %v3468 = vadd.f32 0.0, %v3467
    %v3469 = vpop.f32.mrf.mxu0
    %v3470 = vadd.f32 0.0, %v3469
    %3471 = vdwg.mxu0
    %3472 = vmatpush.bf16.msra.mxu0 %v848
    %3473 = vmatpush.bf16.msra.mxu0 %v839
    %3474 = vmatpush.bf16.msra.mxu0 %v830
    %3475 = vmatpush.bf16.msra.mxu0 %v821
    %3476 = vmatpush.bf16.msra.mxu0 %v812
    %3477 = vmatpush.bf16.msra.mxu0 %v803
    %3478 = vmatpush.bf16.msra.mxu0 %v794
    %3479 = vmatpush.bf16.msra.mxu0 %v785
    %3480 = vmatmul.bf16.gmra.mxu0 %v3260
    %v3481 = vpop.f32.mrf.mxu0
    %v3482 = vadd.f32 %v3468, %v3481
    %v3483 = vpop.f32.mrf.mxu0
    %v3484 = vadd.f32 %v3470, %v3483
    %3485 = vdwg.mxu0
    %3486 = vmatpush.bf16.msra.mxu0 %v777
    %3487 = vmatpush.bf16.msra.mxu0 %v768
    %3488 = vmatpush.bf16.msra.mxu0 %v759
    %3489 = vmatpush.bf16.msra.mxu0 %v750
    %3490 = vmatpush.bf16.msra.mxu0 %v741
    %3491 = vmatpush.bf16.msra.mxu0 %v732
    %3492 = vmatpush.bf16.msra.mxu0 %v723
    %3493 = vmatpush.bf16.msra.mxu0 %v714
    %3494 = vmatmul.bf16.gmra.mxu0 %v3254
    %v3495 = vpop.f32.mrf.mxu0
    %v3496 = vadd.f32 0.0, %v3495
    %v3497 = vpop.f32.mrf.mxu0
    %v3498 = vadd.f32 0.0, %v3497
    %3499 = vdwg.mxu0
    %3500 = vmatpush.bf16.msra.mxu0 %v849
    %3501 = vmatpush.bf16.msra.mxu0 %v840
    %3502 = vmatpush.bf16.msra.mxu0 %v831
    %3503 = vmatpush.bf16.msra.mxu0 %v822
    %3504 = vmatpush.bf16.msra.mxu0 %v813
    %3505 = vmatpush.bf16.msra.mxu0 %v804
    %3506 = vmatpush.bf16.msra.mxu0 %v795
    %3507 = vmatpush.bf16.msra.mxu0 %v786
    %3508 = vmatmul.bf16.gmra.mxu0 %v3260
    %v3509 = vpop.f32.mrf.mxu0
    %v3510 = vadd.f32 %v3496, %v3509
    %v3511 = vpop.f32.mrf.mxu0
    %v3512 = vadd.f32 %v3498, %v3511
    %3513 = vdwg.mxu0
    %v3514 = vadd.f32 %v3370, %v224
    %v3515 = vadd.f32 %v3398, %v225
    %v3516 = vadd.f32 %v3426, %v226
    %v3517 = vadd.f32 %v3372, %v224
    %v3518 = vadd.f32 %v3400, %v225
    %v3519 = vadd.f32 %v3428, %v226
    %v3520 = vadd.f32 %v3514, %v3454
    %v3521 = vadd.f32 %v3517, %v3456
    %v3522 = vmul.f32 %v3520, 0.5
    %v3523 = vmul.f32 %v3521, 0.5
    %v3524 = vtanh.pop %v3522
    %v3525 = vtanh.pop %v3523
    %v3526 = vadd.f32 %v3524, 1.0
    %v3527 = vadd.f32 %v3525, 1.0
    %v3528 = vmul.f32 %v3526, 0.5
    %v3529 = vmul.f32 %v3527, 0.5
    %v3530 = vadd.f32 %v3515, %v3482
    %v3531 = vadd.f32 %v3518, %v3484
    %v3532 = vmul.f32 %v3530, 0.5
    %v3533 = vmul.f32 %v3531, 0.5
    %v3534 = vtanh.pop %v3532
    %v3535 = vtanh.pop %v3533
    %v3536 = vadd.f32 %v3534, 1.0
    %v3537 = vadd.f32 %v3535, 1.0
    %v3538 = vmul.f32 %v3536, 0.5
    %v3539 = vmul.f32 %v3537, 0.5
    %v3540 = vadd.f32 %v3510, %v236
    %v3541 = vadd.f32 %v3512, %v236
    %v3542 = vmul.f32 %v3528, %v3540
    %v3543 = vmul.f32 %v3529, %v3541
    %v3544 = vadd.f32 %v3516, %v3542
    %v3545 = vadd.f32 %v3519, %v3543
    %v3546 = vtanh.pop %v3544
    %v3547 = vtanh.pop %v3545
    %v3548 = vsub.f32 1.0, %v3538
    %v3549 = vsub.f32 1.0, %v3539
    %v3550 = vmul.f32 %v3548, %v3546
    %v3551 = vmul.f32 %v3549, %v3547
    %v3552 = vmul.f32 %v3538, %v3181
    %v3553 = vmul.f32 %v3539, %v3182
    %v3554 = vadd.f32 %v3550, %v3552
    %v3555 = vadd.f32 %v3551, %v3553
    %v3556 = vsel %vm3242, %v3554, %v3181
    %v3557 = vsel %vm3243, %v3555, %v3182
    %s3558 = sadd.s32 %s51, 6
    %v3559 = vstv %s3558
    %vm3560 = vcmp.gt.s32.totalorder %v60, %v3559
    %vm3561 = vcmp.gt.s32.totalorder %v61, %v3559
    %s3562 = scalar_lea.vmem %s1, 144
    %v3563 = vld [vmem:[%s3562] sm:$0xff]
    %v3564 = vld [vmem:[%s3562 + $0x8] sm:$0xf]
    %v3565 = vld [vmem:[%s3562 + $0xc] sm:$0xff]
    %v3566 = vld [vmem:[%s3562 + $0x14] sm:$0xf]
    %v3567 = vunpack.c.l.bf16 %v3563
    %v3568 = vunpack.c.h.bf16 %v3563
    %v3569 = vunpack.c.l.bf16 %v3564
    %v3570 = vunpack.c.l.bf16 %v3565
    %v3571 = vunpack.c.h.bf16 %v3565
    %v3572 = vunpack.c.l.bf16 %v3566
    %v3573 = vadd.f32 %v3567, %v3286
    %v3574 = vadd.f32 %v3570, %v3288
    %v3575 = vmul.f32 %v3573, 0.5
    %v3576 = vmul.f32 %v3574, 0.5
    %v3577 = vtanh.pop %v3575
    %v3578 = vtanh.pop %v3576
    %v3579 = vadd.f32 %v3577, 1.0
    %v3580 = vadd.f32 %v3578, 1.0
    %v3581 = vmul.f32 %v3579, 0.5
    %v3582 = vmul.f32 %v3580, 0.5
    %v3583 = vadd.f32 %v3568, %v3314
    %v3584 = vadd.f32 %v3571, %v3316
    %v3585 = vmul.f32 %v3583, 0.5
    %v3586 = vmul.f32 %v3584, 0.5
    %v3587 = vtanh.pop %v3585
    %v3588 = vtanh.pop %v3586
    %v3589 = vadd.f32 %v3587, 1.0
    %v3590 = vadd.f32 %v3588, 1.0
    %v3591 = vmul.f32 %v3589, 0.5
    %v3592 = vmul.f32 %v3590, 0.5
    %v3593 = vadd.f32 %v3342, %v232
    %v3594 = vadd.f32 %v3344, %v232
    %v3595 = vmul.f32 %v3581, %v3593
    %v3596 = vmul.f32 %v3582, %v3594
    %v3597 = vadd.f32 %v3569, %v3595
    %v3598 = vadd.f32 %v3572, %v3596
    %v3599 = vtanh.pop %v3597
    %v3600 = vtanh.pop %v3598
    %v3601 = vsub.f32 1.0, %v3591
    %v3602 = vsub.f32 1.0, %v3592
    %v3603 = vmul.f32 %v3601, %v3599
    %v3604 = vmul.f32 %v3602, %v3600
    %v3605 = vmul.f32 %v3591, %v3244
    %v3606 = vmul.f32 %v3592, %v3245
    %v3607 = vadd.f32 %v3603, %v3605
    %v3608 = vadd.f32 %v3604, %v3606
    %v3609 = vsel %vm3560, 1, 0
    %v3610 = vsel %vm3561, 1, 0
    %3611 = vset.pattern.permute.xlu0 0
    %3612 = vperm.xlu0 %3611, %v3609
    %v3613 = vpop.permute.xlu0 %3612
    %3614 = vset.pattern.permute.xlu0 0
    %3615 = vperm.xlu0 %3614, %v3610
    %v3616 = vpop.permute.xlu0 %3615
    %vm3617 = vcmp.eq.s32.totalorder %v3613, 1
    %vm3618 = vcmp.eq.s32.totalorder %v3616, 1
    %v3619 = vsel %vm3617, %v3607, %v3244
    %v3620 = vsel %vm3618, %v3608, %v3245
    %v3621 = vpack.c.bf16 %v3619, %v3619
    %v3622 = vpack.c.bf16 %v3620, %v3620
    %v3623 = vpack.c.bf16 %v3556, %v3556
    %v3624 = vpack.c.bf16 %v3557, %v3557
    %v3627 = vunpack.c.l.b16 %v3621
    %v3628 = vunpack.c.l.b16 %v3622
    %v3629 = vpack.c.b16 %v3628, %v3627
    %v3633 = vunpack.c.l.b16 %v3623
    %v3634 = vunpack.c.l.b16 %v3624
    %v3635 = vpack.c.b16 %v3634, %v3633
    %3637 = vmatpush.bf16.msra.mxu0 %v769
    %3638 = vmatpush.bf16.msra.mxu0 %v760
    %3639 = vmatpush.bf16.msra.mxu0 %v751
    %3640 = vmatpush.bf16.msra.mxu0 %v742
    %3641 = vmatpush.bf16.msra.mxu0 %v733
    %3642 = vmatpush.bf16.msra.mxu0 %v724
    %3643 = vmatpush.bf16.msra.mxu0 %v715
    %3644 = vmatpush.bf16.msra.mxu0 %v706
    %3645 = vmatmul.bf16.gmra.mxu0 %v3629
    %v3646 = vpop.f32.mrf.mxu0
    %v3647 = vadd.f32 0.0, %v3646
    %v3648 = vpop.f32.mrf.mxu0
    %v3649 = vadd.f32 0.0, %v3648
    %3650 = vdwg.mxu0
    %3651 = vmatpush.bf16.msra.mxu0 %v841
    %3652 = vmatpush.bf16.msra.mxu0 %v832
    %3653 = vmatpush.bf16.msra.mxu0 %v823
    %3654 = vmatpush.bf16.msra.mxu0 %v814
    %3655 = vmatpush.bf16.msra.mxu0 %v805
    %3656 = vmatpush.bf16.msra.mxu0 %v796
    %3657 = vmatpush.bf16.msra.mxu0 %v787
    %3658 = vmatpush.bf16.msra.mxu0 %v778
    %3659 = vmatmul.bf16.gmra.mxu0 %v3635
    %v3660 = vpop.f32.mrf.mxu0
    %v3661 = vadd.f32 %v3647, %v3660
    %v3662 = vpop.f32.mrf.mxu0
    %v3663 = vadd.f32 %v3649, %v3662
    %3664 = vdwg.mxu0
    %3665 = vmatpush.bf16.msra.mxu0 %v770
    %3666 = vmatpush.bf16.msra.mxu0 %v761
    %3667 = vmatpush.bf16.msra.mxu0 %v752
    %3668 = vmatpush.bf16.msra.mxu0 %v743
    %3669 = vmatpush.bf16.msra.mxu0 %v734
    %3670 = vmatpush.bf16.msra.mxu0 %v725
    %3671 = vmatpush.bf16.msra.mxu0 %v716
    %3672 = vmatpush.bf16.msra.mxu0 %v707
    %3673 = vmatmul.bf16.gmra.mxu0 %v3629
    %v3674 = vpop.f32.mrf.mxu0
    %v3675 = vadd.f32 0.0, %v3674
    %v3676 = vpop.f32.mrf.mxu0
    %v3677 = vadd.f32 0.0, %v3676
    %3678 = vdwg.mxu0
    %3679 = vmatpush.bf16.msra.mxu0 %v842
    %3680 = vmatpush.bf16.msra.mxu0 %v833
    %3681 = vmatpush.bf16.msra.mxu0 %v824
    %3682 = vmatpush.bf16.msra.mxu0 %v815
    %3683 = vmatpush.bf16.msra.mxu0 %v806
    %3684 = vmatpush.bf16.msra.mxu0 %v797
    %3685 = vmatpush.bf16.msra.mxu0 %v788
    %3686 = vmatpush.bf16.msra.mxu0 %v779
    %3687 = vmatmul.bf16.gmra.mxu0 %v3635
    %v3688 = vpop.f32.mrf.mxu0
    %v3689 = vadd.f32 %v3675, %v3688
    %v3690 = vpop.f32.mrf.mxu0
    %v3691 = vadd.f32 %v3677, %v3690
    %3692 = vdwg.mxu0
    %3693 = vmatpush.bf16.msra.mxu0 %v771
    %3694 = vmatpush.bf16.msra.mxu0 %v762
    %3695 = vmatpush.bf16.msra.mxu0 %v753
    %3696 = vmatpush.bf16.msra.mxu0 %v744
    %3697 = vmatpush.bf16.msra.mxu0 %v735
    %3698 = vmatpush.bf16.msra.mxu0 %v726
    %3699 = vmatpush.bf16.msra.mxu0 %v717
    %3700 = vmatpush.bf16.msra.mxu0 %v708
    %3701 = vmatmul.bf16.gmra.mxu0 %v3629
    %v3702 = vpop.f32.mrf.mxu0
    %v3703 = vadd.f32 0.0, %v3702
    %v3704 = vpop.f32.mrf.mxu0
    %v3705 = vadd.f32 0.0, %v3704
    %3706 = vdwg.mxu0
    %3707 = vmatpush.bf16.msra.mxu0 %v843
    %3708 = vmatpush.bf16.msra.mxu0 %v834
    %3709 = vmatpush.bf16.msra.mxu0 %v825
    %3710 = vmatpush.bf16.msra.mxu0 %v816
    %3711 = vmatpush.bf16.msra.mxu0 %v807
    %3712 = vmatpush.bf16.msra.mxu0 %v798
    %3713 = vmatpush.bf16.msra.mxu0 %v789
    %3714 = vmatpush.bf16.msra.mxu0 %v780
    %3715 = vmatmul.bf16.gmra.mxu0 %v3635
    %v3716 = vpop.f32.mrf.mxu0
    %v3717 = vadd.f32 %v3703, %v3716
    %v3718 = vpop.f32.mrf.mxu0
    %v3719 = vadd.f32 %v3705, %v3718
    %3720 = vdwg.mxu0
    %3721 = vmatpush.bf16.msra.mxu0 %v772
    %3722 = vmatpush.bf16.msra.mxu0 %v763
    %3723 = vmatpush.bf16.msra.mxu0 %v754
    %3724 = vmatpush.bf16.msra.mxu0 %v745
    %3725 = vmatpush.bf16.msra.mxu0 %v736
    %3726 = vmatpush.bf16.msra.mxu0 %v727
    %3727 = vmatpush.bf16.msra.mxu0 %v718
    %3728 = vmatpush.bf16.msra.mxu0 %v709
    %3729 = vmatmul.bf16.gmra.mxu0 %v3629
    %v3730 = vpop.f32.mrf.mxu0
    %v3731 = vadd.f32 0.0, %v3730
    %v3732 = vpop.f32.mrf.mxu0
    %v3733 = vadd.f32 0.0, %v3732
    %3734 = vdwg.mxu0
    %3735 = vmatpush.bf16.msra.mxu0 %v844
    %3736 = vmatpush.bf16.msra.mxu0 %v835
    %3737 = vmatpush.bf16.msra.mxu0 %v826
    %3738 = vmatpush.bf16.msra.mxu0 %v817
    %3739 = vmatpush.bf16.msra.mxu0 %v808
    %3740 = vmatpush.bf16.msra.mxu0 %v799
    %3741 = vmatpush.bf16.msra.mxu0 %v790
    %3742 = vmatpush.bf16.msra.mxu0 %v781
    %3743 = vmatmul.bf16.gmra.mxu0 %v3635
    %v3744 = vpop.f32.mrf.mxu0
    %v3745 = vadd.f32 %v3731, %v3744
    %v3746 = vpop.f32.mrf.mxu0
    %v3747 = vadd.f32 %v3733, %v3746
    %3748 = vdwg.mxu0
    %3749 = vmatpush.bf16.msra.mxu0 %v773
    %3750 = vmatpush.bf16.msra.mxu0 %v764
    %3751 = vmatpush.bf16.msra.mxu0 %v755
    %3752 = vmatpush.bf16.msra.mxu0 %v746
    %3753 = vmatpush.bf16.msra.mxu0 %v737
    %3754 = vmatpush.bf16.msra.mxu0 %v728
    %3755 = vmatpush.bf16.msra.mxu0 %v719
    %3756 = vmatpush.bf16.msra.mxu0 %v710
    %3757 = vmatmul.bf16.gmra.mxu0 %v3629
    %v3758 = vpop.f32.mrf.mxu0
    %v3759 = vadd.f32 0.0, %v3758
    %v3760 = vpop.f32.mrf.mxu0
    %v3761 = vadd.f32 0.0, %v3760
    %3762 = vdwg.mxu0
    %3763 = vmatpush.bf16.msra.mxu0 %v845
    %3764 = vmatpush.bf16.msra.mxu0 %v836
    %3765 = vmatpush.bf16.msra.mxu0 %v827
    %3766 = vmatpush.bf16.msra.mxu0 %v818
    %3767 = vmatpush.bf16.msra.mxu0 %v809
    %3768 = vmatpush.bf16.msra.mxu0 %v800
    %3769 = vmatpush.bf16.msra.mxu0 %v791
    %3770 = vmatpush.bf16.msra.mxu0 %v782
    %3771 = vmatmul.bf16.gmra.mxu0 %v3635
    %v3772 = vpop.f32.mrf.mxu0
    %v3773 = vadd.f32 %v3759, %v3772
    %v3774 = vpop.f32.mrf.mxu0
    %v3775 = vadd.f32 %v3761, %v3774
    %3776 = vdwg.mxu0
    %3777 = vmatpush.bf16.msra.mxu0 %v774
    %3778 = vmatpush.bf16.msra.mxu0 %v765
    %3779 = vmatpush.bf16.msra.mxu0 %v756
    %3780 = vmatpush.bf16.msra.mxu0 %v747
    %3781 = vmatpush.bf16.msra.mxu0 %v738
    %3782 = vmatpush.bf16.msra.mxu0 %v729
    %3783 = vmatpush.bf16.msra.mxu0 %v720
    %3784 = vmatpush.bf16.msra.mxu0 %v711
    %3785 = vmatmul.bf16.gmra.mxu0 %v3629
    %v3786 = vpop.f32.mrf.mxu0
    %v3787 = vadd.f32 0.0, %v3786
    %v3788 = vpop.f32.mrf.mxu0
    %v3789 = vadd.f32 0.0, %v3788
    %3790 = vdwg.mxu0
    %3791 = vmatpush.bf16.msra.mxu0 %v846
    %3792 = vmatpush.bf16.msra.mxu0 %v837
    %3793 = vmatpush.bf16.msra.mxu0 %v828
    %3794 = vmatpush.bf16.msra.mxu0 %v819
    %3795 = vmatpush.bf16.msra.mxu0 %v810
    %3796 = vmatpush.bf16.msra.mxu0 %v801
    %3797 = vmatpush.bf16.msra.mxu0 %v792
    %3798 = vmatpush.bf16.msra.mxu0 %v783
    %3799 = vmatmul.bf16.gmra.mxu0 %v3635
    %v3800 = vpop.f32.mrf.mxu0
    %v3801 = vadd.f32 %v3787, %v3800
    %v3802 = vpop.f32.mrf.mxu0
    %v3803 = vadd.f32 %v3789, %v3802
    %3804 = vdwg.mxu0
    %3805 = vmatpush.bf16.msra.mxu0 %v775
    %3806 = vmatpush.bf16.msra.mxu0 %v766
    %3807 = vmatpush.bf16.msra.mxu0 %v757
    %3808 = vmatpush.bf16.msra.mxu0 %v748
    %3809 = vmatpush.bf16.msra.mxu0 %v739
    %3810 = vmatpush.bf16.msra.mxu0 %v730
    %3811 = vmatpush.bf16.msra.mxu0 %v721
    %3812 = vmatpush.bf16.msra.mxu0 %v712
    %3813 = vmatmul.bf16.gmra.mxu0 %v3629
    %v3814 = vpop.f32.mrf.mxu0
    %v3815 = vadd.f32 0.0, %v3814
    %v3816 = vpop.f32.mrf.mxu0
    %v3817 = vadd.f32 0.0, %v3816
    %3818 = vdwg.mxu0
    %3819 = vmatpush.bf16.msra.mxu0 %v847
    %3820 = vmatpush.bf16.msra.mxu0 %v838
    %3821 = vmatpush.bf16.msra.mxu0 %v829
    %3822 = vmatpush.bf16.msra.mxu0 %v820
    %3823 = vmatpush.bf16.msra.mxu0 %v811
    %3824 = vmatpush.bf16.msra.mxu0 %v802
    %3825 = vmatpush.bf16.msra.mxu0 %v793
    %3826 = vmatpush.bf16.msra.mxu0 %v784
    %3827 = vmatmul.bf16.gmra.mxu0 %v3635
    %v3828 = vpop.f32.mrf.mxu0
    %v3829 = vadd.f32 %v3815, %v3828
    %v3830 = vpop.f32.mrf.mxu0
    %v3831 = vadd.f32 %v3817, %v3830
    %3832 = vdwg.mxu0
    %3833 = vmatpush.bf16.msra.mxu0 %v776
    %3834 = vmatpush.bf16.msra.mxu0 %v767
    %3835 = vmatpush.bf16.msra.mxu0 %v758
    %3836 = vmatpush.bf16.msra.mxu0 %v749
    %3837 = vmatpush.bf16.msra.mxu0 %v740
    %3838 = vmatpush.bf16.msra.mxu0 %v731
    %3839 = vmatpush.bf16.msra.mxu0 %v722
    %3840 = vmatpush.bf16.msra.mxu0 %v713
    %3841 = vmatmul.bf16.gmra.mxu0 %v3629
    %v3842 = vpop.f32.mrf.mxu0
    %v3843 = vadd.f32 0.0, %v3842
    %v3844 = vpop.f32.mrf.mxu0
    %v3845 = vadd.f32 0.0, %v3844
    %3846 = vdwg.mxu0
    %3847 = vmatpush.bf16.msra.mxu0 %v848
    %3848 = vmatpush.bf16.msra.mxu0 %v839
    %3849 = vmatpush.bf16.msra.mxu0 %v830
    %3850 = vmatpush.bf16.msra.mxu0 %v821
    %3851 = vmatpush.bf16.msra.mxu0 %v812
    %3852 = vmatpush.bf16.msra.mxu0 %v803
    %3853 = vmatpush.bf16.msra.mxu0 %v794
    %3854 = vmatpush.bf16.msra.mxu0 %v785
    %3855 = vmatmul.bf16.gmra.mxu0 %v3635
    %v3856 = vpop.f32.mrf.mxu0
    %v3857 = vadd.f32 %v3843, %v3856
    %v3858 = vpop.f32.mrf.mxu0
    %v3859 = vadd.f32 %v3845, %v3858
    %3860 = vdwg.mxu0
    %3861 = vmatpush.bf16.msra.mxu0 %v777
    %3862 = vmatpush.bf16.msra.mxu0 %v768
    %3863 = vmatpush.bf16.msra.mxu0 %v759
    %3864 = vmatpush.bf16.msra.mxu0 %v750
    %3865 = vmatpush.bf16.msra.mxu0 %v741
    %3866 = vmatpush.bf16.msra.mxu0 %v732
    %3867 = vmatpush.bf16.msra.mxu0 %v723
    %3868 = vmatpush.bf16.msra.mxu0 %v714
    %3869 = vmatmul.bf16.gmra.mxu0 %v3629
    %v3870 = vpop.f32.mrf.mxu0
    %v3871 = vadd.f32 0.0, %v3870
    %v3872 = vpop.f32.mrf.mxu0
    %v3873 = vadd.f32 0.0, %v3872
    %3874 = vdwg.mxu0
    %3875 = vmatpush.bf16.msra.mxu0 %v849
    %3876 = vmatpush.bf16.msra.mxu0 %v840
    %3877 = vmatpush.bf16.msra.mxu0 %v831
    %3878 = vmatpush.bf16.msra.mxu0 %v822
    %3879 = vmatpush.bf16.msra.mxu0 %v813
    %3880 = vmatpush.bf16.msra.mxu0 %v804
    %3881 = vmatpush.bf16.msra.mxu0 %v795
    %3882 = vmatpush.bf16.msra.mxu0 %v786
    %3883 = vmatmul.bf16.gmra.mxu0 %v3635
    %v3884 = vpop.f32.mrf.mxu0
    %v3885 = vadd.f32 %v3871, %v3884
    %v3886 = vpop.f32.mrf.mxu0
    %v3887 = vadd.f32 %v3873, %v3886
    %3888 = vdwg.mxu0
    %v3889 = vadd.f32 %v3745, %v224
    %v3890 = vadd.f32 %v3773, %v225
    %v3891 = vadd.f32 %v3801, %v226
    %v3892 = vadd.f32 %v3747, %v224
    %v3893 = vadd.f32 %v3775, %v225
    %v3894 = vadd.f32 %v3803, %v226
    %v3895 = vadd.f32 %v3889, %v3829
    %v3896 = vadd.f32 %v3892, %v3831
    %v3897 = vmul.f32 %v3895, 0.5
    %v3898 = vmul.f32 %v3896, 0.5
    %v3899 = vtanh.pop %v3897
    %v3900 = vtanh.pop %v3898
    %v3901 = vadd.f32 %v3899, 1.0
    %v3902 = vadd.f32 %v3900, 1.0
    %v3903 = vmul.f32 %v3901, 0.5
    %v3904 = vmul.f32 %v3902, 0.5
    %v3905 = vadd.f32 %v3890, %v3857
    %v3906 = vadd.f32 %v3893, %v3859
    %v3907 = vmul.f32 %v3905, 0.5
    %v3908 = vmul.f32 %v3906, 0.5
    %v3909 = vtanh.pop %v3907
    %v3910 = vtanh.pop %v3908
    %v3911 = vadd.f32 %v3909, 1.0
    %v3912 = vadd.f32 %v3910, 1.0
    %v3913 = vmul.f32 %v3911, 0.5
    %v3914 = vmul.f32 %v3912, 0.5
    %v3915 = vadd.f32 %v3885, %v236
    %v3916 = vadd.f32 %v3887, %v236
    %v3917 = vmul.f32 %v3903, %v3915
    %v3918 = vmul.f32 %v3904, %v3916
    %v3919 = vadd.f32 %v3891, %v3917
    %v3920 = vadd.f32 %v3894, %v3918
    %v3921 = vtanh.pop %v3919
    %v3922 = vtanh.pop %v3920
    %v3923 = vsub.f32 1.0, %v3913
    %v3924 = vsub.f32 1.0, %v3914
    %v3925 = vmul.f32 %v3923, %v3921
    %v3926 = vmul.f32 %v3924, %v3922
    %v3927 = vmul.f32 %v3913, %v3556
    %v3928 = vmul.f32 %v3914, %v3557
    %v3929 = vadd.f32 %v3925, %v3927
    %v3930 = vadd.f32 %v3926, %v3928
    %v3931 = vsel %vm3617, %v3929, %v3556
    %v3932 = vsel %vm3618, %v3930, %v3557
    %s3933 = sadd.s32 %s51, 7
    %v3934 = vstv %s3933
    %vm3935 = vcmp.gt.s32.totalorder %v60, %v3934
    %vm3936 = vcmp.gt.s32.totalorder %v61, %v3934
    %s3937 = scalar_lea.vmem %s1, 168
    %v3938 = vld [vmem:[%s3937] sm:$0xff]
    %v3939 = vld [vmem:[%s3937 + $0x8] sm:$0xf]
    %v3940 = vld [vmem:[%s3937 + $0xc] sm:$0xff]
    %v3941 = vld [vmem:[%s3937 + $0x14] sm:$0xf]
    %v3942 = vunpack.c.l.bf16 %v3938
    %v3943 = vunpack.c.h.bf16 %v3938
    %v3944 = vunpack.c.l.bf16 %v3939
    %v3945 = vunpack.c.l.bf16 %v3940
    %v3946 = vunpack.c.h.bf16 %v3940
    %v3947 = vunpack.c.l.bf16 %v3941
    %v3948 = vadd.f32 %v3942, %v3661
    %v3949 = vadd.f32 %v3945, %v3663
    %v3950 = vmul.f32 %v3948, 0.5
    %v3951 = vmul.f32 %v3949, 0.5
    %v3952 = vtanh.pop %v3950
    %v3953 = vtanh.pop %v3951
    %v3954 = vadd.f32 %v3952, 1.0
    %v3955 = vadd.f32 %v3953, 1.0
    %v3956 = vmul.f32 %v3954, 0.5
    %v3957 = vmul.f32 %v3955, 0.5
    %v3958 = vadd.f32 %v3943, %v3689
    %v3959 = vadd.f32 %v3946, %v3691
    %v3960 = vmul.f32 %v3958, 0.5
    %v3961 = vmul.f32 %v3959, 0.5
    %v3962 = vtanh.pop %v3960
    %v3963 = vtanh.pop %v3961
    %v3964 = vadd.f32 %v3962, 1.0
    %v3965 = vadd.f32 %v3963, 1.0
    %v3966 = vmul.f32 %v3964, 0.5
    %v3967 = vmul.f32 %v3965, 0.5
    %v3968 = vadd.f32 %v3717, %v232
    %v3969 = vadd.f32 %v3719, %v232
    %v3970 = vmul.f32 %v3956, %v3968
    %v3971 = vmul.f32 %v3957, %v3969
    %v3972 = vadd.f32 %v3944, %v3970
    %v3973 = vadd.f32 %v3947, %v3971
    %v3974 = vtanh.pop %v3972
    %v3975 = vtanh.pop %v3973
    %v3976 = vsub.f32 1.0, %v3966
    %v3977 = vsub.f32 1.0, %v3967
    %v3978 = vmul.f32 %v3976, %v3974
    %v3979 = vmul.f32 %v3977, %v3975
    %v3980 = vmul.f32 %v3966, %v3619
    %v3981 = vmul.f32 %v3967, %v3620
    %v3982 = vadd.f32 %v3978, %v3980
    %v3983 = vadd.f32 %v3979, %v3981
    %v3984 = vsel %vm3935, 1, 0
    %v3985 = vsel %vm3936, 1, 0
    %3986 = vset.pattern.permute.xlu0 0
    %3987 = vperm.xlu0 %3986, %v3984
    %v3988 = vpop.permute.xlu0 %3987
    %3989 = vset.pattern.permute.xlu0 0
    %3990 = vperm.xlu0 %3989, %v3985
    %v3991 = vpop.permute.xlu0 %3990
    %vm3992 = vcmp.eq.s32.totalorder %v3988, 1
    %vm3993 = vcmp.eq.s32.totalorder %v3991, 1
    %v3994 = vsel %vm3992, %v3982, %v3619
    %v3995 = vsel %vm3993, %v3983, %v3620
    %3996 = vst [vmem:[#allocation2] sm:$0xff] %v3994
    %3997 = vst [vmem:[#allocation2 + $0x8] sm:$0xff] %v3995
    %3998 = vst [vmem:[#allocation3] sm:$0xff] %v3931
    %3999 = vst [vmem:[#allocation3 + $0x8] sm:$0xff] %v3932
    // Predicated region
    $region50: #{rnn_model_forward.3} parent=1 // pred_check
      %p4000 = pneg %p52
    $region51: #{rnn_model_forward.3} parent=1 // pred_check_branch
      %4002 = sbr.rel (%p4000) target = $region53
    $region52: #{rnn_model_forward.3} parent=1 // pred_region
      %v4003 = vpack.c.bf16 %v3994, %v3994
      %v4004 = vpack.c.bf16 %v3995, %v3995
      %v4005 = vpack.c.bf16 %v3931, %v3931
      %v4006 = vpack.c.bf16 %v3932, %v3932
      %v4009 = vunpack.c.l.b16 %v4003
      %v4010 = vunpack.c.l.b16 %v4004
      %v4011 = vpack.c.b16 %v4010, %v4009
      %v4015 = vunpack.c.l.b16 %v4005
      %v4016 = vunpack.c.l.b16 %v4006
      %v4017 = vpack.c.b16 %v4016, %v4015
      %4019 = vmatpush.bf16.msra.mxu0 %v772
      %4020 = vmatpush.bf16.msra.mxu0 %v763
      %4021 = vmatpush.bf16.msra.mxu0 %v754
      %4022 = vmatpush.bf16.msra.mxu0 %v745
      %4023 = vmatpush.bf16.msra.mxu0 %v736
      %4024 = vmatpush.bf16.msra.mxu0 %v727
      %4025 = vmatpush.bf16.msra.mxu0 %v718
      %4026 = vmatpush.bf16.msra.mxu0 %v709
      %4027 = vmatmul.bf16.gmra.mxu0 %v4011
      %v4028 = vpop.f32.mrf.mxu0
      %v4029 = vadd.f32 0.0, %v4028
      %v4030 = vpop.f32.mrf.mxu0
      %v4031 = vadd.f32 0.0, %v4030
      %4032 = vdwg.mxu0
      %4033 = vmatpush.bf16.msra.mxu0 %v844
      %4034 = vmatpush.bf16.msra.mxu0 %v835
      %4035 = vmatpush.bf16.msra.mxu0 %v826
      %4036 = vmatpush.bf16.msra.mxu0 %v817
      %4037 = vmatpush.bf16.msra.mxu0 %v808
      %4038 = vmatpush.bf16.msra.mxu0 %v799
      %4039 = vmatpush.bf16.msra.mxu0 %v790
      %4040 = vmatpush.bf16.msra.mxu0 %v781
      %4041 = vmatmul.bf16.gmra.mxu0 %v4017
      %v4042 = vpop.f32.mrf.mxu0
      %v4043 = vadd.f32 %v4029, %v4042
      %v4044 = vpop.f32.mrf.mxu0
      %v4045 = vadd.f32 %v4031, %v4044
      %4046 = vdwg.mxu0
      %4047 = vmatpush.bf16.msra.mxu0 %v773
      %4048 = vmatpush.bf16.msra.mxu0 %v764
      %4049 = vmatpush.bf16.msra.mxu0 %v755
      %4050 = vmatpush.bf16.msra.mxu0 %v746
      %4051 = vmatpush.bf16.msra.mxu0 %v737
      %4052 = vmatpush.bf16.msra.mxu0 %v728
      %4053 = vmatpush.bf16.msra.mxu0 %v719
      %4054 = vmatpush.bf16.msra.mxu0 %v710
      %4055 = vmatmul.bf16.gmra.mxu0 %v4011
      %v4056 = vpop.f32.mrf.mxu0
      %v4057 = vadd.f32 0.0, %v4056
      %v4058 = vpop.f32.mrf.mxu0
      %v4059 = vadd.f32 0.0, %v4058
      %4060 = vdwg.mxu0
      %4061 = vmatpush.bf16.msra.mxu0 %v845
      %4062 = vmatpush.bf16.msra.mxu0 %v836
      %4063 = vmatpush.bf16.msra.mxu0 %v827
      %4064 = vmatpush.bf16.msra.mxu0 %v818
      %4065 = vmatpush.bf16.msra.mxu0 %v809
      %4066 = vmatpush.bf16.msra.mxu0 %v800
      %4067 = vmatpush.bf16.msra.mxu0 %v791
      %4068 = vmatpush.bf16.msra.mxu0 %v782
      %4069 = vmatmul.bf16.gmra.mxu0 %v4017
      %v4070 = vpop.f32.mrf.mxu0
      %v4071 = vadd.f32 %v4057, %v4070
      %v4072 = vpop.f32.mrf.mxu0
      %v4073 = vadd.f32 %v4059, %v4072
      %4074 = vdwg.mxu0
      %4075 = vmatpush.bf16.msra.mxu0 %v774
      %4076 = vmatpush.bf16.msra.mxu0 %v765
      %4077 = vmatpush.bf16.msra.mxu0 %v756
      %4078 = vmatpush.bf16.msra.mxu0 %v747
      %4079 = vmatpush.bf16.msra.mxu0 %v738
      %4080 = vmatpush.bf16.msra.mxu0 %v729
      %4081 = vmatpush.bf16.msra.mxu0 %v720
      %4082 = vmatpush.bf16.msra.mxu0 %v711
      %4083 = vmatmul.bf16.gmra.mxu0 %v4011
      %v4084 = vpop.f32.mrf.mxu0
      %v4085 = vadd.f32 0.0, %v4084
      %v4086 = vpop.f32.mrf.mxu0
      %v4087 = vadd.f32 0.0, %v4086
      %4088 = vdwg.mxu0
      %4089 = vmatpush.bf16.msra.mxu0 %v846
      %4090 = vmatpush.bf16.msra.mxu0 %v837
      %4091 = vmatpush.bf16.msra.mxu0 %v828
      %4092 = vmatpush.bf16.msra.mxu0 %v819
      %4093 = vmatpush.bf16.msra.mxu0 %v810
      %4094 = vmatpush.bf16.msra.mxu0 %v801
      %4095 = vmatpush.bf16.msra.mxu0 %v792
      %4096 = vmatpush.bf16.msra.mxu0 %v783
      %4097 = vmatmul.bf16.gmra.mxu0 %v4017
      %v4098 = vpop.f32.mrf.mxu0
      %v4099 = vadd.f32 %v4085, %v4098
      %v4100 = vpop.f32.mrf.mxu0
      %v4101 = vadd.f32 %v4087, %v4100
      %4102 = vdwg.mxu0
      %4103 = vmatpush.bf16.msra.mxu0 %v775
      %4104 = vmatpush.bf16.msra.mxu0 %v766
      %4105 = vmatpush.bf16.msra.mxu0 %v757
      %4106 = vmatpush.bf16.msra.mxu0 %v748
      %4107 = vmatpush.bf16.msra.mxu0 %v739
      %4108 = vmatpush.bf16.msra.mxu0 %v730
      %4109 = vmatpush.bf16.msra.mxu0 %v721
      %4110 = vmatpush.bf16.msra.mxu0 %v712
      %4111 = vmatmul.bf16.gmra.mxu0 %v4011
      %v4112 = vpop.f32.mrf.mxu0
      %v4113 = vadd.f32 0.0, %v4112
      %v4114 = vpop.f32.mrf.mxu0
      %v4115 = vadd.f32 0.0, %v4114
      %4116 = vdwg.mxu0
      %4117 = vmatpush.bf16.msra.mxu0 %v847
      %4118 = vmatpush.bf16.msra.mxu0 %v838
      %4119 = vmatpush.bf16.msra.mxu0 %v829
      %4120 = vmatpush.bf16.msra.mxu0 %v820
      %4121 = vmatpush.bf16.msra.mxu0 %v811
      %4122 = vmatpush.bf16.msra.mxu0 %v802
      %4123 = vmatpush.bf16.msra.mxu0 %v793
      %4124 = vmatpush.bf16.msra.mxu0 %v784
      %4125 = vmatmul.bf16.gmra.mxu0 %v4017
      %v4126 = vpop.f32.mrf.mxu0
      %v4127 = vadd.f32 %v4113, %v4126
      %v4128 = vpop.f32.mrf.mxu0
      %v4129 = vadd.f32 %v4115, %v4128
      %4130 = vdwg.mxu0
      %4131 = vmatpush.bf16.msra.mxu0 %v776
      %4132 = vmatpush.bf16.msra.mxu0 %v767
      %4133 = vmatpush.bf16.msra.mxu0 %v758
      %4134 = vmatpush.bf16.msra.mxu0 %v749
      %4135 = vmatpush.bf16.msra.mxu0 %v740
      %4136 = vmatpush.bf16.msra.mxu0 %v731
      %4137 = vmatpush.bf16.msra.mxu0 %v722
      %4138 = vmatpush.bf16.msra.mxu0 %v713
      %4139 = vmatmul.bf16.gmra.mxu0 %v4011
      %v4140 = vpop.f32.mrf.mxu0
      %v4141 = vadd.f32 0.0, %v4140
      %v4142 = vpop.f32.mrf.mxu0
      %v4143 = vadd.f32 0.0, %v4142
      %4144 = vdwg.mxu0
      %4145 = vmatpush.bf16.msra.mxu0 %v848
      %4146 = vmatpush.bf16.msra.mxu0 %v839
      %4147 = vmatpush.bf16.msra.mxu0 %v830
      %4148 = vmatpush.bf16.msra.mxu0 %v821
      %4149 = vmatpush.bf16.msra.mxu0 %v812
      %4150 = vmatpush.bf16.msra.mxu0 %v803
      %4151 = vmatpush.bf16.msra.mxu0 %v794
      %4152 = vmatpush.bf16.msra.mxu0 %v785
      %4153 = vmatmul.bf16.gmra.mxu0 %v4017
      %v4154 = vpop.f32.mrf.mxu0
      %v4155 = vadd.f32 %v4141, %v4154
      %v4156 = vpop.f32.mrf.mxu0
      %v4157 = vadd.f32 %v4143, %v4156
      %4158 = vdwg.mxu0
      %4159 = vmatpush.bf16.msra.mxu0 %v777
      %4160 = vmatpush.bf16.msra.mxu0 %v768
      %4161 = vmatpush.bf16.msra.mxu0 %v759
      %4162 = vmatpush.bf16.msra.mxu0 %v750
      %4163 = vmatpush.bf16.msra.mxu0 %v741
      %4164 = vmatpush.bf16.msra.mxu0 %v732
      %4165 = vmatpush.bf16.msra.mxu0 %v723
      %4166 = vmatpush.bf16.msra.mxu0 %v714
      %4167 = vmatmul.bf16.gmra.mxu0 %v4011
      %v4168 = vpop.f32.mrf.mxu0
      %v4169 = vadd.f32 0.0, %v4168
      %v4170 = vpop.f32.mrf.mxu0
      %v4171 = vadd.f32 0.0, %v4170
      %4172 = vdwg.mxu0
      %4173 = vmatpush.bf16.msra.mxu0 %v849
      %4174 = vmatpush.bf16.msra.mxu0 %v840
      %4175 = vmatpush.bf16.msra.mxu0 %v831
      %4176 = vmatpush.bf16.msra.mxu0 %v822
      %4177 = vmatpush.bf16.msra.mxu0 %v813
      %4178 = vmatpush.bf16.msra.mxu0 %v804
      %4179 = vmatpush.bf16.msra.mxu0 %v795
      %4180 = vmatpush.bf16.msra.mxu0 %v786
      %4181 = vmatmul.bf16.gmra.mxu0 %v4017
      %v4182 = vpop.f32.mrf.mxu0
      %v4183 = vadd.f32 %v4169, %v4182
      %v4184 = vpop.f32.mrf.mxu0
      %v4185 = vadd.f32 %v4171, %v4184
      %4186 = vdwg.mxu0
      %v4187 = vadd.f32 %v4043, %v224
      %v4188 = vadd.f32 %v4071, %v225
      %v4189 = vadd.f32 %v4099, %v226
      %v4190 = vadd.f32 %v4045, %v224
      %v4191 = vadd.f32 %v4073, %v225
      %v4192 = vadd.f32 %v4101, %v226
      %v4193 = vadd.f32 %v4187, %v4127
      %v4194 = vadd.f32 %v4190, %v4129
      %v4195 = vmul.f32 %v4193, 0.5
      %v4196 = vmul.f32 %v4194, 0.5
      %v4197 = vtanh.pop %v4195
      %v4198 = vtanh.pop %v4196
      %v4199 = vadd.f32 %v4197, 1.0
      %v4200 = vadd.f32 %v4198, 1.0
      %v4201 = vmul.f32 %v4199, 0.5
      %v4202 = vmul.f32 %v4200, 0.5
      %v4203 = vadd.f32 %v4188, %v4155
      %v4204 = vadd.f32 %v4191, %v4157
      %v4205 = vmul.f32 %v4203, 0.5
      %v4206 = vmul.f32 %v4204, 0.5
      %v4207 = vtanh.pop %v4205
      %v4208 = vtanh.pop %v4206
      %v4209 = vadd.f32 %v4207, 1.0
      %v4210 = vadd.f32 %v4208, 1.0
      %v4211 = vmul.f32 %v4209, 0.5
      %v4212 = vmul.f32 %v4210, 0.5
      %v4213 = vadd.f32 %v4183, %v236
      %v4214 = vadd.f32 %v4185, %v236
      %v4215 = vmul.f32 %v4201, %v4213
      %v4216 = vmul.f32 %v4202, %v4214
      %v4217 = vadd.f32 %v4189, %v4215
      %v4218 = vadd.f32 %v4192, %v4216
      %v4219 = vtanh.pop %v4217
      %v4220 = vtanh.pop %v4218
      %v4221 = vsub.f32 1.0, %v4211
      %v4222 = vsub.f32 1.0, %v4212
      %v4223 = vmul.f32 %v4221, %v4219
      %v4224 = vmul.f32 %v4222, %v4220
      %v4225 = vmul.f32 %v4211, %v3931
      %v4226 = vmul.f32 %v4212, %v3932
      %v4227 = vadd.f32 %v4223, %v4225
      %v4228 = vadd.f32 %v4224, %v4226
      %v4229 = vsel %vm3992, %v4227, %v3931
      %v4230 = vsel %vm3993, %v4228, %v3932
      %v4231 = vpack.c.bf16 %v4230, %v4229
      %v4232 = vld [vmem:[%s6] sm:$0xff]
      %v4233 = vld [vmem:[%s6 + $0x8] sm:$0xff]
      %v4234 = vld [vmem:[%s6 + $0x10] sm:$0xff]
      %v4235 = vld [vmem:[%s6 + $0x18] sm:$0xff]
      %v4236 = vld [vmem:[%s6 + $0x20] sm:$0xff]
      %v4237 = vld [vmem:[%s6 + $0x28] sm:$0xff]
      %v4238 = vld [vmem:[%s6 + $0x30] sm:$0xff]
      %v4239 = vld [vmem:[%s6 + $0x38] sm:$0xff]
      %v4240 = vld [vmem:[%s6 + $0x40] sm:$0xff]
      %v4241 = vld [vmem:[%s6 + $0x48] sm:$0xff]
      %v4242 = vld [vmem:[%s6 + $0x50] sm:$0xff]
      %v4243 = vld [vmem:[%s6 + $0x58] sm:$0xff]
      %v4244 = vld [vmem:[%s6 + $0x60] sm:$0xff]
      %v4245 = vld [vmem:[%s6 + $0x68] sm:$0xff]
      %v4246 = vld [vmem:[%s6 + $0x70] sm:$0xff]
      %v4247 = vld [vmem:[%s6 + $0x78] sm:$0xff]
      %v4248 = vld [vmem:[%s7] sm:$0x3]
      %v4250 = vperm.slane %v4248, 0
      %v4251 = vperm.slane %v4248, 1
      %v4270 = vunpack.c.l.b16 %v4232
      %v4271 = vunpack.c.h.b16 %v4232
      %v4272 = vunpack.c.l.b16 %v4233
      %v4273 = vunpack.c.h.b16 %v4233
      %v4274 = vunpack.c.l.b16 %v4234
      %v4275 = vunpack.c.h.b16 %v4234
      %v4276 = vunpack.c.l.b16 %v4235
      %v4277 = vunpack.c.h.b16 %v4235
      %v4278 = vunpack.c.l.b16 %v4236
      %v4279 = vunpack.c.h.b16 %v4236
      %v4280 = vunpack.c.l.b16 %v4237
      %v4281 = vunpack.c.h.b16 %v4237
      %v4282 = vunpack.c.l.b16 %v4238
      %v4283 = vunpack.c.h.b16 %v4238
      %v4284 = vunpack.c.l.b16 %v4239
      %v4285 = vunpack.c.h.b16 %v4239
      %v4286 = vunpack.c.l.b16 %v4240
      %v4287 = vunpack.c.h.b16 %v4240
      %v4288 = vunpack.c.l.b16 %v4241
      %v4289 = vunpack.c.h.b16 %v4241
      %v4290 = vunpack.c.l.b16 %v4242
      %v4291 = vunpack.c.h.b16 %v4242
      %v4292 = vunpack.c.l.b16 %v4243
      %v4293 = vunpack.c.h.b16 %v4243
      %v4294 = vunpack.c.l.b16 %v4244
      %v4295 = vunpack.c.h.b16 %v4244
      %v4296 = vunpack.c.l.b16 %v4245
      %v4297 = vunpack.c.h.b16 %v4245
      %v4298 = vunpack.c.l.b16 %v4246
      %v4299 = vunpack.c.h.b16 %v4246
      %v4300 = vunpack.c.l.b16 %v4247
      %v4301 = vunpack.c.h.b16 %v4247
      %v4302 = vpack.c.b16 %v4272, %v4270
      %v4303 = vpack.c.b16 %v4273, %v4271
      %v4304 = vpack.c.b16 %v4276, %v4274
      %v4305 = vpack.c.b16 %v4277, %v4275
      %v4306 = vpack.c.b16 %v4280, %v4278
      %v4307 = vpack.c.b16 %v4281, %v4279
      %v4308 = vpack.c.b16 %v4284, %v4282
      %v4309 = vpack.c.b16 %v4285, %v4283
      %v4310 = vpack.c.b16 %v4288, %v4286
      %v4311 = vpack.c.b16 %v4289, %v4287
      %v4312 = vpack.c.b16 %v4292, %v4290
      %v4313 = vpack.c.b16 %v4293, %v4291
      %v4314 = vpack.c.b16 %v4296, %v4294
      %v4315 = vpack.c.b16 %v4297, %v4295
      %v4316 = vpack.c.b16 %v4300, %v4298
      %v4317 = vpack.c.b16 %v4301, %v4299
      %4334 = vmatpush.bf16.msra.mxu0 %v4316
      %4335 = vmatpush.bf16.msra.mxu0 %v4314
      %4336 = vmatpush.bf16.msra.mxu0 %v4312
      %4337 = vmatpush.bf16.msra.mxu0 %v4310
      %4338 = vmatpush.bf16.msra.mxu0 %v4308
      %4339 = vmatpush.bf16.msra.mxu0 %v4306
      %4340 = vmatpush.bf16.msra.mxu0 %v4304
      %4341 = vmatpush.bf16.msra.mxu0 %v4302
      %4342 = vmatmul.bf16.gmra.mxu0 %v4231
      %v4343 = vpop.f32.mrf.mxu0
      %v4344 = vadd.f32 %v4250, %v4343
      %v4345 = vpop.f32.mrf.mxu0
      %v4346 = vadd.f32 %v4250, %v4345
      %4347 = vdwg.mxu0
      %4348 = vmatpush.bf16.msra.mxu0 %v4317
      %4349 = vmatpush.bf16.msra.mxu0 %v4315
      %4350 = vmatpush.bf16.msra.mxu0 %v4313
      %4351 = vmatpush.bf16.msra.mxu0 %v4311
      %4352 = vmatpush.bf16.msra.mxu0 %v4309
      %4353 = vmatpush.bf16.msra.mxu0 %v4307
      %4354 = vmatpush.bf16.msra.mxu0 %v4305
      %4355 = vmatpush.bf16.msra.mxu0 %v4303
      %4356 = vmatmul.bf16.gmra.mxu0 %v4231
      %v4357 = vpop.f32.mrf.mxu0
      %v4358 = vadd.f32 %v4251, %v4357
      %v4359 = vpop.f32.mrf.mxu0
      %v4360 = vadd.f32 %v4251, %v4359
      %4361 = vdwg.mxu0
      %v4362 = vmax.f32 %v4344, 0.0
      %v4363 = vmax.f32 %v4358, 0.0
      %v4364 = vmax.f32 %v4346, 0.0
      %v4365 = vmax.f32 %v4360, 0.0
      %v4366 = vpack.c.bf16 %v4364, %v4362
      %v4367 = vpack.c.bf16 %v4365, %v4363
      %v4368 = vld [vmem:[%s8] sm:$0xf]
      %v4369 = vld [vmem:[%s8 + $0x4] sm:$0xf]
      %v4370 = vld [vmem:[%s8 + $0x8] sm:$0xf]
      %v4371 = vld [vmem:[%s8 + $0xc] sm:$0xf]
      %v4372 = vld [vmem:[%s8 + $0x10] sm:$0xf]
      %v4373 = vld [vmem:[%s8 + $0x14] sm:$0xf]
      %v4374 = vld [vmem:[%s8 + $0x18] sm:$0xf]
      %v4375 = vld [vmem:[%s8 + $0x1c] sm:$0xf]
      %v4376 = vld [vmem:[%s8 + $0x20] sm:$0xf]
      %v4377 = vld [vmem:[%s8 + $0x24] sm:$0xf]
      %v4378 = vld [vmem:[%s8 + $0x28] sm:$0xf]
      %v4379 = vld [vmem:[%s8 + $0x2c] sm:$0xf]
      %v4380 = vld [vmem:[%s8 + $0x30] sm:$0xf]
      %v4381 = vld [vmem:[%s8 + $0x34] sm:$0xf]
      %v4382 = vld [vmem:[%s8 + $0x38] sm:$0xf]
      %v4383 = vld [vmem:[%s8 + $0x3c] sm:$0xf]
      %v4384 = vld [vmem:[%s8 + $0x40] sm:$0xf]
      %v4385 = vld [vmem:[%s8 + $0x44] sm:$0xf]
      %v4386 = vld [vmem:[%s8 + $0x48] sm:$0xf]
      %v4387 = vld [vmem:[%s8 + $0x4c] sm:$0xf]
      %v4388 = vld [vmem:[%s8 + $0x50] sm:$0xf]
      %v4389 = vld [vmem:[%s8 + $0x54] sm:$0xf]
      %v4390 = vld [vmem:[%s8 + $0x58] sm:$0xf]
      %v4391 = vld [vmem:[%s8 + $0x5c] sm:$0xf]
      %v4392 = vld [vmem:[%s8 + $0x60] sm:$0xf]
      %v4393 = vld [vmem:[%s8 + $0x64] sm:$0xf]
      %v4394 = vld [vmem:[%s8 + $0x68] sm:$0xf]
      %v4395 = vld [vmem:[%s8 + $0x6c] sm:$0xf]
      %v4396 = vld [vmem:[%s8 + $0x70] sm:$0xf]
      %v4397 = vld [vmem:[%s8 + $0x74] sm:$0xf]
      %v4398 = vld [vmem:[%s8 + $0x78] sm:$0xf]
      %v4399 = vld [vmem:[%s8 + $0x7c] sm:$0xf]
      %v4400 = vld [vmem:[%s9] sm:$0x1]
      %v4402 = vperm.slane %v4400, 0
      %v4436 = vunpack.c.l.b16 %v4368
      %v4437 = vunpack.c.l.b16 %v4369
      %v4438 = vunpack.c.l.b16 %v4370
      %v4439 = vunpack.c.l.b16 %v4371
      %v4440 = vunpack.c.l.b16 %v4372
      %v4441 = vunpack.c.l.b16 %v4373
      %v4442 = vunpack.c.l.b16 %v4374
      %v4443 = vunpack.c.l.b16 %v4375
      %v4444 = vunpack.c.l.b16 %v4376
      %v4445 = vunpack.c.l.b16 %v4377
      %v4446 = vunpack.c.l.b16 %v4378
      %v4447 = vunpack.c.l.b16 %v4379
      %v4448 = vunpack.c.l.b16 %v4380
      %v4449 = vunpack.c.l.b16 %v4381
      %v4450 = vunpack.c.l.b16 %v4382
      %v4451 = vunpack.c.l.b16 %v4383
      %v4452 = vunpack.c.l.b16 %v4384
      %v4453 = vunpack.c.l.b16 %v4385
      %v4454 = vunpack.c.l.b16 %v4386
      %v4455 = vunpack.c.l.b16 %v4387
      %v4456 = vunpack.c.l.b16 %v4388
      %v4457 = vunpack.c.l.b16 %v4389
      %v4458 = vunpack.c.l.b16 %v4390
      %v4459 = vunpack.c.l.b16 %v4391
      %v4460 = vunpack.c.l.b16 %v4392
      %v4461 = vunpack.c.l.b16 %v4393
      %v4462 = vunpack.c.l.b16 %v4394
      %v4463 = vunpack.c.l.b16 %v4395
      %v4464 = vunpack.c.l.b16 %v4396
      %v4465 = vunpack.c.l.b16 %v4397
      %v4466 = vunpack.c.l.b16 %v4398
      %v4467 = vunpack.c.l.b16 %v4399
      %v4468 = vpack.c.b16 %v4437, %v4436
      %v4469 = vpack.c.b16 %v4439, %v4438
      %v4470 = vpack.c.b16 %v4441, %v4440
      %v4471 = vpack.c.b16 %v4443, %v4442
      %v4472 = vpack.c.b16 %v4445, %v4444
      %v4473 = vpack.c.b16 %v4447, %v4446
      %v4474 = vpack.c.b16 %v4449, %v4448
      %v4475 = vpack.c.b16 %v4451, %v4450
      %v4476 = vpack.c.b16 %v4453, %v4452
      %v4477 = vpack.c.b16 %v4455, %v4454
      %v4478 = vpack.c.b16 %v4457, %v4456
      %v4479 = vpack.c.b16 %v4459, %v4458
      %v4480 = vpack.c.b16 %v4461, %v4460
      %v4481 = vpack.c.b16 %v4463, %v4462
      %v4482 = vpack.c.b16 %v4465, %v4464
      %v4483 = vpack.c.b16 %v4467, %v4466
      %4500 = vmatpush.bf16.msra.mxu0 %v4475
      %4501 = vmatpush.bf16.msra.mxu0 %v4474
      %4502 = vmatpush.bf16.msra.mxu0 %v4473
      %4503 = vmatpush.bf16.msra.mxu0 %v4472
      %4504 = vmatpush.bf16.msra.mxu0 %v4471
      %4505 = vmatpush.bf16.msra.mxu0 %v4470
      %4506 = vmatpush.bf16.msra.mxu0 %v4469
      %4507 = vmatpush.bf16.msra.mxu0 %v4468
      %4508 = vmatmul.bf16.gmra.mxu0 %v4366
      %v4509 = vpop.f32.mrf.mxu0
      %v4510 = vadd.f32 %v4402, %v4509
      %v4511 = vpop.f32.mrf.mxu0
      %v4512 = vadd.f32 %v4402, %v4511
      %4513 = vdwg.mxu0
      %4514 = vmatpush.bf16.msra.mxu0 %v4483
      %4515 = vmatpush.bf16.msra.mxu0 %v4482
      %4516 = vmatpush.bf16.msra.mxu0 %v4481
      %4517 = vmatpush.bf16.msra.mxu0 %v4480
      %4518 = vmatpush.bf16.msra.mxu0 %v4479
      %4519 = vmatpush.bf16.msra.mxu0 %v4478
      %4520 = vmatpush.bf16.msra.mxu0 %v4477
      %4521 = vmatpush.bf16.msra.mxu0 %v4476
      %4522 = vmatmul.bf16.gmra.mxu0 %v4367
      %v4523 = vpop.f32.mrf.mxu0
      %v4524 = vadd.f32 %v4510, %v4523
      %v4525 = vpop.f32.mrf.mxu0
      %v4526 = vadd.f32 %v4512, %v4525
      %4527 = vdwg.mxu0
      %4528 = vst [vmem:[%s10] sm:$0xff] %v4524
      %4529 = vst [vmem:[%s10 + $0x8] sm:$0xff] %v4526
    $region53: #{rnn_model_forward.3} parent=1 // pred_fallthru
      _
    // Predicated region
    $region54: #{rnn_model_forward.3} parent=1 // pred_check
      _
    $region55: #{rnn_model_forward.3} parent=1 // pred_check_branch
      %4531 = sbr.rel (0) target = $region57
    $region56: #{rnn_model_forward.3} parent=1 // pred_region
      _
    $region57: #{rnn_model_forward.3} parent=1 // pred_fallthru
      _
    // Predicated region
    $region58: #{rnn_model_forward.3} parent=1 // pred_check
      _
    $region59: #{rnn_model_forward.3} parent=1 // pred_check_branch
      %4533 = sbr.rel (0) target = $region61
    $region60: #{rnn_model_forward.3} parent=1 // pred_region
      _
    $region61: #{rnn_model_forward.3} parent=1 // pred_fallthru
      _
    %4534 = vsyncpa [#allocation5], 1

</llo_original>
